<compile_context>
chip_gen: v7x
topology: tpu7x:2x2x1
jax: 0.10.0
libtpu: 0.0.40
codegen_flags: <defaults>
</compile_context>

<pallas_src>
import jax
import jax.numpy as jnp
from jax import lax
from jax.experimental import pallas as pl
from jax.experimental.pallas import tpu as pltpu


# ----------------------------------------------------------------------------
# Kernel 1: conv-as-matmul with fused bias + activation
# ----------------------------------------------------------------------------
def _make_conv_kernel(act):
    def kernel(p_ref, w_ref, b_ref, o_ref):
        y = jnp.dot(p_ref[...], w_ref[...], preferred_element_type=jnp.float32)
        y = y + b_ref[...]
        if act == "relu":
            y = jnp.maximum(y, 0.0)
        elif act == "sigmoid":
            y = jax.nn.sigmoid(y)
        o_ref[...] = y
    return kernel


def conv_matmul(patches, w_mat, b_row, *, act="none"):
    """patches: (M, Kc) bf16, w_mat: (Kc, Cout) bf16, b_row: (1, Cout) f32."""
    M, Kc = patches.shape
    Cout = w_mat.shape[1]
    # Single block for the tiny layers; split the M>=512 layers two ways on a
    # "parallel" axis so both TensorCores of a v7x chip get work.
    nblk = 2 if M >= 512 else 1
    tm = -(-M // nblk)
    tm = ((tm + 15) // 16) * 16          # sublane-aligned even for bf16 packing
    Mp = tm * nblk
    if Mp != M:
        patches = jnp.pad(patches, ((0, Mp - M), (0, 0)))
    out = pl.pallas_call(
        _make_conv_kernel(act),
        out_shape=jax.ShapeDtypeStruct((Mp, Cout), jnp.float32),
        grid=(nblk,),
        in_specs=[
            pl.BlockSpec((tm, Kc), lambda i: (i, 0)),
            pl.BlockSpec((Kc, Cout), lambda i: (0, 0)),
            pl.BlockSpec((1, Cout), lambda i: (0, 0)),
        ],
        out_specs=pl.BlockSpec((tm, Cout), lambda i: (i, 0)),
        compiler_params=pltpu.CompilerParams(dimension_semantics=("parallel",)),
    )(patches, w_mat, b_row)
    return out[:M] if Mp != M else out


# ----------------------------------------------------------------------------
# Kernel 2: fused residual block  (relu -> conv3x3 -> relu -> conv1x1 -> +x)
# ----------------------------------------------------------------------------
def _resblock_kernel(p_ref, xres_ref, w1_ref, b1_ref, w2_ref, b2_ref, o_ref):
    # p_ref holds 3x3 patches of relu(x) (bf16); xres_ref holds raw x (f32).
    h = jnp.dot(p_ref[...], w1_ref[...], preferred_element_type=jnp.float32)
    h = jnp.maximum(h + b1_ref[...], 0.0)
    y = jnp.dot(h.astype(jnp.bfloat16), w2_ref[...],
                preferred_element_type=jnp.float32)
    o_ref[...] = y + b2_ref[...] + xres_ref[...]


# ----------------------------------------------------------------------------
# Kernel 3: fused end_conv (1x1) -> nearest-codebook VQ -> start_conv (1x1)
# ----------------------------------------------------------------------------
def _vq_fused_kernel(x_ref, we_ref, be_ref, et_ref, e2_ref, ew_ref, bs_ref,
                     o_ref):
    # end_conv: ze = x @ We + be                                   (M, D)
    ze = jnp.dot(x_ref[...], we_ref[...], preferred_element_type=jnp.float32)
    ze = ze + be_ref[...]
    # nearest codebook: argmin_k ||ze - e_k||^2 == argmin_k (||e_k||^2 - 2 ze.e_k)
    xe = jnp.dot(ze, et_ref[...], preferred_element_type=jnp.float32)   # (M, K)
    dist = e2_ref[...] - 2.0 * xe
    K = dist.shape[1]
    iota_k = lax.broadcasted_iota(jnp.int32, dist.shape, 1)
    minv = jnp.min(dist, axis=1, keepdims=True)
    # first index achieving the minimum (matches torch.min(...)[1] semantics)
    idx = jnp.min(jnp.where(dist <= minv, iota_k, K), axis=1, keepdims=True)
    onehot = (iota_k == idx).astype(jnp.float32)                        # (M, K)
    # zq = onehot @ E ; start_conv: zq @ Ws + bs == onehot @ (E @ Ws) + bs
    y = jnp.dot(onehot, ew_ref[...], preferred_element_type=jnp.float32)
    o_ref[...] = y + bs_ref[...]


# ----------------------------------------------------------------------------
# Plain-JAX glue: im2col + layer wrappers
# ----------------------------------------------------------------------------
def _im2col(x, k, stride, pad):
    """x: (N,H,W,C) -> patches (N*Ho*Wo, k*k*C), feature order (ki, kj, C)."""
    # TODO(synk): patch extraction runs as fused XLA slices; an in-kernel DMA
    # gather would further cut HBM traffic but is not needed at these sizes.
    N, H, W, C = x.shape
    xp = jnp.pad(x, ((0, 0), (pad, pad), (pad, pad), (0, 0)))
    Ho = (H + 2 * pad - k) // stride + 1
    Wo = (W + 2 * pad - k) // stride + 1
    cols = []
    for i in range(k):
        for j in range(k):
            cols.append(xp[:, i:i + Ho * stride:stride, j:j + Wo * stride:stride, :])
    patches = jnp.concatenate(cols, axis=-1)
    return patches.reshape(N * Ho * Wo, k * k * C), Ho, Wo


def conv2d(x_nhwc, wm, b_row, *, k, s, p, act="none"):
    N = x_nhwc.shape[0]
    Cout = b_row.shape[1]
    patches, Ho, Wo = _im2col(x_nhwc, k, s, p)
    y = conv_matmul(patches.astype(jnp.bfloat16), wm, b_row, act=act)
    return y.reshape(N, Ho, Wo, Cout)


def residual_block(x_nhwc, wm1, b1, wm2, b2):
    N, H, W, C = x_nhwc.shape
    xr = jnp.maximum(x_nhwc, 0.0)            # relu fuses into the im2col gather
    patches, _, _ = _im2col(xr, 3, 1, 1)
    x_flat = x_nhwc.reshape(N * H * W, C)
    y = pl.pallas_call(
        _resblock_kernel,
        out_shape=jax.ShapeDtypeStruct((N * H * W, C), jnp.float32),
    )(patches.astype(jnp.bfloat16), x_flat, wm1, b1, wm2, b2)
    return y.reshape(N, H, W, C)


def conv_transpose2d_packed(x_nhwc, wm_packed, b_packed, *, act="none"):
    """ConvTranspose2d(k=4, s=2, p=1) as a phase-packed stride-1 3x3 conv."""
    N, H, W, C = x_nhwc.shape
    cout = b_packed.shape[1] // 4
    patches, _, _ = _im2col(x_nhwc, 3, 1, 1)             # (N*H*W, 9*C)
    y = conv_matmul(patches.astype(jnp.bfloat16), wm_packed, b_packed, act=act)
    y = y.reshape(N, H, W, 2, 2, cout)                   # (n, i, j, ph, pw, c)
    y = jnp.transpose(y, (0, 1, 3, 2, 4, 5)).reshape(N, 2 * H, 2 * W, cout)
    return y


# ----------------------------------------------------------------------------
# VQVAE forward (takes prepared / matmul-layout params)
# ----------------------------------------------------------------------------
def vqvae_forward(x_nchw, P):
    x = x_nchw.reshape(-1, 3, 32, 32)
    N = x.shape[0]
    x = jnp.transpose(x, (0, 2, 3, 1))                       # NHWC

    # ---- encoder ----
    x = conv2d(x, P["conv1_wm"], P["conv1_b"], k=4, s=2, p=1, act="relu")
    x = conv2d(x, P["conv2_wm"], P["conv2_b"], k=4, s=2, p=1, act="relu")
    x = residual_block(x, P["res_en1_conv1_wm"], P["res_en1_conv1_b"],
                       P["res_en1_conv2_wm"], P["res_en1_conv2_b"])
    x = residual_block(x, P["res_en2_conv1_wm"], P["res_en2_conv1_b"],
                       P["res_en2_conv2_wm"], P["res_en2_conv2_b"])

    # ---- end_conv -> vector quantization -> start_conv (one fused kernel) ----
    H8, W8, C = x.shape[1], x.shape[2], x.shape[3]
    Hd = P["start_conv_b"].shape[1]
    x_flat = x.reshape(N * H8 * W8, C)                       # NHWC flatten == permute(0,2,3,1)
    x = pl.pallas_call(
        _vq_fused_kernel,
        out_shape=jax.ShapeDtypeStruct((N * H8 * W8, Hd), jnp.float32),
    )(x_flat, P["end_conv_wm"], P["end_conv_b"], P["emb_t"], P["emb_sq"],
      P["emb_start"], P["start_conv_b"])
    x = x.reshape(N, H8, W8, Hd)

    # ---- decoder ----
    x = residual_block(x, P["res_de1_conv1_wm"], P["res_de1_conv1_b"],
                       P["res_de1_conv2_wm"], P["res_de1_conv2_b"])
    x = residual_block(x, P["res_de2_conv1_wm"], P["res_de2_conv1_b"],
                       P["res_de2_conv2_wm"], P["res_de2_conv2_b"])
    x = conv_transpose2d_packed(x, P["upconv1_wm"], P["upconv1_b"], act="relu")
    x = conv_transpose2d_packed(x, P["upconv2_wm"], P["upconv2_b"], act="sigmoid")
    return jnp.transpose(x, (0, 3, 1, 2))                    # back to NCHW
    # TODO(synk): loss_function / register_hook straight-through backward are
    # training-time autograd ops and are not part of the forward kernel.


# ----------------------------------------------------------------------------
# One-time parameter preparation (matmul layouts, ConvTranspose phase packing)
# ----------------------------------------------------------------------------
def _pack_convT_weight(w_iohw):
    """ConvTranspose2d(k=4,s=2,p=1) weight (Cin,Cout,4,4) -> (9*Cin, 4*Cout)
    matmul weight for a stride-1 3x3 conv whose 4*Cout output features are the
    four output phases (oh%2, ow%2).  Output (2i+ph, 2j+pw) only ever touches
    input rows {i-1,i} (taps 3,1) or {i,i+1} (taps 2,0), so no dilated zeros."""
    cin, cout = w_iohw.shape[0], w_iohw.shape[1]
    tap = ((3, 1, -1),    # phase 0: input offsets (-1, 0, +1) -> kernel taps
           (-1, 2, 0))    # phase 1
    W = jnp.zeros((3, 3, cin, 2, 2, cout), jnp.float32)
    for ph in range(2):
        for pw in range(2):
            for dh in range(3):
                kh = tap[ph][dh]
                if kh < 0:
                    continue
                for dw in range(3):
                    kw = tap[pw][dw]
                    if kw < 0:
                        continue
                    W = W.at[dh, dw, :, ph, pw, :].set(w_iohw[:, :, kh, kw])
    return W.reshape(9 * cin, 4 * cout)


def prepare_params(params):
    """Convert PyTorch-layout params into matmul-layout operands, once."""
    P = {}

    def conv_w(name):
        w = params[name + "_w"]                       # (Cout, Cin, k, k)
        cout, cin, k, _ = w.shape
        wm = jnp.transpose(w, (2, 3, 1, 0)).reshape(k * k * cin, cout)
        P[name + "_wm"] = wm.astype(jnp.bfloat16)
        P[name + "_b"] = params[name + "_b"].reshape(1, cout).astype(jnp.float32)

    for name in ("conv1", "conv2",
                 "res_en1_conv1", "res_en1_conv2",
                 "res_en2_conv1", "res_en2_conv2",
                 "res_de1_conv1", "res_de1_conv2",
                 "res_de2_conv1", "res_de2_conv2"):
        conv_w(name)

    # VQ path stays f32 so the nearest-codebook argmin matches the reference.
    we = params["end_conv_w"]                          # (D, hidden, 1, 1)
    d, hidden = we.shape[0], we.shape[1]
    P["end_conv_wm"] = we.reshape(d, hidden).T.astype(jnp.float32)       # (hidden, D)
    P["end_conv_b"] = params["end_conv_b"].reshape(1, d).astype(jnp.float32)
    emb = params["embedding"].astype(jnp.float32)      # (K, D)
    P["emb_t"] = emb.T                                 # (D, K)
    P["emb_sq"] = jnp.sum(emb * emb, axis=1).reshape(1, -1)              # (1, K)
    ws = params["start_conv_w"]                        # (hidden, D, 1, 1)
    hs = ws.shape[0]
    P["emb_start"] = emb @ ws.reshape(hs, d).T.astype(jnp.float32)       # (K, hidden)
    P["start_conv_b"] = params["start_conv_b"].reshape(1, hs).astype(jnp.float32)

    # ConvTranspose2d -> phase-packed 3x3 conv weights/biases.
    for name in ("upconv1", "upconv2"):
        w = params[name + "_w"]                        # (Cin, Cout, 4, 4)
        cout = w.shape[1]
        P[name + "_wm"] = _pack_convT_weight(w).astype(jnp.bfloat16)
        P[name + "_b"] = jnp.tile(params[name + "_b"], 4).reshape(
            1, 4 * cout).astype(jnp.float32)
    return P


# ----------------------------------------------------------------------------
# Deterministic parameter init (shapes from the PyTorch __init__)
# ----------------------------------------------------------------------------
def init_params(key, hidden_size, K, D):
    keys = iter(jax.random.split(key, 64))
    params = {}

    def add_conv(name, cin, cout, k):
        scale = (cin * k * k) ** -0.5
        params[name + "_w"] = scale * jax.random.normal(
            next(keys), (cout, cin, k, k), jnp.float32)
        params[name + "_b"] = 0.01 * jax.random.normal(
            next(keys), (cout,), jnp.float32)

    def add_convT(name, cin, cout, k):
        scale = (cin * k * k) ** -0.5
        params[name + "_w"] = scale * jax.random.normal(
            next(keys), (cin, cout, k, k), jnp.float32)   # PyTorch ConvTranspose layout
        params[name + "_b"] = 0.01 * jax.random.normal(
            next(keys), (cout,), jnp.float32)

    H = hidden_size
    add_conv("conv1", 3, H, 4)
    add_conv("conv2", H, H, 4)
    add_conv("res_en1_conv1", H, H, 3)
    add_conv("res_en1_conv2", H, H, 1)
    add_conv("res_en2_conv1", H, H, 3)
    add_conv("res_en2_conv2", H, H, 1)
    add_conv("end_conv", H, D, 1)
    add_conv("start_conv", D, H, 1)
    add_conv("res_de1_conv1", H, H, 3)
    add_conv("res_de1_conv2", H, H, 1)
    add_conv("res_de2_conv1", H, H, 3)
    add_conv("res_de2_conv2", H, H, 1)
    add_convT("upconv1", H, H, 4)
    add_convT("upconv2", H, 3, 4)
    params["embedding"] = jax.random.normal(next(keys), (K, D), jnp.float32)
    return params


# ----------------------------------------------------------------------------
# main
# ----------------------------------------------------------------------------
if __name__ == "__main__":
    hidden_size, K, D, beta = 32, 128, 10, 0.25   # D=10 is hard-coded by the module's view(-1,8,8,10)
    key = jax.random.PRNGKey(0)
    kx, kp = jax.random.split(key)

    x = jax.random.uniform(kx, (2, 3, 32, 32), jnp.float32)   # NCHW like PyTorch
    params = init_params(kp, hidden_size, K, D)
    prepped = prepare_params(params)          # one-time weight-layout prep

    fwd = jax.jit(vqvae_forward)
    recon = jax.block_until_ready(fwd(x, prepped))

    assert recon.shape == (2, 3, 32, 32), recon.shape
    assert recon.dtype == jnp.float32
    assert bool(jnp.all(jnp.isfinite(recon)))
    assert bool(jnp.all(recon >= 0.0)) and bool(jnp.all(recon <= 1.0))  # sigmoid output
    print("KERNEL_OK")
</pallas_src>

<mosaic_0001>
module attributes {stable_mosaic.version = 11 : i64} {
  func.func @kernel(%arg0: i32, %arg1: memref<256x48xbf16, #tpu.memory_space<vmem>>, %arg2: memref<48x32xbf16, #tpu.memory_space<vmem>>, %arg3: memref<1x32xf32, #tpu.memory_space<vmem>>, %arg4: memref<256x32xf32, #tpu.memory_space<vmem>>) attributes {dimension_semantics = [#tpu.dimension_semantics<parallel>], iteration_bounds = array<i64: 2>, scalar_prefetch = 0 : i64, scratch_operands = 0 : i64, tpu.core_type = #tpu.core_type<tc>, window_params = [{transform_indices = @transform_0, window_bounds = array<i64: 256, 48>}, {pipeline_mode = #tpu.pipeline_mode<synchronous>, transform_indices = @transform_1, window_bounds = array<i64: 48, 32>}, {pipeline_mode = #tpu.pipeline_mode<synchronous>, transform_indices = @transform_2, window_bounds = array<i64: 1, 32>}, {transform_indices = @transform_3, window_bounds = array<i64: 256, 32>}]} {
    %c0 = arith.constant 0 : index
    %c0_0 = arith.constant 0 : index
    %0 = vector.load %arg1[%c0, %c0_0] : memref<256x48xbf16, #tpu.memory_space<vmem>>, vector<256x48xbf16>
    %c0_1 = arith.constant 0 : index
    %c0_2 = arith.constant 0 : index
    %1 = vector.load %arg2[%c0_1, %c0_2] : memref<48x32xbf16, #tpu.memory_space<vmem>>, vector<48x32xbf16>
    %cst = arith.constant dense<0.000000e+00> : vector<256x32xf32>
    %2 = tpu.matmul %0, %1, %cst {dimension_numbers = #tpu.dot_dimension_numbers<[1], [0], [0], [1], [0, 0, 1, 1], [], []>} : vector<256x48xbf16>, vector<48x32xbf16>, vector<256x32xf32> -> vector<256x32xf32>
    %c0_3 = arith.constant 0 : index
    %c0_4 = arith.constant 0 : index
    %3 = vector.load %arg3[%c0_3, %c0_4] : memref<1x32xf32, #tpu.memory_space<vmem>>, vector<1x32xf32>
    %4 = vector.broadcast %3 : vector<1x32xf32> to vector<256x32xf32>
    %5 = arith.addf %2, %4 : vector<256x32xf32>
    %cst_5 = arith.constant 0.000000e+00 : f32
    %6 = vector.broadcast %cst_5 : f32 to vector<256x32xf32>
    %7 = arith.maximumf %5, %6 : vector<256x32xf32>
    %c0_6 = arith.constant 0 : index
    %c0_7 = arith.constant 0 : index
    %8 = vector.load %arg4[%c0_6, %c0_7] : memref<256x32xf32, #tpu.memory_space<vmem>>, vector<256x32xf32>
    tpu.vector_store %arg4[%c0_6, %c0_7], %7 {strides = array<i32>} : memref<256x32xf32, #tpu.memory_space<vmem>>, vector<256x32xf32>,
    return
  }
  func.func @transform_0(%arg0: i32) -> (i32, i32) {
    %c0_i32 = arith.constant 0 : i32
    %c0_i32_0 = arith.constant 0 : i32
    return %arg0, %c0_i32 : i32, i32
  }
  func.func @transform_1(%arg0: i32) -> (i32, i32) {
    %c0_i32 = arith.constant 0 : i32
    %c0_i32_0 = arith.constant 0 : i32
    %c0_i32_1 = arith.constant 0 : i32
    return %c0_i32, %c0_i32_0 : i32, i32
  }
  func.func @transform_2(%arg0: i32) -> (i32, i32) {
    %c0_i32 = arith.constant 0 : i32
    %c0_i32_0 = arith.constant 0 : i32
    %c0_i32_1 = arith.constant 0 : i32
    return %c0_i32, %c0_i32_0 : i32, i32
  }
  func.func @transform_3(%arg0: i32) -> (i32, i32) {
    %c0_i32 = arith.constant 0 : i32
    %c0_i32_0 = arith.constant 0 : i32
    return %arg0, %c0_i32 : i32, i32
  }
}

module attributes {stable_mosaic.version = 11 : i64} {
  func.func @kernel(%arg0: i32, %arg1: memref<128x512xbf16, #tpu.memory_space<vmem>>, %arg2: memref<512x32xbf16, #tpu.memory_space<vmem>>, %arg3: memref<1x32xf32, #tpu.memory_space<vmem>>, %arg4: memref<128x32xf32, #tpu.memory_space<vmem>>) attributes {dimension_semantics = [#tpu.dimension_semantics<parallel>], iteration_bounds = array<i64: 1>, scalar_prefetch = 0 : i64, scratch_operands = 0 : i64, tpu.core_type = #tpu.core_type<tc>, window_params = [{transform_indices = @transform_0, window_bounds = array<i64: 128, 512>}, {pipeline_mode = #tpu.pipeline_mode<synchronous>, transform_indices = @transform_1, window_bounds = array<i64: 512, 32>}, {pipeline_mode = #tpu.pipeline_mode<synchronous>, transform_indices = @transform_2, window_bounds = array<i64: 1, 32>}, {transform_indices = @transform_3, window_bounds = array<i64: 128, 32>}]} {
    %c0 = arith.constant 0 : index
    %c0_0 = arith.constant 0 : index
    %0 = vector.load %arg1[%c0, %c0_0] : memref<128x512xbf16, #tpu.memory_space<vmem>>, vector<128x512xbf16>
    %c0_1 = arith.constant 0 : index
    %c0_2 = arith.constant 0 : index
    %1 = vector.load %arg2[%c0_1, %c0_2] : memref<512x32xbf16, #tpu.memory_space<vmem>>, vector<512x32xbf16>
    %cst = arith.constant dense<0.000000e+00> : vector<128x32xf32>
    %2 = tpu.matmul %0, %1, %cst {dimension_numbers = #tpu.dot_dimension_numbers<[1], [0], [0], [1], [0, 0, 1, 1], [], []>} : vector<128x512xbf16>, vector<512x32xbf16>, vector<128x32xf32> -> vector<128x32xf32>
    %c0_3 = arith.constant 0 : index
    %c0_4 = arith.constant 0 : index
    %3 = vector.load %arg3[%c0_3, %c0_4] : memref<1x32xf32, #tpu.memory_space<vmem>>, vector<1x32xf32>
    %4 = vector.broadcast %3 : vector<1x32xf32> to vector<128x32xf32>
    %5 = arith.addf %2, %4 : vector<128x32xf32>
    %cst_5 = arith.constant 0.000000e+00 : f32
    %6 = vector.broadcast %cst_5 : f32 to vector<128x32xf32>
    %7 = arith.maximumf %5, %6 : vector<128x32xf32>
    %c0_6 = arith.constant 0 : index
    %c0_7 = arith.constant 0 : index
    %8 = vector.load %arg4[%c0_6, %c0_7] : memref<128x32xf32, #tpu.memory_space<vmem>>, vector<128x32xf32>
    tpu.vector_store %arg4[%c0_6, %c0_7], %7 {strides = array<i32>} : memref<128x32xf32, #tpu.memory_space<vmem>>, vector<128x32xf32>,
    return
  }
  func.func @transform_0(%arg0: i32) -> (i32, i32) {
    %c0_i32 = arith.constant 0 : i32
    %c0_i32_0 = arith.constant 0 : i32
    return %arg0, %c0_i32 : i32, i32
  }
  func.func @transform_1(%arg0: i32) -> (i32, i32) {
    %c0_i32 = arith.constant 0 : i32
    %c0_i32_0 = arith.constant 0 : i32
    %c0_i32_1 = arith.constant 0 : i32
    return %c0_i32, %c0_i32_0 : i32, i32
  }
  func.func @transform_2(%arg0: i32) -> (i32, i32) {
    %c0_i32 = arith.constant 0 : i32
    %c0_i32_0 = arith.constant 0 : i32
    %c0_i32_1 = arith.constant 0 : i32
    return %c0_i32, %c0_i32_0 : i32, i32
  }
  func.func @transform_3(%arg0: i32) -> (i32, i32) {
    %c0_i32 = arith.constant 0 : i32
    %c0_i32_0 = arith.constant 0 : i32
    return %arg0, %c0_i32 : i32, i32
  }
}

module attributes {stable_mosaic.version = 11 : i64} {
  func.func @_resblock_kernel(%arg0: memref<128x288xbf16, #tpu.memory_space<vmem>>, %arg1: memref<128x32xf32, #tpu.memory_space<vmem>>, %arg2: memref<288x32xbf16, #tpu.memory_space<vmem>>, %arg3: memref<1x32xf32, #tpu.memory_space<vmem>>, %arg4: memref<32x32xbf16, #tpu.memory_space<vmem>>, %arg5: memref<1x32xf32, #tpu.memory_space<vmem>>, %arg6: memref<128x32xf32, #tpu.memory_space<vmem>>) attributes {dimension_semantics = [], scalar_prefetch = 0 : i64, scratch_operands = 0 : i64, tpu.core_type = #tpu.core_type<tc>} {
    %c0 = arith.constant 0 : index
    %c0_0 = arith.constant 0 : index
    %0 = vector.load %arg0[%c0, %c0_0] : memref<128x288xbf16, #tpu.memory_space<vmem>>, vector<128x288xbf16>
    %c0_1 = arith.constant 0 : index
    %c0_2 = arith.constant 0 : index
    %1 = vector.load %arg2[%c0_1, %c0_2] : memref<288x32xbf16, #tpu.memory_space<vmem>>, vector<288x32xbf16>
    %cst = arith.constant dense<0.000000e+00> : vector<128x32xf32>
    %2 = tpu.matmul %0, %1, %cst {dimension_numbers = #tpu.dot_dimension_numbers<[1], [0], [0], [1], [0, 0, 1, 1], [], []>} : vector<128x288xbf16>, vector<288x32xbf16>, vector<128x32xf32> -> vector<128x32xf32>
    %c0_3 = arith.constant 0 : index
    %c0_4 = arith.constant 0 : index
    %3 = vector.load %arg3[%c0_3, %c0_4] : memref<1x32xf32, #tpu.memory_space<vmem>>, vector<1x32xf32>
    %4 = vector.broadcast %3 : vector<1x32xf32> to vector<128x32xf32>
    %5 = arith.addf %2, %4 : vector<128x32xf32>
    %cst_5 = arith.constant 0.000000e+00 : f32
    %6 = vector.broadcast %cst_5 : f32 to vector<128x32xf32>
    %7 = arith.maximumf %5, %6 : vector<128x32xf32>
    %8 = arith.truncf %7 : vector<128x32xf32> to vector<128x32xbf16>
    %c0_6 = arith.constant 0 : index
    %c0_7 = arith.constant 0 : index
    %9 = vector.load %arg4[%c0_6, %c0_7] : memref<32x32xbf16, #tpu.memory_space<vmem>>, vector<32x32xbf16>
    %cst_8 = arith.constant dense<0.000000e+00> : vector<128x32xf32>
    %10 = tpu.matmul %8, %9, %cst_8 {dimension_numbers = #tpu.dot_dimension_numbers<[1], [0], [0], [1], [0, 0, 1, 1], [], []>} : vector<128x32xbf16>, vector<32x32xbf16>, vector<128x32xf32> -> vector<128x32xf32>
    %c0_9 = arith.constant 0 : index
    %c0_10 = arith.constant 0 : index
    %11 = vector.load %arg5[%c0_9, %c0_10] : memref<1x32xf32, #tpu.memory_space<vmem>>, vector<1x32xf32>
    %12 = vector.broadcast %11 : vector<1x32xf32> to vector<128x32xf32>
    %13 = arith.addf %10, %12 : vector<128x32xf32>
    %c0_11 = arith.constant 0 : index
    %c0_12 = arith.constant 0 : index
    %14 = vector.load %arg1[%c0_11, %c0_12] : memref<128x32xf32, #tpu.memory_space<vmem>>, vector<128x32xf32>
    %15 = arith.addf %13, %14 : vector<128x32xf32>
    %c0_13 = arith.constant 0 : index
    %c0_14 = arith.constant 0 : index
    %16 = vector.load %arg6[%c0_13, %c0_14] : memref<128x32xf32, #tpu.memory_space<vmem>>, vector<128x32xf32>
    tpu.vector_store %arg6[%c0_13, %c0_14], %15 {strides = array<i32>} : memref<128x32xf32, #tpu.memory_space<vmem>>, vector<128x32xf32>,
    return
  }
}

module attributes {stable_mosaic.version = 11 : i64} {
  func.func @_vq_fused_kernel(%arg0: memref<128x32xf32, #tpu.memory_space<vmem>>, %arg1: memref<32x10xf32, #tpu.memory_space<vmem>>, %arg2: memref<1x10xf32, #tpu.memory_space<vmem>>, %arg3: memref<10x128xf32, #tpu.memory_space<vmem>>, %arg4: memref<1x128xf32, #tpu.memory_space<vmem>>, %arg5: memref<128x32xf32, #tpu.memory_space<vmem>>, %arg6: memref<1x32xf32, #tpu.memory_space<vmem>>, %arg7: memref<128x32xf32, #tpu.memory_space<vmem>>) attributes {dimension_semantics = [], scalar_prefetch = 0 : i64, scratch_operands = 0 : i64, tpu.core_type = #tpu.core_type<tc>} {
    %c0 = arith.constant 0 : index
    %c0_0 = arith.constant 0 : index
    %0 = vector.load %arg0[%c0, %c0_0] : memref<128x32xf32, #tpu.memory_space<vmem>>, vector<128x32xf32>
    %c0_1 = arith.constant 0 : index
    %c0_2 = arith.constant 0 : index
    %1 = vector.load %arg1[%c0_1, %c0_2] : memref<32x10xf32, #tpu.memory_space<vmem>>, vector<32x10xf32>
    %cst = arith.constant dense<0.000000e+00> : vector<128x10xf32>
    %2 = tpu.matmul %0, %1, %cst {dimension_numbers = #tpu.dot_dimension_numbers<[1], [0], [0], [1], [0, 0, 1, 1], [], []>} : vector<128x32xf32>, vector<32x10xf32>, vector<128x10xf32> -> vector<128x10xf32>
    %c0_3 = arith.constant 0 : index
    %c0_4 = arith.constant 0 : index
    %3 = vector.load %arg2[%c0_3, %c0_4] : memref<1x10xf32, #tpu.memory_space<vmem>>, vector<1x10xf32>
    %4 = vector.broadcast %3 : vector<1x10xf32> to vector<128x10xf32>
    %5 = arith.addf %2, %4 : vector<128x10xf32>
    %c0_5 = arith.constant 0 : index
    %c0_6 = arith.constant 0 : index
    %6 = vector.load %arg3[%c0_5, %c0_6] : memref<10x128xf32, #tpu.memory_space<vmem>>, vector<10x128xf32>
    %cst_7 = arith.constant dense<0.000000e+00> : vector<128x128xf32>
    %7 = tpu.matmul %5, %6, %cst_7 {dimension_numbers = #tpu.dot_dimension_numbers<[1], [0], [0], [1], [0, 0, 1, 1], [], []>} : vector<128x10xf32>, vector<10x128xf32>, vector<128x128xf32> -> vector<128x128xf32>
    %c0_8 = arith.constant 0 : index
    %c0_9 = arith.constant 0 : index
    %8 = vector.load %arg4[%c0_8, %c0_9] : memref<1x128xf32, #tpu.memory_space<vmem>>, vector<1x128xf32>
    %cst_10 = arith.constant 2.000000e+00 : f32
    %9 = vector.broadcast %cst_10 : f32 to vector<128x128xf32>
    %10 = arith.mulf %9, %7 : vector<128x128xf32>
    %11 = vector.broadcast %8 : vector<1x128xf32> to vector<128x128xf32>
    %12 = arith.subf %11, %10 : vector<128x128xf32>
    %13 = tpu.iota {dimensions = array<i32: 1>} : vector<128x128xi32>
    %cst_11 = arith.constant dense<0x7F800000> : vector<128xf32>
    %14 = vector.multi_reduction <minimumf>, %12, %cst_11 [1] : vector<128x128xf32> to vector<128xf32>
    %15 = vector.shape_cast %14 : vector<128xf32> to vector<128x1xf32>
    %16 = vector.broadcast %15 : vector<128x1xf32> to vector<128x128xf32>
    %17 = arith.cmpf ole, %12, %16 : vector<128x128xf32>
    %c128_i32 = arith.constant 128 : i32
    %18 = vector.broadcast %c128_i32 : i32 to vector<128x128xi32>
    %19 = arith.select %17, %13, %18 : vector<128x128xi1>, vector<128x128xi32>
    %cst_12 = arith.constant dense<2147483647> : vector<128xi32>
    %20 = vector.multi_reduction <minsi>, %19, %cst_12 [1] : vector<128x128xi32> to vector<128xi32>
    %21 = vector.shape_cast %20 : vector<128xi32> to vector<128x1xi32>
    %22 = vector.broadcast %21 : vector<128x1xi32> to vector<128x128xi32>
    %23 = arith.cmpi eq, %13, %22 : vector<128x128xi32>
    %24 = arith.extui %23 : vector<128x128xi1> to vector<128x128xi32>
    %25 = arith.sitofp %24 : vector<128x128xi32> to vector<128x128xf32>
    %c0_13 = arith.constant 0 : index
    %c0_14 = arith.constant 0 : index
    %26 = vector.load %arg5[%c0_13, %c0_14] : memref<128x32xf32, #tpu.memory_space<vmem>>, vector<128x32xf32>
    %cst_15 = arith.constant dense<0.000000e+00> : vector<128x32xf32>
    %27 = tpu.matmul %25, %26, %cst_15 {dimension_numbers = #tpu.dot_dimension_numbers<[1], [0], [0], [1], [0, 0, 1, 1], [], []>} : vector<128x128xf32>, vector<128x32xf32>, vector<128x32xf32> -> vector<128x32xf32>
    %c0_16 = arith.constant 0 : index
    %c0_17 = arith.constant 0 : index
    %28 = vector.load %arg6[%c0_16, %c0_17] : memref<1x32xf32, #tpu.memory_space<vmem>>, vector<1x32xf32>
    %29 = vector.broadcast %28 : vector<1x32xf32> to vector<128x32xf32>
    %30 = arith.addf %27, %29 : vector<128x32xf32>
    %c0_18 = arith.constant 0 : index
    %c0_19 = arith.constant 0 : index
    %31 = vector.load %arg7[%c0_18, %c0_19] : memref<128x32xf32, #tpu.memory_space<vmem>>, vector<128x32xf32>
    tpu.vector_store %arg7[%c0_18, %c0_19], %30 {strides = array<i32>} : memref<128x32xf32, #tpu.memory_space<vmem>>, vector<128x32xf32>,
    return
  }
}

module attributes {stable_mosaic.version = 11 : i64} {
  func.func @kernel(%arg0: i32, %arg1: memref<128x288xbf16, #tpu.memory_space<vmem>>, %arg2: memref<288x128xbf16, #tpu.memory_space<vmem>>, %arg3: memref<1x128xf32, #tpu.memory_space<vmem>>, %arg4: memref<128x128xf32, #tpu.memory_space<vmem>>) attributes {dimension_semantics = [#tpu.dimension_semantics<parallel>], iteration_bounds = array<i64: 1>, scalar_prefetch = 0 : i64, scratch_operands = 0 : i64, tpu.core_type = #tpu.core_type<tc>, window_params = [{transform_indices = @transform_0, window_bounds = array<i64: 128, 288>}, {pipeline_mode = #tpu.pipeline_mode<synchronous>, transform_indices = @transform_1, window_bounds = array<i64: 288, 128>}, {pipeline_mode = #tpu.pipeline_mode<synchronous>, transform_indices = @transform_2, window_bounds = array<i64: 1, 128>}, {transform_indices = @transform_3, window_bounds = array<i64: 128, 128>}]} {
    %c0 = arith.constant 0 : index
    %c0_0 = arith.constant 0 : index
    %0 = vector.load %arg1[%c0, %c0_0] : memref<128x288xbf16, #tpu.memory_space<vmem>>, vector<128x288xbf16>
    %c0_1 = arith.constant 0 : index
    %c0_2 = arith.constant 0 : index
    %1 = vector.load %arg2[%c0_1, %c0_2] : memref<288x128xbf16, #tpu.memory_space<vmem>>, vector<288x128xbf16>
    %cst = arith.constant dense<0.000000e+00> : vector<128x128xf32>
    %2 = tpu.matmul %0, %1, %cst {dimension_numbers = #tpu.dot_dimension_numbers<[1], [0], [0], [1], [0, 0, 1, 1], [], []>} : vector<128x288xbf16>, vector<288x128xbf16>, vector<128x128xf32> -> vector<128x128xf32>
    %c0_3 = arith.constant 0 : index
    %c0_4 = arith.constant 0 : index
    %3 = vector.load %arg3[%c0_3, %c0_4] : memref<1x128xf32, #tpu.memory_space<vmem>>, vector<1x128xf32>
    %4 = vector.broadcast %3 : vector<1x128xf32> to vector<128x128xf32>
    %5 = arith.addf %2, %4 : vector<128x128xf32>
    %cst_5 = arith.constant 0.000000e+00 : f32
    %6 = vector.broadcast %cst_5 : f32 to vector<128x128xf32>
    %7 = arith.maximumf %5, %6 : vector<128x128xf32>
    %c0_6 = arith.constant 0 : index
    %c0_7 = arith.constant 0 : index
    %8 = vector.load %arg4[%c0_6, %c0_7] : memref<128x128xf32, #tpu.memory_space<vmem>>, vector<128x128xf32>
    tpu.vector_store %arg4[%c0_6, %c0_7], %7 {strides = array<i32>} : memref<128x128xf32, #tpu.memory_space<vmem>>, vector<128x128xf32>,
    return
  }
  func.func @transform_0(%arg0: i32) -> (i32, i32) {
    %c0_i32 = arith.constant 0 : i32
    %c0_i32_0 = arith.constant 0 : i32
    return %arg0, %c0_i32 : i32, i32
  }
  func.func @transform_1(%arg0: i32) -> (i32, i32) {
    %c0_i32 = arith.constant 0 : i32
    %c0_i32_0 = arith.constant 0 : i32
    %c0_i32_1 = arith.constant 0 : i32
    return %c0_i32, %c0_i32_0 : i32, i32
  }
  func.func @transform_2(%arg0: i32) -> (i32, i32) {
    %c0_i32 = arith.constant 0 : i32
    %c0_i32_0 = arith.constant 0 : i32
    %c0_i32_1 = arith.constant 0 : i32
    return %c0_i32, %c0_i32_0 : i32, i32
  }
  func.func @transform_3(%arg0: i32) -> (i32, i32) {
    %c0_i32 = arith.constant 0 : i32
    %c0_i32_0 = arith.constant 0 : i32
    return %arg0, %c0_i32 : i32, i32
  }
}

module attributes {stable_mosaic.version = 11 : i64} {
  func.func @kernel(%arg0: i32, %arg1: memref<256x288xbf16, #tpu.memory_space<vmem>>, %arg2: memref<288x12xbf16, #tpu.memory_space<vmem>>, %arg3: memref<1x12xf32, #tpu.memory_space<vmem>>, %arg4: memref<256x12xf32, #tpu.memory_space<vmem>>) attributes {dimension_semantics = [#tpu.dimension_semantics<parallel>], iteration_bounds = array<i64: 2>, scalar_prefetch = 0 : i64, scratch_operands = 0 : i64, tpu.core_type = #tpu.core_type<tc>, window_params = [{transform_indices = @transform_0, window_bounds = array<i64: 256, 288>}, {pipeline_mode = #tpu.pipeline_mode<synchronous>, transform_indices = @transform_1, window_bounds = array<i64: 288, 12>}, {pipeline_mode = #tpu.pipeline_mode<synchronous>, transform_indices = @transform_2, window_bounds = array<i64: 1, 12>}, {transform_indices = @transform_3, window_bounds = array<i64: 256, 12>}]} {
    %c0 = arith.constant 0 : index
    %c0_0 = arith.constant 0 : index
    %0 = vector.load %arg1[%c0, %c0_0] : memref<256x288xbf16, #tpu.memory_space<vmem>>, vector<256x288xbf16>
    %c0_1 = arith.constant 0 : index
    %c0_2 = arith.constant 0 : index
    %1 = vector.load %arg2[%c0_1, %c0_2] : memref<288x12xbf16, #tpu.memory_space<vmem>>, vector<288x12xbf16>
    %cst = arith.constant dense<0.000000e+00> : vector<256x12xf32>
    %2 = tpu.matmul %0, %1, %cst {dimension_numbers = #tpu.dot_dimension_numbers<[1], [0], [0], [1], [0, 0, 1, 1], [], []>} : vector<256x288xbf16>, vector<288x12xbf16>, vector<256x12xf32> -> vector<256x12xf32>
    %c0_3 = arith.constant 0 : index
    %c0_4 = arith.constant 0 : index
    %3 = vector.load %arg3[%c0_3, %c0_4] : memref<1x12xf32, #tpu.memory_space<vmem>>, vector<1x12xf32>
    %4 = vector.broadcast %3 : vector<1x12xf32> to vector<256x12xf32>
    %5 = arith.addf %2, %4 : vector<256x12xf32>
    %6 = arith.negf %5 : vector<256x12xf32>
    %7 = math.exp %6 : vector<256x12xf32>
    %cst_5 = arith.constant 1.000000e+00 : f32
    %8 = vector.broadcast %cst_5 : f32 to vector<256x12xf32>
    %9 = arith.addf %8, %7 : vector<256x12xf32>
    %10 = arith.divf %8, %9 : vector<256x12xf32>
    %c0_6 = arith.constant 0 : index
    %c0_7 = arith.constant 0 : index
    %11 = vector.load %arg4[%c0_6, %c0_7] : memref<256x12xf32, #tpu.memory_space<vmem>>, vector<256x12xf32>
    tpu.vector_store %arg4[%c0_6, %c0_7], %10 {strides = array<i32>} : memref<256x12xf32, #tpu.memory_space<vmem>>, vector<256x12xf32>,
    return
  }
  func.func @transform_0(%arg0: i32) -> (i32, i32) {
    %c0_i32 = arith.constant 0 : i32
    %c0_i32_0 = arith.constant 0 : i32
    return %arg0, %c0_i32 : i32, i32
  }
  func.func @transform_1(%arg0: i32) -> (i32, i32) {
    %c0_i32 = arith.constant 0 : i32
    %c0_i32_0 = arith.constant 0 : i32
    %c0_i32_1 = arith.constant 0 : i32
    return %c0_i32, %c0_i32_0 : i32, i32
  }
  func.func @transform_2(%arg0: i32) -> (i32, i32) {
    %c0_i32 = arith.constant 0 : i32
    %c0_i32_0 = arith.constant 0 : i32
    %c0_i32_1 = arith.constant 0 : i32
    return %c0_i32, %c0_i32_0 : i32, i32
  }
  func.func @transform_3(%arg0: i32) -> (i32, i32) {
    %c0_i32 = arith.constant 0 : i32
    %c0_i32_0 = arith.constant 0 : i32
    return %arg0, %c0_i32 : i32, i32
  }
}

</mosaic_0001>

<llo_original>
// kernel: vqvae_forward.9
$region0: #{vqvae_forward.9}
  #allocation0 [shape = 'u32[]', space=smem, size = 0x4, offset = 0x4, fixed_abs, tag = 'smem constant byte address 0x4 - core index']
  #allocation1 [shape = 'u32[144,128]{1,0:T(1,128)}', space=vmem, size = 0x12000, scoped, tag = 'internal scratch']
  %s0 = inlined_call_operand.vmem [shape: bf16[512,48], index: 0, kind: input, shape index: {}]
  %s1 = inlined_call_operand.vmem [shape: bf16[48,32], index: 1, kind: input, shape index: {}]
  %s2 = inlined_call_operand.vmem [shape: f32[1,32], index: 2, kind: input, shape index: {}]
  %s3 = inlined_call_operand.vmem [shape: f32[512,32], index: 3, kind: output, shape index: {}]
  %s4 = sld [smem:[#allocation0]]
  $region45: #{vqvae_forward.9} parent=0
    _
  %s6 = ssub.s32 1, %s4
  %s7 = scalar_select 0, %s6, %s4
  loop: start=0, step=1, limit=4
  $region2: #{vqvae_forward.9} parent=0 // loop_pre_header
    _
  $region3: #{vqvae_forward.9} parent=0 // loop_header
    %s9 = sphi 0, %s13
    %p10 = scmp.ge.s32.totalorder %s9, 4
    %s19 = sphi 0, %s21
    %s22 = sphi 0, %s19
    %s23 = sphi 0, %s22
    %s39 = sphi 0, %s23
    %s43 = sphi 0, %s43
    %s45 = sphi 0, %s43
    %s46 = sphi 0, %s45
    %s60 = sphi 0, %s46
    %s64 = sphi 0, %s64
    %s66 = sphi 0, %s64
    %s67 = sphi 0, %s66
    %s81 = sphi 0, %s67
    %s87 = sphi 0, %s89
    %s90 = sphi 0, %s87
    %s91 = sphi 0, %s90
    %s107 = sphi 0, %s91
  $region4: #{vqvae_forward.9} parent=0 // loop_header_branch
    %12 = sbr.rel (%p10) target = $region8
  $region5: #{vqvae_forward.9} parent=0 // loop_body
    %s14 = ssub.s32 %s9, 1
    %s15 = ssub.s32 %s9, 2
    %s16 = sadd.s32 %s9, 1
    %s17 = ssub.s32 %s9, %s16
    %p18 = scmp.eq.s32.totalorder %s17, 0
    %s20 = sadd.s32 %s19, 1
    %s21 = scalar_select %p18, %s19, %s20
    %p24 = pneg %p18
    %p25 = scmp.eq.s32.totalorder %s9, 1
    %p26 = por %p24, %p25
    %p27 = scmp.ne.s32.totalorder %s19, %s22
    %p28 = scmp.eq.s32.totalorder %s9, 0
    %p29 = por %p27, %p28
    %p30 = scmp.ne.s32.totalorder %s19, %s22
    %p31 = scmp.eq.s32.totalorder %s14, 1
    %p32 = por %p30, %p31
    %p33 = scmp.ne.s32.totalorder %s22, %s23
    %p34 = scmp.eq.s32.totalorder %s14, 0
    %p35 = por %p33, %p34
    %p36 = scmp.ne.s32.totalorder %s22, %s23
    %p37 = scmp.eq.s32.totalorder %s15, 1
    %p38 = por %p36, %p37
    %p40 = scmp.ne.s32.totalorder %s23, %s39
    %p41 = scmp.eq.s32.totalorder %s15, 0
    %p42 = por %p40, %p41
    %s44 = sadd.s32 %s43, 1
    %p47 = scmp.eq.s32.totalorder %s9, 1
    %p48 = scmp.ne.s32.totalorder %s43, %s45
    %p49 = scmp.eq.s32.totalorder %s9, 0
    %p50 = por %p48, %p49
    %p51 = scmp.ne.s32.totalorder %s43, %s45
    %p52 = scmp.eq.s32.totalorder %s14, 1
    %p53 = por %p51, %p52
    %p54 = scmp.ne.s32.totalorder %s45, %s46
    %p55 = scmp.eq.s32.totalorder %s14, 0
    %p56 = por %p54, %p55
    %p57 = scmp.ne.s32.totalorder %s45, %s46
    %p58 = scmp.eq.s32.totalorder %s15, 1
    %p59 = por %p57, %p58
    %p61 = scmp.ne.s32.totalorder %s46, %s60
    %p62 = scmp.eq.s32.totalorder %s15, 0
    %p63 = por %p61, %p62
    %s65 = sadd.s32 %s64, 1
    %p68 = scmp.eq.s32.totalorder %s9, 1
    %p69 = scmp.ne.s32.totalorder %s64, %s66
    %p70 = scmp.eq.s32.totalorder %s9, 0
    %p71 = por %p69, %p70
    %p72 = scmp.ne.s32.totalorder %s64, %s66
    %p73 = scmp.eq.s32.totalorder %s14, 1
    %p74 = por %p72, %p73
    %p75 = scmp.ne.s32.totalorder %s66, %s67
    %p76 = scmp.eq.s32.totalorder %s14, 0
    %p77 = por %p75, %p76
    %p78 = scmp.ne.s32.totalorder %s66, %s67
    %p79 = scmp.eq.s32.totalorder %s15, 1
    %p80 = por %p78, %p79
    %p82 = scmp.ne.s32.totalorder %s67, %s81
    %p83 = scmp.eq.s32.totalorder %s15, 0
    %p84 = por %p82, %p83
    %s85 = ssub.s32 %s9, %s16
    %p86 = scmp.eq.s32.totalorder %s85, 0
    %s88 = sadd.s32 %s87, 1
    %s89 = scalar_select %p86, %s87, %s88
    %p92 = pneg %p86
    %p93 = scmp.eq.s32.totalorder %s9, 1
    %p94 = por %p92, %p93
    %p95 = scmp.ne.s32.totalorder %s87, %s90
    %p96 = scmp.eq.s32.totalorder %s9, 0
    %p97 = por %p95, %p96
    %p98 = scmp.ne.s32.totalorder %s87, %s90
    %p99 = scmp.eq.s32.totalorder %s14, 1
    %p100 = por %p98, %p99
    %p101 = scmp.ne.s32.totalorder %s90, %s91
    %p102 = scmp.eq.s32.totalorder %s14, 0
    %p103 = por %p101, %p102
    %p104 = scmp.ne.s32.totalorder %s90, %s91
    %p105 = scmp.eq.s32.totalorder %s15, 1
    %p106 = por %p104, %p105
    %p108 = scmp.ne.s32.totalorder %s91, %s107
    %p109 = scmp.eq.s32.totalorder %s15, 0
    %p110 = por %p108, %p109
    %p111 = scmp.le.s32.totalorder 1, %s9
    %p112 = scmp.lt.s32.totalorder %s9, 3
    %p113 = pnand %p111, %p112
    %p114 = pneg %p113
    // Predicated region
    $region9: #{vqvae_forward.9} parent=5 // pred_check
      _
    $region10: #{vqvae_forward.9} parent=5 // pred_check_branch
      %116 = sbr.rel (%p113) target = $region12
    $region11: #{vqvae_forward.9} parent=5 // pred_region
      %s117 = ssub.s32 %s9, 1
      // Predicated region
      $region13: #{vqvae_forward.9} parent=11 // pred_check
        %p118 = pneg %p56
      $region14: #{vqvae_forward.9} parent=11 // pred_check_branch
        %120 = sbr.rel (%p118) target = $region16
      $region15: #{vqvae_forward.9} parent=11 // pred_region
        _
      $region16: #{vqvae_forward.9} parent=11 // pred_fallthru
        _
      // Predicated region
      $region17: #{vqvae_forward.9} parent=11 // pred_check
        %p121 = pneg %p77
      $region18: #{vqvae_forward.9} parent=11 // pred_check_branch
        %123 = sbr.rel (%p121) target = $region20
      $region19: #{vqvae_forward.9} parent=11 // pred_region
        _
      $region20: #{vqvae_forward.9} parent=11 // pred_fallthru
        _
    $region12: #{vqvae_forward.9} parent=5 // pred_fallthru
      _
    %p124 = scmp.lt.s32.totalorder %s9, 2
    // Predicated region
    $region21: #{vqvae_forward.9} parent=5 // pred_check
      %p125 = pneg %p124
    $region22: #{vqvae_forward.9} parent=5 // pred_check_branch
      %127 = sbr.rel (%p125) target = $region24
    $region23: #{vqvae_forward.9} parent=5 // pred_region
      // Predicated region
      $region25: #{vqvae_forward.9} parent=23 // pred_check
        %p128 = pneg %p29
      $region26: #{vqvae_forward.9} parent=23 // pred_check_branch
        %130 = sbr.rel (%p128) target = $region28
      $region27: #{vqvae_forward.9} parent=23 // pred_region
        %s131 = smul.u32 32, %s9
        %p132 = scmp.lt.s32.totalorder %s131, 63
        %s133 = scalar_select %p132, %s131, 63
        %s134 = smul.addr %s133, 4
        %s135 = scalar_lea.vmem %s0, %s134
        %s136 = smul.u32 32, %s9
      $region28: #{vqvae_forward.9} parent=23 // pred_fallthru
        _
    $region24: #{vqvae_forward.9} parent=5 // pred_fallthru
      _
    %p137 = scmp.le.s32.totalorder 1, %s9
    %p138 = scmp.lt.s32.totalorder %s9, 3
    %p139 = pnand %p137, %p138
    %p140 = pneg %p139
    // Predicated region
    $region29: #{vqvae_forward.9} parent=5 // pred_check
      _
    $region30: #{vqvae_forward.9} parent=5 // pred_check_branch
      %142 = sbr.rel (%p139) target = $region32
    $region31: #{vqvae_forward.9} parent=5 // pred_region
      %s143 = ssub.s32 %s9, 1
      %s144 = smul.u32 32, %s14
      %p145 = scmp.lt.s32.totalorder %s144, 63
      %s146 = scalar_select %p145, %s144, 63
      %s147 = smul.addr %s146, 4
      %s148 = scalar_lea.vmem %s0, %s147
      %p149 = pneg %p35
      %p150 = pneg %p32
      %p151 = pneg %p56
      %p152 = pneg %p53
      %p153 = pneg %p77
      %p154 = pneg %p74
      %p155 = pneg %p103
      %p156 = pneg %p100
      %s157 = smul.u32 32, %s14
      %p158 = scmp.lt.s32.totalorder %s157, 63
      %s159 = scalar_select %p158, %s157, 63
      %s160 = smul.addr %s159, 8
      %s161 = scalar_lea.vmem %s3, %s160
      %s162 = smul.u32 32, %s14
      %p163 = scmp.lt.s32.totalorder %s162, 63
      %s164 = scalar_select %p163, %s162, 63
      %s165 = smul.addr %s164, 4
      %s166 = scalar_lea.vmem %s0, %s165
      %s167 = smul.u32 32, %s14
      %s168 = smul.u32 32, %s14
      %p169 = scmp.lt.s32.totalorder %s168, 63
      %s170 = scalar_select %p169, %s168, 63
      %s171 = smul.addr %s170, 8
      %s172 = scalar_lea.vmem %s3, %s171
      %s173 = smul.u32 32, %s14
      %v175 = vld [vmem:[%s166] sm:$0xf]
      %v176 = vld [vmem:[%s166 + $0x4] sm:$0xf]
      %v177 = vld [vmem:[%s166 + $0x8] sm:$0xf]
      %v178 = vld [vmem:[%s166 + $0xc] sm:$0xf]
      %v179 = vld [vmem:[%s166 + $0x10] sm:$0xf]
      %v180 = vld [vmem:[%s166 + $0x14] sm:$0xf]
      %v181 = vld [vmem:[%s166 + $0x18] sm:$0xf]
      %v182 = vld [vmem:[%s166 + $0x1c] sm:$0xf]
      %v183 = vld [vmem:[%s166 + $0x20] sm:$0xf]
      %v184 = vld [vmem:[%s166 + $0x24] sm:$0xf]
      %v185 = vld [vmem:[%s166 + $0x28] sm:$0xf]
      %v186 = vld [vmem:[%s166 + $0x2c] sm:$0xf]
      %v187 = vld [vmem:[%s166 + $0x30] sm:$0xf]
      %v188 = vld [vmem:[%s166 + $0x34] sm:$0xf]
      %v189 = vld [vmem:[%s166 + $0x38] sm:$0xf]
      %v190 = vld [vmem:[%s166 + $0x3c] sm:$0xf]
      %v191 = vld [vmem:[%s166 + $0x40] sm:$0xf]
      %v192 = vld [vmem:[%s166 + $0x44] sm:$0xf]
      %v193 = vld [vmem:[%s166 + $0x48] sm:$0xf]
      %v194 = vld [vmem:[%s166 + $0x4c] sm:$0xf]
      %v195 = vld [vmem:[%s166 + $0x50] sm:$0xf]
      %v196 = vld [vmem:[%s166 + $0x54] sm:$0xf]
      %v197 = vld [vmem:[%s166 + $0x58] sm:$0xf]
      %v198 = vld [vmem:[%s166 + $0x5c] sm:$0xf]
      %v199 = vld [vmem:[%s166 + $0x60] sm:$0xf]
      %v200 = vld [vmem:[%s166 + $0x64] sm:$0xf]
      %v201 = vld [vmem:[%s166 + $0x68] sm:$0xf]
      %v202 = vld [vmem:[%s166 + $0x6c] sm:$0xf]
      %v203 = vld [vmem:[%s166 + $0x70] sm:$0xf]
      %v204 = vld [vmem:[%s166 + $0x74] sm:$0xf]
      %v205 = vld [vmem:[%s166 + $0x78] sm:$0xf]
      %v206 = vld [vmem:[%s166 + $0x7c] sm:$0xf]
      %v207 = vld [vmem:[%s1] sm:$0xf]
      %v208 = vld [vmem:[%s1 + $0x4] sm:$0xf]
      %v209 = vld [vmem:[%s1 + $0x8] sm:$0xf]
      %v210 = vld [vmem:[%s1 + $0xc] sm:$0xf]
      %v211 = vld [vmem:[%s1 + $0x10] sm:$0xf]
      %v212 = vld [vmem:[%s1 + $0x14] sm:$0xf]
      %v213 = vld [vmem:[%s2] sm:$0x1]
      %v215 = vlaneseq
      %v216 = vshrl.u32 %v215, 7
      %v217 = vsub.s32 0, %v216
      %v218 = vrot.slane %v213, %v217
      %v252 = vunpack.c.l.b16 %v175
      %v253 = vunpack.c.l.b16 %v176
      %v254 = vunpack.c.l.b16 %v177
      %v255 = vunpack.c.l.b16 %v178
      %v256 = vunpack.c.l.b16 %v179
      %v257 = vunpack.c.l.b16 %v180
      %v258 = vunpack.c.l.b16 %v181
      %v259 = vunpack.c.l.b16 %v182
      %v260 = vunpack.c.l.b16 %v183
      %v261 = vunpack.c.l.b16 %v184
      %v262 = vunpack.c.l.b16 %v185
      %v263 = vunpack.c.l.b16 %v186
      %v264 = vunpack.c.l.b16 %v187
      %v265 = vunpack.c.l.b16 %v188
      %v266 = vunpack.c.l.b16 %v189
      %v267 = vunpack.c.l.b16 %v190
      %v268 = vunpack.c.l.b16 %v191
      %v269 = vunpack.c.l.b16 %v192
      %v270 = vunpack.c.l.b16 %v193
      %v271 = vunpack.c.l.b16 %v194
      %v272 = vunpack.c.l.b16 %v195
      %v273 = vunpack.c.l.b16 %v196
      %v274 = vunpack.c.l.b16 %v197
      %v275 = vunpack.c.l.b16 %v198
      %v276 = vunpack.c.l.b16 %v199
      %v277 = vunpack.c.l.b16 %v200
      %v278 = vunpack.c.l.b16 %v201
      %v279 = vunpack.c.l.b16 %v202
      %v280 = vunpack.c.l.b16 %v203
      %v281 = vunpack.c.l.b16 %v204
      %v282 = vunpack.c.l.b16 %v205
      %v283 = vunpack.c.l.b16 %v206
      %v284 = vpack.c.b16 %v253, %v252
      %v285 = vpack.c.b16 %v255, %v254
      %v286 = vpack.c.b16 %v257, %v256
      %v287 = vpack.c.b16 %v259, %v258
      %v288 = vpack.c.b16 %v261, %v260
      %v289 = vpack.c.b16 %v263, %v262
      %v290 = vpack.c.b16 %v265, %v264
      %v291 = vpack.c.b16 %v267, %v266
      %v292 = vpack.c.b16 %v269, %v268
      %v293 = vpack.c.b16 %v271, %v270
      %v294 = vpack.c.b16 %v273, %v272
      %v295 = vpack.c.b16 %v275, %v274
      %v296 = vpack.c.b16 %v277, %v276
      %v297 = vpack.c.b16 %v279, %v278
      %v298 = vpack.c.b16 %v281, %v280
      %v299 = vpack.c.b16 %v283, %v282
      %v306 = vunpack.c.l.b16 %v207
      %v307 = vunpack.c.l.b16 %v208
      %v308 = vunpack.c.l.b16 %v209
      %v309 = vunpack.c.l.b16 %v210
      %v310 = vunpack.c.l.b16 %v211
      %v311 = vunpack.c.l.b16 %v212
      %v312 = vpack.c.b16 %v307, %v306
      %v313 = vpack.c.b16 %v309, %v308
      %v314 = vpack.c.b16 %v311, %v310
      %vm318 = vcmask 392192
      %v320 = vsel %vm318, %v284, 0
      %v323 = vsel %vm318, %v285, 0
      %v326 = vsel %vm318, %v286, 0
      %v329 = vsel %vm318, %v287, 0
      %v332 = vsel %vm318, %v288, 0
      %v335 = vsel %vm318, %v289, 0
      %v338 = vsel %vm318, %v290, 0
      %v341 = vsel %vm318, %v291, 0
      %v344 = vsel %vm318, %v292, 0
      %v347 = vsel %vm318, %v293, 0
      %v350 = vsel %vm318, %v294, 0
      %v353 = vsel %vm318, %v295, 0
      %v356 = vsel %vm318, %v296, 0
      %v359 = vsel %vm318, %v297, 0
      %v362 = vsel %vm318, %v298, 0
      %v365 = vsel %vm318, %v299, 0
      %367 = vmatprep.subr.bf16.mxu0 0
      %368 = vmatpush1.bf16.msra.mxu0 %v312
      %369 = vmatprep.subr.bf16.mxu0 0
      %370 = vmatpush1.bf16.msra.mxu0 %v313
      %371 = vmatprep.subr.bf16.mxu0 0
      %372 = vmatpush1.bf16.msra.mxu0 %v314
      %373 = vmatprep.subr.bf16.mxu0 0
      %374 = vmatpush1.bf16.msra.mxu0 0
      %375 = vmatprep.subr.bf16.mxu0 0
      %376 = vmatpush1.bf16.msra.mxu0 0
      %377 = vmatprep.subr.bf16.mxu0 0
      %378 = vmatpush1.bf16.msra.mxu0 0
      %379 = vmatprep.subr.bf16.mxu0 0
      %380 = vmatpush1.bf16.msra.mxu0 0
      %381 = vmatprep.subr.bf16.mxu0 0
      %382 = vmatpush1.bf16.msra.mxu0 0
      %383 = vmatprep.subr.bf16.mxu0 0
      %384 = vmatpush1.bf16.msra.mxu0 0
      %385 = vmatprep.subr.bf16.mxu0 0
      %386 = vmatpush1.bf16.msra.mxu0 0
      %387 = vmatprep.subr.bf16.mxu0 0
      %388 = vmatpush1.bf16.msra.mxu0 0
      %389 = vmatprep.subr.bf16.mxu0 0
      %390 = vmatpush1.bf16.msra.mxu0 0
      %391 = vmatprep.subr.bf16.mxu0 0
      %392 = vmatpush1.bf16.msra.mxu0 0
      %393 = vmatprep.subr.bf16.mxu0 0
      %394 = vmatpush1.bf16.msra.mxu0 0
      %395 = vmatprep.subr.bf16.mxu0 0
      %396 = vmatpush1.bf16.msra.mxu0 0
      %397 = vmatprep.subr.bf16.mxu0 0
      %398 = vmatpush1.bf16.msra.mxu0 0
      %399 = vmatprep.mubr.bf16.mxu0 0
      %400 = vmatmul.mubr.bf16.gmra.mrb[0].mxu0 %v320
      %v401 = vpop.f32.mrb[0].mxu0
      %v402 = vadd.f32 %v218, %v401
      %v403 = vpop.f32.mrb[0].mxu0
      %v404 = vpop.f32.mrb[0].mxu0
      %v405 = vadd.f32 %v218, %v404
      %v406 = vpop.f32.mrb[0].mxu0
      %407 = vmatprep.mubr.bf16.mxu0 0
      %408 = vmatmul.mubr.bf16.gmra.mrb[0].mxu0 %v323
      %v409 = vpop.f32.mrb[0].mxu0
      %v410 = vadd.f32 %v218, %v409
      %v411 = vpop.f32.mrb[0].mxu0
      %v412 = vpop.f32.mrb[0].mxu0
      %v413 = vadd.f32 %v218, %v412
      %v414 = vpop.f32.mrb[0].mxu0
      %415 = vmatprep.mubr.bf16.mxu0 0
      %416 = vmatmul.mubr.bf16.gmra.mrb[0].mxu0 %v326
      %v417 = vpop.f32.mrb[0].mxu0
      %v418 = vadd.f32 %v218, %v417
      %v419 = vpop.f32.mrb[0].mxu0
      %v420 = vpop.f32.mrb[0].mxu0
      %v421 = vadd.f32 %v218, %v420
      %v422 = vpop.f32.mrb[0].mxu0
      %423 = vmatprep.mubr.bf16.mxu0 0
      %424 = vmatmul.mubr.bf16.gmra.mrb[0].mxu0 %v329
      %v425 = vpop.f32.mrb[0].mxu0
      %v426 = vadd.f32 %v218, %v425
      %v427 = vpop.f32.mrb[0].mxu0
      %v428 = vpop.f32.mrb[0].mxu0
      %v429 = vadd.f32 %v218, %v428
      %v430 = vpop.f32.mrb[0].mxu0
      %431 = vmatprep.mubr.bf16.mxu0 0
      %432 = vmatmul.mubr.bf16.gmra.mrb[0].mxu0 %v332
      %v433 = vpop.f32.mrb[0].mxu0
      %v434 = vadd.f32 %v218, %v433
      %v435 = vpop.f32.mrb[0].mxu0
      %v436 = vpop.f32.mrb[0].mxu0
      %v437 = vadd.f32 %v218, %v436
      %v438 = vpop.f32.mrb[0].mxu0
      %439 = vmatprep.mubr.bf16.mxu0 0
      %440 = vmatmul.mubr.bf16.gmra.mrb[0].mxu0 %v335
      %v441 = vpop.f32.mrb[0].mxu0
      %v442 = vadd.f32 %v218, %v441
      %v443 = vpop.f32.mrb[0].mxu0
      %v444 = vpop.f32.mrb[0].mxu0
      %v445 = vadd.f32 %v218, %v444
      %v446 = vpop.f32.mrb[0].mxu0
      %447 = vmatprep.mubr.bf16.mxu0 0
      %448 = vmatmul.mubr.bf16.gmra.mrb[0].mxu0 %v338
      %v449 = vpop.f32.mrb[0].mxu0
      %v450 = vadd.f32 %v218, %v449
      %v451 = vpop.f32.mrb[0].mxu0
      %v452 = vpop.f32.mrb[0].mxu0
      %v453 = vadd.f32 %v218, %v452
      %v454 = vpop.f32.mrb[0].mxu0
      %455 = vmatprep.mubr.bf16.mxu0 0
      %456 = vmatmul.mubr.bf16.gmra.mrb[0].mxu0 %v341
      %v457 = vpop.f32.mrb[0].mxu0
      %v458 = vadd.f32 %v218, %v457
      %v459 = vpop.f32.mrb[0].mxu0
      %v460 = vpop.f32.mrb[0].mxu0
      %v461 = vadd.f32 %v218, %v460
      %v462 = vpop.f32.mrb[0].mxu0
      %463 = vmatprep.mubr.bf16.mxu0 0
      %464 = vmatmul.mubr.bf16.gmra.mrb[0].mxu0 %v344
      %v465 = vpop.f32.mrb[0].mxu0
      %v466 = vadd.f32 %v218, %v465
      %v467 = vpop.f32.mrb[0].mxu0
      %v468 = vpop.f32.mrb[0].mxu0
      %v469 = vadd.f32 %v218, %v468
      %v470 = vpop.f32.mrb[0].mxu0
      %471 = vmatprep.mubr.bf16.mxu0 0
      %472 = vmatmul.mubr.bf16.gmra.mrb[0].mxu0 %v347
      %v473 = vpop.f32.mrb[0].mxu0
      %v474 = vadd.f32 %v218, %v473
      %v475 = vpop.f32.mrb[0].mxu0
      %v476 = vpop.f32.mrb[0].mxu0
      %v477 = vadd.f32 %v218, %v476
      %v478 = vpop.f32.mrb[0].mxu0
      %479 = vmatprep.mubr.bf16.mxu0 0
      %480 = vmatmul.mubr.bf16.gmra.mrb[0].mxu0 %v350
      %v481 = vpop.f32.mrb[0].mxu0
      %v482 = vadd.f32 %v218, %v481
      %v483 = vpop.f32.mrb[0].mxu0
      %v484 = vpop.f32.mrb[0].mxu0
      %v485 = vadd.f32 %v218, %v484
      %v486 = vpop.f32.mrb[0].mxu0
      %487 = vmatprep.mubr.bf16.mxu0 0
      %488 = vmatmul.mubr.bf16.gmra.mrb[0].mxu0 %v353
      %v489 = vpop.f32.mrb[0].mxu0
      %v490 = vadd.f32 %v218, %v489
      %v491 = vpop.f32.mrb[0].mxu0
      %v492 = vpop.f32.mrb[0].mxu0
      %v493 = vadd.f32 %v218, %v492
      %v494 = vpop.f32.mrb[0].mxu0
      %495 = vmatprep.mubr.bf16.mxu0 0
      %496 = vmatmul.mubr.bf16.gmra.mrb[0].mxu0 %v356
      %v497 = vpop.f32.mrb[0].mxu0
      %v498 = vadd.f32 %v218, %v497
      %v499 = vpop.f32.mrb[0].mxu0
      %v500 = vpop.f32.mrb[0].mxu0
      %v501 = vadd.f32 %v218, %v500
      %v502 = vpop.f32.mrb[0].mxu0
      %503 = vmatprep.mubr.bf16.mxu0 0
      %504 = vmatmul.mubr.bf16.gmra.mrb[0].mxu0 %v359
      %v505 = vpop.f32.mrb[0].mxu0
      %v506 = vadd.f32 %v218, %v505
      %v507 = vpop.f32.mrb[0].mxu0
      %v508 = vpop.f32.mrb[0].mxu0
      %v509 = vadd.f32 %v218, %v508
      %v510 = vpop.f32.mrb[0].mxu0
      %511 = vmatprep.mubr.bf16.mxu0 0
      %512 = vmatmul.mubr.bf16.gmra.mrb[0].mxu0 %v362
      %v513 = vpop.f32.mrb[0].mxu0
      %v514 = vadd.f32 %v218, %v513
      %v515 = vpop.f32.mrb[0].mxu0
      %v516 = vpop.f32.mrb[0].mxu0
      %v517 = vadd.f32 %v218, %v516
      %v518 = vpop.f32.mrb[0].mxu0
      %519 = vmatprep.mubr.bf16.mxu0 0
      %520 = vmatmul.mubr.bf16.gmra.mrb[0].mxu0 %v365
      %v521 = vpop.f32.mrb[0].mxu0
      %v522 = vadd.f32 %v218, %v521
      %v523 = vpop.f32.mrb[0].mxu0
      %v524 = vpop.f32.mrb[0].mxu0
      %v525 = vadd.f32 %v218, %v524
      %v526 = vpop.f32.mrb[0].mxu0
      %527 = vdwg.mxu0
      %v528 = vmax.f32 %v402, 0.0
      %v529 = vmax.f32 %v405, 0.0
      %v530 = vmax.f32 %v410, 0.0
      %v531 = vmax.f32 %v413, 0.0
      %v532 = vmax.f32 %v418, 0.0
      %v533 = vmax.f32 %v421, 0.0
      %v534 = vmax.f32 %v426, 0.0
      %v535 = vmax.f32 %v429, 0.0
      %v536 = vmax.f32 %v434, 0.0
      %v537 = vmax.f32 %v437, 0.0
      %v538 = vmax.f32 %v442, 0.0
      %v539 = vmax.f32 %v445, 0.0
      %v540 = vmax.f32 %v450, 0.0
      %v541 = vmax.f32 %v453, 0.0
      %v542 = vmax.f32 %v458, 0.0
      %v543 = vmax.f32 %v461, 0.0
      %v544 = vmax.f32 %v466, 0.0
      %v545 = vmax.f32 %v469, 0.0
      %v546 = vmax.f32 %v474, 0.0
      %v547 = vmax.f32 %v477, 0.0
      %v548 = vmax.f32 %v482, 0.0
      %v549 = vmax.f32 %v485, 0.0
      %v550 = vmax.f32 %v490, 0.0
      %v551 = vmax.f32 %v493, 0.0
      %v552 = vmax.f32 %v498, 0.0
      %v553 = vmax.f32 %v501, 0.0
      %v554 = vmax.f32 %v506, 0.0
      %v555 = vmax.f32 %v509, 0.0
      %v556 = vmax.f32 %v514, 0.0
      %v557 = vmax.f32 %v517, 0.0
      %v558 = vmax.f32 %v522, 0.0
      %v559 = vmax.f32 %v525, 0.0
      %vm560 = vcmask 261120
      %561 = vst.msk [vmem:[%s172] sm:$0xff] %vm560, %v528
      %562 = vst.msk [vmem:[%s172 + $0x8] sm:$0xff] %vm560, %v529
      %563 = vst.msk [vmem:[%s172 + $0x10] sm:$0xff] %vm560, %v530
      %564 = vst.msk [vmem:[%s172 + $0x18] sm:$0xff] %vm560, %v531
      %565 = vst.msk [vmem:[%s172 + $0x20] sm:$0xff] %vm560, %v532
      %566 = vst.msk [vmem:[%s172 + $0x28] sm:$0xff] %vm560, %v533
      %567 = vst.msk [vmem:[%s172 + $0x30] sm:$0xff] %vm560, %v534
      %568 = vst.msk [vmem:[%s172 + $0x38] sm:$0xff] %vm560, %v535
      %569 = vst.msk [vmem:[%s172 + $0x40] sm:$0xff] %vm560, %v536
      %570 = vst.msk [vmem:[%s172 + $0x48] sm:$0xff] %vm560, %v537
      %571 = vst.msk [vmem:[%s172 + $0x50] sm:$0xff] %vm560, %v538
      %572 = vst.msk [vmem:[%s172 + $0x58] sm:$0xff] %vm560, %v539
      %573 = vst.msk [vmem:[%s172 + $0x60] sm:$0xff] %vm560, %v540
      %574 = vst.msk [vmem:[%s172 + $0x68] sm:$0xff] %vm560, %v541
      %575 = vst.msk [vmem:[%s172 + $0x70] sm:$0xff] %vm560, %v542
      %576 = vst.msk [vmem:[%s172 + $0x78] sm:$0xff] %vm560, %v543
      %577 = vst.msk [vmem:[%s172 + $0x80] sm:$0xff] %vm560, %v544
      %578 = vst.msk [vmem:[%s172 + $0x88] sm:$0xff] %vm560, %v545
      %579 = vst.msk [vmem:[%s172 + $0x90] sm:$0xff] %vm560, %v546
      %580 = vst.msk [vmem:[%s172 + $0x98] sm:$0xff] %vm560, %v547
      %581 = vst.msk [vmem:[%s172 + $0xa0] sm:$0xff] %vm560, %v548
      %582 = vst.msk [vmem:[%s172 + $0xa8] sm:$0xff] %vm560, %v549
      %583 = vst.msk [vmem:[%s172 + $0xb0] sm:$0xff] %vm560, %v550
      %584 = vst.msk [vmem:[%s172 + $0xb8] sm:$0xff] %vm560, %v551
      %585 = vst.msk [vmem:[%s172 + $0xc0] sm:$0xff] %vm560, %v552
      %586 = vst.msk [vmem:[%s172 + $0xc8] sm:$0xff] %vm560, %v553
      %587 = vst.msk [vmem:[%s172 + $0xd0] sm:$0xff] %vm560, %v554
      %588 = vst.msk [vmem:[%s172 + $0xd8] sm:$0xff] %vm560, %v555
      %589 = vst.msk [vmem:[%s172 + $0xe0] sm:$0xff] %vm560, %v556
      %590 = vst.msk [vmem:[%s172 + $0xe8] sm:$0xff] %vm560, %v557
      %591 = vst.msk [vmem:[%s172 + $0xf0] sm:$0xff] %vm560, %v558
      %592 = vst.msk [vmem:[%s172 + $0xf8] sm:$0xff] %vm560, %v559
      %s593 = smul.u32 32, %s14
      %p594 = scmp.lt.s32.totalorder %s593, 63
      %s595 = scalar_select %p594, %s593, 63
      %s596 = smul.addr %s595, 8
      %s597 = scalar_lea.vmem %s3, %s596
      // Predicated region
      $region33: #{vqvae_forward.9} parent=31 // pred_check
        %p598 = pneg %p100
      $region34: #{vqvae_forward.9} parent=31 // pred_check_branch
        %600 = sbr.rel (%p598) target = $region36
      $region35: #{vqvae_forward.9} parent=31 // pred_region
        %s601 = smul.u32 32, %s14
      $region36: #{vqvae_forward.9} parent=31 // pred_fallthru
        _
    $region32: #{vqvae_forward.9} parent=5 // pred_fallthru
      _
    %p602 = scmp.le.s32.totalorder 2, %s9
    // Predicated region
    $region37: #{vqvae_forward.9} parent=5 // pred_check
      %p603 = pneg %p602
    $region38: #{vqvae_forward.9} parent=5 // pred_check_branch
      %605 = sbr.rel (%p603) target = $region40
    $region39: #{vqvae_forward.9} parent=5 // pred_region
      %s606 = ssub.s32 %s9, 2
      // Predicated region
      $region41: #{vqvae_forward.9} parent=39 // pred_check
        %p607 = pneg %p106
      $region42: #{vqvae_forward.9} parent=39 // pred_check_branch
        %609 = sbr.rel (%p607) target = $region44
      $region43: #{vqvae_forward.9} parent=39 // pred_region
        %s610 = smul.u32 32, %s15
        %p611 = scmp.lt.s32.totalorder %s610, 63
        %s612 = scalar_select %p611, %s610, 63
        %s613 = smul.addr %s612, 8
        %s614 = scalar_lea.vmem %s3, %s613
      $region44: #{vqvae_forward.9} parent=39 // pred_fallthru
        _
    $region40: #{vqvae_forward.9} parent=5 // pred_fallthru
      _
  $region6: #{vqvae_forward.9} parent=0 // loop_footer
    %s13 = sadd.s32 1, %s9
  $region7: #{vqvae_forward.9} parent=0 // loop_footer_branch
    %8 = sbr.rel target = $region3
  $region8: #{vqvae_forward.9} parent=0 // loop_exit
    _

// kernel: vqvae_forward.10
$region0: #{vqvae_forward.10}
  #allocation0 [shape = 'u32[]', space=smem, size = 0x4, offset = 0x4, fixed_abs, tag = 'smem constant byte address 0x4 - core index']
  #allocation1 [shape = 'u32[144,128]{1,0:T(1,128)}', space=vmem, size = 0x12000, scoped, tag = 'internal scratch']
  %s0 = inlined_call_operand.vmem [shape: bf16[128,512], index: 0, kind: input, shape index: {}]
  %s1 = inlined_call_operand.vmem [shape: bf16[512,32], index: 1, kind: input, shape index: {}]
  %s2 = inlined_call_operand.vmem [shape: f32[1,32], index: 2, kind: input, shape index: {}]
  %s3 = inlined_call_operand.vmem [shape: f32[128,32], index: 3, kind: output, shape index: {}]
  %s4 = sld [smem:[#allocation0]]
  $region22: #{vqvae_forward.10} parent=0
    _
  %s6 = ssub.s32 1, %s4
  %s7 = scalar_select 0, %s6, %s4
  // Predicated region
  $region2: #{vqvae_forward.10} parent=0 // pred_check
    _
  $region3: #{vqvae_forward.10} parent=0 // pred_check_branch
    %9 = sbr.rel (0) target = $region5
  $region4: #{vqvae_forward.10} parent=0 // pred_region
    _
  $region5: #{vqvae_forward.10} parent=0 // pred_fallthru
    _
  // Predicated region
  $region6: #{vqvae_forward.10} parent=0 // pred_check
    _
  $region7: #{vqvae_forward.10} parent=0 // pred_check_branch
    %11 = sbr.rel (0) target = $region9
  $region8: #{vqvae_forward.10} parent=0 // pred_region
    _
  $region9: #{vqvae_forward.10} parent=0 // pred_fallthru
    _
  // Predicated region
  $region10: #{vqvae_forward.10} parent=0 // pred_check
    _
  $region11: #{vqvae_forward.10} parent=0 // pred_check_branch
    %13 = sbr.rel (0) target = $region13
  $region12: #{vqvae_forward.10} parent=0 // pred_region
    _
  $region13: #{vqvae_forward.10} parent=0 // pred_fallthru
    _
  %v15 = vld [vmem:[%s0] sm:$0xff]
  %v16 = vld [vmem:[%s0 + $0x8] sm:$0xff]
  %v17 = vld [vmem:[%s0 + $0x10] sm:$0xff]
  %v18 = vld [vmem:[%s0 + $0x18] sm:$0xff]
  %v19 = vld [vmem:[%s0 + $0x20] sm:$0xff]
  %v20 = vld [vmem:[%s0 + $0x28] sm:$0xff]
  %v21 = vld [vmem:[%s0 + $0x30] sm:$0xff]
  %v22 = vld [vmem:[%s0 + $0x38] sm:$0xff]
  %v23 = vld [vmem:[%s0 + $0x40] sm:$0xff]
  %v24 = vld [vmem:[%s0 + $0x48] sm:$0xff]
  %v25 = vld [vmem:[%s0 + $0x50] sm:$0xff]
  %v26 = vld [vmem:[%s0 + $0x58] sm:$0xff]
  %v27 = vld [vmem:[%s0 + $0x60] sm:$0xff]
  %v28 = vld [vmem:[%s0 + $0x68] sm:$0xff]
  %v29 = vld [vmem:[%s0 + $0x70] sm:$0xff]
  %v30 = vld [vmem:[%s0 + $0x78] sm:$0xff]
  %v31 = vld [vmem:[%s0 + $0x80] sm:$0xff]
  %v32 = vld [vmem:[%s0 + $0x88] sm:$0xff]
  %v33 = vld [vmem:[%s0 + $0x90] sm:$0xff]
  %v34 = vld [vmem:[%s0 + $0x98] sm:$0xff]
  %v35 = vld [vmem:[%s0 + $0xa0] sm:$0xff]
  %v36 = vld [vmem:[%s0 + $0xa8] sm:$0xff]
  %v37 = vld [vmem:[%s0 + $0xb0] sm:$0xff]
  %v38 = vld [vmem:[%s0 + $0xb8] sm:$0xff]
  %v39 = vld [vmem:[%s0 + $0xc0] sm:$0xff]
  %v40 = vld [vmem:[%s0 + $0xc8] sm:$0xff]
  %v41 = vld [vmem:[%s0 + $0xd0] sm:$0xff]
  %v42 = vld [vmem:[%s0 + $0xd8] sm:$0xff]
  %v43 = vld [vmem:[%s0 + $0xe0] sm:$0xff]
  %v44 = vld [vmem:[%s0 + $0xe8] sm:$0xff]
  %v45 = vld [vmem:[%s0 + $0xf0] sm:$0xff]
  %v46 = vld [vmem:[%s0 + $0xf8] sm:$0xff]
  %v47 = vld [vmem:[%s1] sm:$0xf]
  %v48 = vld [vmem:[%s1 + $0x4] sm:$0xf]
  %v49 = vld [vmem:[%s1 + $0x8] sm:$0xf]
  %v50 = vld [vmem:[%s1 + $0xc] sm:$0xf]
  %v51 = vld [vmem:[%s1 + $0x10] sm:$0xf]
  %v52 = vld [vmem:[%s1 + $0x14] sm:$0xf]
  %v53 = vld [vmem:[%s1 + $0x18] sm:$0xf]
  %v54 = vld [vmem:[%s1 + $0x1c] sm:$0xf]
  %v55 = vld [vmem:[%s1 + $0x20] sm:$0xf]
  %v56 = vld [vmem:[%s1 + $0x24] sm:$0xf]
  %v57 = vld [vmem:[%s1 + $0x28] sm:$0xf]
  %v58 = vld [vmem:[%s1 + $0x2c] sm:$0xf]
  %v59 = vld [vmem:[%s1 + $0x30] sm:$0xf]
  %v60 = vld [vmem:[%s1 + $0x34] sm:$0xf]
  %v61 = vld [vmem:[%s1 + $0x38] sm:$0xf]
  %v62 = vld [vmem:[%s1 + $0x3c] sm:$0xf]
  %v63 = vld [vmem:[%s1 + $0x40] sm:$0xf]
  %v64 = vld [vmem:[%s1 + $0x44] sm:$0xf]
  %v65 = vld [vmem:[%s1 + $0x48] sm:$0xf]
  %v66 = vld [vmem:[%s1 + $0x4c] sm:$0xf]
  %v67 = vld [vmem:[%s1 + $0x50] sm:$0xf]
  %v68 = vld [vmem:[%s1 + $0x54] sm:$0xf]
  %v69 = vld [vmem:[%s1 + $0x58] sm:$0xf]
  %v70 = vld [vmem:[%s1 + $0x5c] sm:$0xf]
  %v71 = vld [vmem:[%s1 + $0x60] sm:$0xf]
  %v72 = vld [vmem:[%s1 + $0x64] sm:$0xf]
  %v73 = vld [vmem:[%s1 + $0x68] sm:$0xf]
  %v74 = vld [vmem:[%s1 + $0x6c] sm:$0xf]
  %v75 = vld [vmem:[%s1 + $0x70] sm:$0xf]
  %v76 = vld [vmem:[%s1 + $0x74] sm:$0xf]
  %v77 = vld [vmem:[%s1 + $0x78] sm:$0xf]
  %v78 = vld [vmem:[%s1 + $0x7c] sm:$0xf]
  %v79 = vld [vmem:[%s1 + $0x80] sm:$0xf]
  %v80 = vld [vmem:[%s1 + $0x84] sm:$0xf]
  %v81 = vld [vmem:[%s1 + $0x88] sm:$0xf]
  %v82 = vld [vmem:[%s1 + $0x8c] sm:$0xf]
  %v83 = vld [vmem:[%s1 + $0x90] sm:$0xf]
  %v84 = vld [vmem:[%s1 + $0x94] sm:$0xf]
  %v85 = vld [vmem:[%s1 + $0x98] sm:$0xf]
  %v86 = vld [vmem:[%s1 + $0x9c] sm:$0xf]
  %v87 = vld [vmem:[%s1 + $0xa0] sm:$0xf]
  %v88 = vld [vmem:[%s1 + $0xa4] sm:$0xf]
  %v89 = vld [vmem:[%s1 + $0xa8] sm:$0xf]
  %v90 = vld [vmem:[%s1 + $0xac] sm:$0xf]
  %v91 = vld [vmem:[%s1 + $0xb0] sm:$0xf]
  %v92 = vld [vmem:[%s1 + $0xb4] sm:$0xf]
  %v93 = vld [vmem:[%s1 + $0xb8] sm:$0xf]
  %v94 = vld [vmem:[%s1 + $0xbc] sm:$0xf]
  %v95 = vld [vmem:[%s1 + $0xc0] sm:$0xf]
  %v96 = vld [vmem:[%s1 + $0xc4] sm:$0xf]
  %v97 = vld [vmem:[%s1 + $0xc8] sm:$0xf]
  %v98 = vld [vmem:[%s1 + $0xcc] sm:$0xf]
  %v99 = vld [vmem:[%s1 + $0xd0] sm:$0xf]
  %v100 = vld [vmem:[%s1 + $0xd4] sm:$0xf]
  %v101 = vld [vmem:[%s1 + $0xd8] sm:$0xf]
  %v102 = vld [vmem:[%s1 + $0xdc] sm:$0xf]
  %v103 = vld [vmem:[%s1 + $0xe0] sm:$0xf]
  %v104 = vld [vmem:[%s1 + $0xe4] sm:$0xf]
  %v105 = vld [vmem:[%s1 + $0xe8] sm:$0xf]
  %v106 = vld [vmem:[%s1 + $0xec] sm:$0xf]
  %v107 = vld [vmem:[%s1 + $0xf0] sm:$0xf]
  %v108 = vld [vmem:[%s1 + $0xf4] sm:$0xf]
  %v109 = vld [vmem:[%s1 + $0xf8] sm:$0xf]
  %v110 = vld [vmem:[%s1 + $0xfc] sm:$0xf]
  %v111 = vld [vmem:[%s2] sm:$0x1]
  %v113 = vlaneseq
  %v114 = vshrl.u32 %v113, 7
  %v115 = vsub.s32 0, %v114
  %v116 = vrot.slane %v111, %v115
  %v150 = vunpack.c.l.b16 %v15
  %v151 = vunpack.c.h.b16 %v15
  %v152 = vunpack.c.l.b16 %v16
  %v153 = vunpack.c.h.b16 %v16
  %v154 = vunpack.c.l.b16 %v17
  %v155 = vunpack.c.h.b16 %v17
  %v156 = vunpack.c.l.b16 %v18
  %v157 = vunpack.c.h.b16 %v18
  %v158 = vunpack.c.l.b16 %v19
  %v159 = vunpack.c.h.b16 %v19
  %v160 = vunpack.c.l.b16 %v20
  %v161 = vunpack.c.h.b16 %v20
  %v162 = vunpack.c.l.b16 %v21
  %v163 = vunpack.c.h.b16 %v21
  %v164 = vunpack.c.l.b16 %v22
  %v165 = vunpack.c.h.b16 %v22
  %v166 = vunpack.c.l.b16 %v23
  %v167 = vunpack.c.h.b16 %v23
  %v168 = vunpack.c.l.b16 %v24
  %v169 = vunpack.c.h.b16 %v24
  %v170 = vunpack.c.l.b16 %v25
  %v171 = vunpack.c.h.b16 %v25
  %v172 = vunpack.c.l.b16 %v26
  %v173 = vunpack.c.h.b16 %v26
  %v174 = vunpack.c.l.b16 %v27
  %v175 = vunpack.c.h.b16 %v27
  %v176 = vunpack.c.l.b16 %v28
  %v177 = vunpack.c.h.b16 %v28
  %v178 = vunpack.c.l.b16 %v29
  %v179 = vunpack.c.h.b16 %v29
  %v180 = vunpack.c.l.b16 %v30
  %v181 = vunpack.c.h.b16 %v30
  %v182 = vunpack.c.l.b16 %v31
  %v183 = vunpack.c.h.b16 %v31
  %v184 = vunpack.c.l.b16 %v32
  %v185 = vunpack.c.h.b16 %v32
  %v186 = vunpack.c.l.b16 %v33
  %v187 = vunpack.c.h.b16 %v33
  %v188 = vunpack.c.l.b16 %v34
  %v189 = vunpack.c.h.b16 %v34
  %v190 = vunpack.c.l.b16 %v35
  %v191 = vunpack.c.h.b16 %v35
  %v192 = vunpack.c.l.b16 %v36
  %v193 = vunpack.c.h.b16 %v36
  %v194 = vunpack.c.l.b16 %v37
  %v195 = vunpack.c.h.b16 %v37
  %v196 = vunpack.c.l.b16 %v38
  %v197 = vunpack.c.h.b16 %v38
  %v198 = vunpack.c.l.b16 %v39
  %v199 = vunpack.c.h.b16 %v39
  %v200 = vunpack.c.l.b16 %v40
  %v201 = vunpack.c.h.b16 %v40
  %v202 = vunpack.c.l.b16 %v41
  %v203 = vunpack.c.h.b16 %v41
  %v204 = vunpack.c.l.b16 %v42
  %v205 = vunpack.c.h.b16 %v42
  %v206 = vunpack.c.l.b16 %v43
  %v207 = vunpack.c.h.b16 %v43
  %v208 = vunpack.c.l.b16 %v44
  %v209 = vunpack.c.h.b16 %v44
  %v210 = vunpack.c.l.b16 %v45
  %v211 = vunpack.c.h.b16 %v45
  %v212 = vunpack.c.l.b16 %v46
  %v213 = vunpack.c.h.b16 %v46
  %v214 = vpack.c.b16 %v154, %v150
  %v215 = vpack.c.b16 %v155, %v151
  %v216 = vpack.c.b16 %v156, %v152
  %v217 = vpack.c.b16 %v157, %v153
  %v218 = vpack.c.b16 %v162, %v158
  %v219 = vpack.c.b16 %v163, %v159
  %v220 = vpack.c.b16 %v164, %v160
  %v221 = vpack.c.b16 %v165, %v161
  %v222 = vpack.c.b16 %v170, %v166
  %v223 = vpack.c.b16 %v171, %v167
  %v224 = vpack.c.b16 %v172, %v168
  %v225 = vpack.c.b16 %v173, %v169
  %v226 = vpack.c.b16 %v178, %v174
  %v227 = vpack.c.b16 %v179, %v175
  %v228 = vpack.c.b16 %v180, %v176
  %v229 = vpack.c.b16 %v181, %v177
  %v230 = vpack.c.b16 %v186, %v182
  %v231 = vpack.c.b16 %v187, %v183
  %v232 = vpack.c.b16 %v188, %v184
  %v233 = vpack.c.b16 %v189, %v185
  %v234 = vpack.c.b16 %v194, %v190
  %v235 = vpack.c.b16 %v195, %v191
  %v236 = vpack.c.b16 %v196, %v192
  %v237 = vpack.c.b16 %v197, %v193
  %v238 = vpack.c.b16 %v202, %v198
  %v239 = vpack.c.b16 %v203, %v199
  %v240 = vpack.c.b16 %v204, %v200
  %v241 = vpack.c.b16 %v205, %v201
  %v242 = vpack.c.b16 %v210, %v206
  %v243 = vpack.c.b16 %v211, %v207
  %v244 = vpack.c.b16 %v212, %v208
  %v245 = vpack.c.b16 %v213, %v209
  %v342 = vunpack.c.l.b16 %v47
  %v343 = vunpack.c.l.b16 %v48
  %v344 = vunpack.c.l.b16 %v49
  %v345 = vunpack.c.l.b16 %v50
  %v346 = vunpack.c.l.b16 %v51
  %v347 = vunpack.c.l.b16 %v52
  %v348 = vunpack.c.l.b16 %v53
  %v349 = vunpack.c.l.b16 %v54
  %v350 = vunpack.c.l.b16 %v55
  %v351 = vunpack.c.l.b16 %v56
  %v352 = vunpack.c.l.b16 %v57
  %v353 = vunpack.c.l.b16 %v58
  %v354 = vunpack.c.l.b16 %v59
  %v355 = vunpack.c.l.b16 %v60
  %v356 = vunpack.c.l.b16 %v61
  %v357 = vunpack.c.l.b16 %v62
  %v358 = vunpack.c.l.b16 %v63
  %v359 = vunpack.c.l.b16 %v64
  %v360 = vunpack.c.l.b16 %v65
  %v361 = vunpack.c.l.b16 %v66
  %v362 = vunpack.c.l.b16 %v67
  %v363 = vunpack.c.l.b16 %v68
  %v364 = vunpack.c.l.b16 %v69
  %v365 = vunpack.c.l.b16 %v70
  %v366 = vunpack.c.l.b16 %v71
  %v367 = vunpack.c.l.b16 %v72
  %v368 = vunpack.c.l.b16 %v73
  %v369 = vunpack.c.l.b16 %v74
  %v370 = vunpack.c.l.b16 %v75
  %v371 = vunpack.c.l.b16 %v76
  %v372 = vunpack.c.l.b16 %v77
  %v373 = vunpack.c.l.b16 %v78
  %v374 = vunpack.c.l.b16 %v79
  %v375 = vunpack.c.l.b16 %v80
  %v376 = vunpack.c.l.b16 %v81
  %v377 = vunpack.c.l.b16 %v82
  %v378 = vunpack.c.l.b16 %v83
  %v379 = vunpack.c.l.b16 %v84
  %v380 = vunpack.c.l.b16 %v85
  %v381 = vunpack.c.l.b16 %v86
  %v382 = vunpack.c.l.b16 %v87
  %v383 = vunpack.c.l.b16 %v88
  %v384 = vunpack.c.l.b16 %v89
  %v385 = vunpack.c.l.b16 %v90
  %v386 = vunpack.c.l.b16 %v91
  %v387 = vunpack.c.l.b16 %v92
  %v388 = vunpack.c.l.b16 %v93
  %v389 = vunpack.c.l.b16 %v94
  %v390 = vunpack.c.l.b16 %v95
  %v391 = vunpack.c.l.b16 %v96
  %v392 = vunpack.c.l.b16 %v97
  %v393 = vunpack.c.l.b16 %v98
  %v394 = vunpack.c.l.b16 %v99
  %v395 = vunpack.c.l.b16 %v100
  %v396 = vunpack.c.l.b16 %v101
  %v397 = vunpack.c.l.b16 %v102
  %v398 = vunpack.c.l.b16 %v103
  %v399 = vunpack.c.l.b16 %v104
  %v400 = vunpack.c.l.b16 %v105
  %v401 = vunpack.c.l.b16 %v106
  %v402 = vunpack.c.l.b16 %v107
  %v403 = vunpack.c.l.b16 %v108
  %v404 = vunpack.c.l.b16 %v109
  %v405 = vunpack.c.l.b16 %v110
  %v406 = vpack.c.b16 %v343, %v342
  %v407 = vpack.c.b16 %v345, %v344
  %v408 = vpack.c.b16 %v347, %v346
  %v409 = vpack.c.b16 %v349, %v348
  %v410 = vpack.c.b16 %v351, %v350
  %v411 = vpack.c.b16 %v353, %v352
  %v412 = vpack.c.b16 %v355, %v354
  %v413 = vpack.c.b16 %v357, %v356
  %v414 = vpack.c.b16 %v359, %v358
  %v415 = vpack.c.b16 %v361, %v360
  %v416 = vpack.c.b16 %v363, %v362
  %v417 = vpack.c.b16 %v365, %v364
  %v418 = vpack.c.b16 %v367, %v366
  %v419 = vpack.c.b16 %v369, %v368
  %v420 = vpack.c.b16 %v371, %v370
  %v421 = vpack.c.b16 %v373, %v372
  %v422 = vpack.c.b16 %v375, %v374
  %v423 = vpack.c.b16 %v377, %v376
  %v424 = vpack.c.b16 %v379, %v378
  %v425 = vpack.c.b16 %v381, %v380
  %v426 = vpack.c.b16 %v383, %v382
  %v427 = vpack.c.b16 %v385, %v384
  %v428 = vpack.c.b16 %v387, %v386
  %v429 = vpack.c.b16 %v389, %v388
  %v430 = vpack.c.b16 %v391, %v390
  %v431 = vpack.c.b16 %v393, %v392
  %v432 = vpack.c.b16 %v395, %v394
  %v433 = vpack.c.b16 %v397, %v396
  %v434 = vpack.c.b16 %v399, %v398
  %v435 = vpack.c.b16 %v401, %v400
  %v436 = vpack.c.b16 %v403, %v402
  %v437 = vpack.c.b16 %v405, %v404
  %470 = vmatprep.subr.bf16.mxu0 0
  %471 = vmatpush1.bf16.msra.mxu0 %v406
  %472 = vmatprep.subr.bf16.mxu0 0
  %473 = vmatpush1.bf16.msra.mxu0 %v407
  %474 = vmatprep.subr.bf16.mxu0 0
  %475 = vmatpush1.bf16.msra.mxu0 %v408
  %476 = vmatprep.subr.bf16.mxu0 0
  %477 = vmatpush1.bf16.msra.mxu0 %v409
  %478 = vmatprep.subr.bf16.mxu0 0
  %479 = vmatpush1.bf16.msra.mxu0 %v410
  %480 = vmatprep.subr.bf16.mxu0 0
  %481 = vmatpush1.bf16.msra.mxu0 %v411
  %482 = vmatprep.subr.bf16.mxu0 0
  %483 = vmatpush1.bf16.msra.mxu0 %v412
  %484 = vmatprep.subr.bf16.mxu0 0
  %485 = vmatpush1.bf16.msra.mxu0 %v413
  %486 = vmatprep.subr.bf16.mxu0 0
  %487 = vmatpush1.bf16.msra.mxu0 %v414
  %488 = vmatprep.subr.bf16.mxu0 0
  %489 = vmatpush1.bf16.msra.mxu0 %v415
  %490 = vmatprep.subr.bf16.mxu0 0
  %491 = vmatpush1.bf16.msra.mxu0 %v416
  %492 = vmatprep.subr.bf16.mxu0 0
  %493 = vmatpush1.bf16.msra.mxu0 %v417
  %494 = vmatprep.subr.bf16.mxu0 0
  %495 = vmatpush1.bf16.msra.mxu0 %v418
  %496 = vmatprep.subr.bf16.mxu0 0
  %497 = vmatpush1.bf16.msra.mxu0 %v419
  %498 = vmatprep.subr.bf16.mxu0 0
  %499 = vmatpush1.bf16.msra.mxu0 %v420
  %500 = vmatprep.subr.bf16.mxu0 0
  %501 = vmatpush1.bf16.msra.mxu0 %v421
  %502 = vmatprep.mubr.bf16.mxu0 %v215
  %503 = vmatmul.mubr.bf16.gmra.mrb[0].mxu0 %v214
  %v504 = vpop.f32.mrb[0].mxu0
  %v505 = vadd.f32 %v116, %v504
  %v506 = vpop.f32.mrb[0].mxu0
  %v507 = vpop.f32.mrb[0].mxu0
  %v508 = vadd.f32 %v116, %v507
  %v509 = vpop.f32.mrb[0].mxu0
  %510 = vmatprep.mubr.bf16.mxu0 %v219
  %511 = vmatmul.mubr.bf16.gmra.mrb[0].mxu0 %v218
  %v512 = vpop.f32.mrb[0].mxu0
  %v513 = vadd.f32 %v116, %v512
  %v514 = vpop.f32.mrb[0].mxu0
  %v515 = vpop.f32.mrb[0].mxu0
  %v516 = vadd.f32 %v116, %v515
  %v517 = vpop.f32.mrb[0].mxu0
  %518 = vmatprep.mubr.bf16.mxu0 %v223
  %519 = vmatmul.mubr.bf16.gmra.mrb[0].mxu0 %v222
  %v520 = vpop.f32.mrb[0].mxu0
  %v521 = vadd.f32 %v116, %v520
  %v522 = vpop.f32.mrb[0].mxu0
  %v523 = vpop.f32.mrb[0].mxu0
  %v524 = vadd.f32 %v116, %v523
  %v525 = vpop.f32.mrb[0].mxu0
  %526 = vmatprep.mubr.bf16.mxu0 %v227
  %527 = vmatmul.mubr.bf16.gmra.mrb[0].mxu0 %v226
  %v528 = vpop.f32.mrb[0].mxu0
  %v529 = vadd.f32 %v116, %v528
  %v530 = vpop.f32.mrb[0].mxu0
  %v531 = vpop.f32.mrb[0].mxu0
  %v532 = vadd.f32 %v116, %v531
  %v533 = vpop.f32.mrb[0].mxu0
  %534 = vmatprep.mubr.bf16.mxu0 %v231
  %535 = vmatmul.mubr.bf16.gmra.mrb[0].mxu0 %v230
  %v536 = vpop.f32.mrb[0].mxu0
  %v537 = vadd.f32 %v116, %v536
  %v538 = vpop.f32.mrb[0].mxu0
  %v539 = vpop.f32.mrb[0].mxu0
  %v540 = vadd.f32 %v116, %v539
  %v541 = vpop.f32.mrb[0].mxu0
  %542 = vmatprep.mubr.bf16.mxu0 %v235
  %543 = vmatmul.mubr.bf16.gmra.mrb[0].mxu0 %v234
  %v544 = vpop.f32.mrb[0].mxu0
  %v545 = vadd.f32 %v116, %v544
  %v546 = vpop.f32.mrb[0].mxu0
  %v547 = vpop.f32.mrb[0].mxu0
  %v548 = vadd.f32 %v116, %v547
  %v549 = vpop.f32.mrb[0].mxu0
  %550 = vmatprep.mubr.bf16.mxu0 %v239
  %551 = vmatmul.mubr.bf16.gmra.mrb[0].mxu0 %v238
  %v552 = vpop.f32.mrb[0].mxu0
  %v553 = vadd.f32 %v116, %v552
  %v554 = vpop.f32.mrb[0].mxu0
  %v555 = vpop.f32.mrb[0].mxu0
  %v556 = vadd.f32 %v116, %v555
  %v557 = vpop.f32.mrb[0].mxu0
  %558 = vmatprep.mubr.bf16.mxu0 %v243
  %559 = vmatmul.mubr.bf16.gmra.mrb[0].mxu0 %v242
  %v560 = vpop.f32.mrb[0].mxu0
  %v561 = vadd.f32 %v116, %v560
  %v562 = vpop.f32.mrb[0].mxu0
  %v563 = vpop.f32.mrb[0].mxu0
  %v564 = vadd.f32 %v116, %v563
  %v565 = vpop.f32.mrb[0].mxu0
  %566 = vdwg.mxu0
  %567 = vmatprep.subr.bf16.mxu0 0
  %568 = vmatpush1.bf16.msra.mxu0 %v422
  %569 = vmatprep.subr.bf16.mxu0 0
  %570 = vmatpush1.bf16.msra.mxu0 %v423
  %571 = vmatprep.subr.bf16.mxu0 0
  %572 = vmatpush1.bf16.msra.mxu0 %v424
  %573 = vmatprep.subr.bf16.mxu0 0
  %574 = vmatpush1.bf16.msra.mxu0 %v425
  %575 = vmatprep.subr.bf16.mxu0 0
  %576 = vmatpush1.bf16.msra.mxu0 %v426
  %577 = vmatprep.subr.bf16.mxu0 0
  %578 = vmatpush1.bf16.msra.mxu0 %v427
  %579 = vmatprep.subr.bf16.mxu0 0
  %580 = vmatpush1.bf16.msra.mxu0 %v428
  %581 = vmatprep.subr.bf16.mxu0 0
  %582 = vmatpush1.bf16.msra.mxu0 %v429
  %583 = vmatprep.subr.bf16.mxu0 0
  %584 = vmatpush1.bf16.msra.mxu0 %v430
  %585 = vmatprep.subr.bf16.mxu0 0
  %586 = vmatpush1.bf16.msra.mxu0 %v431
  %587 = vmatprep.subr.bf16.mxu0 0
  %588 = vmatpush1.bf16.msra.mxu0 %v432
  %589 = vmatprep.subr.bf16.mxu0 0
  %590 = vmatpush1.bf16.msra.mxu0 %v433
  %591 = vmatprep.subr.bf16.mxu0 0
  %592 = vmatpush1.bf16.msra.mxu0 %v434
  %593 = vmatprep.subr.bf16.mxu0 0
  %594 = vmatpush1.bf16.msra.mxu0 %v435
  %595 = vmatprep.subr.bf16.mxu0 0
  %596 = vmatpush1.bf16.msra.mxu0 %v436
  %597 = vmatprep.subr.bf16.mxu0 0
  %598 = vmatpush1.bf16.msra.mxu0 %v437
  %599 = vmatprep.mubr.bf16.mxu0 %v217
  %600 = vmatmul.mubr.bf16.gmra.mrb[0].mxu0 %v216
  %v601 = vpop.f32.mrb[0].mxu0
  %v602 = vadd.f32 %v505, %v601
  %v603 = vpop.f32.mrb[0].mxu0
  %v604 = vpop.f32.mrb[0].mxu0
  %v605 = vadd.f32 %v508, %v604
  %v606 = vpop.f32.mrb[0].mxu0
  %607 = vmatprep.mubr.bf16.mxu0 %v221
  %608 = vmatmul.mubr.bf16.gmra.mrb[0].mxu0 %v220
  %v609 = vpop.f32.mrb[0].mxu0
  %v610 = vadd.f32 %v513, %v609
  %v611 = vpop.f32.mrb[0].mxu0
  %v612 = vpop.f32.mrb[0].mxu0
  %v613 = vadd.f32 %v516, %v612
  %v614 = vpop.f32.mrb[0].mxu0
  %615 = vmatprep.mubr.bf16.mxu0 %v225
  %616 = vmatmul.mubr.bf16.gmra.mrb[0].mxu0 %v224
  %v617 = vpop.f32.mrb[0].mxu0
  %v618 = vadd.f32 %v521, %v617
  %v619 = vpop.f32.mrb[0].mxu0
  %v620 = vpop.f32.mrb[0].mxu0
  %v621 = vadd.f32 %v524, %v620
  %v622 = vpop.f32.mrb[0].mxu0
  %623 = vmatprep.mubr.bf16.mxu0 %v229
  %624 = vmatmul.mubr.bf16.gmra.mrb[0].mxu0 %v228
  %v625 = vpop.f32.mrb[0].mxu0
  %v626 = vadd.f32 %v529, %v625
  %v627 = vpop.f32.mrb[0].mxu0
  %v628 = vpop.f32.mrb[0].mxu0
  %v629 = vadd.f32 %v532, %v628
  %v630 = vpop.f32.mrb[0].mxu0
  %631 = vmatprep.mubr.bf16.mxu0 %v233
  %632 = vmatmul.mubr.bf16.gmra.mrb[0].mxu0 %v232
  %v633 = vpop.f32.mrb[0].mxu0
  %v634 = vadd.f32 %v537, %v633
  %v635 = vpop.f32.mrb[0].mxu0
  %v636 = vpop.f32.mrb[0].mxu0
  %v637 = vadd.f32 %v540, %v636
  %v638 = vpop.f32.mrb[0].mxu0
  %639 = vmatprep.mubr.bf16.mxu0 %v237
  %640 = vmatmul.mubr.bf16.gmra.mrb[0].mxu0 %v236
  %v641 = vpop.f32.mrb[0].mxu0
  %v642 = vadd.f32 %v545, %v641
  %v643 = vpop.f32.mrb[0].mxu0
  %v644 = vpop.f32.mrb[0].mxu0
  %v645 = vadd.f32 %v548, %v644
  %v646 = vpop.f32.mrb[0].mxu0
  %647 = vmatprep.mubr.bf16.mxu0 %v241
  %648 = vmatmul.mubr.bf16.gmra.mrb[0].mxu0 %v240
  %v649 = vpop.f32.mrb[0].mxu0
  %v650 = vadd.f32 %v553, %v649
  %v651 = vpop.f32.mrb[0].mxu0
  %v652 = vpop.f32.mrb[0].mxu0
  %v653 = vadd.f32 %v556, %v652
  %v654 = vpop.f32.mrb[0].mxu0
  %655 = vmatprep.mubr.bf16.mxu0 %v245
  %656 = vmatmul.mubr.bf16.gmra.mrb[0].mxu0 %v244
  %v657 = vpop.f32.mrb[0].mxu0
  %v658 = vadd.f32 %v561, %v657
  %v659 = vpop.f32.mrb[0].mxu0
  %v660 = vpop.f32.mrb[0].mxu0
  %v661 = vadd.f32 %v564, %v660
  %v662 = vpop.f32.mrb[0].mxu0
  %663 = vdwg.mxu0
  %v664 = vmax.f32 %v602, 0.0
  %v665 = vmax.f32 %v605, 0.0
  %v666 = vmax.f32 %v610, 0.0
  %v667 = vmax.f32 %v613, 0.0
  %v668 = vmax.f32 %v618, 0.0
  %v669 = vmax.f32 %v621, 0.0
  %v670 = vmax.f32 %v626, 0.0
  %v671 = vmax.f32 %v629, 0.0
  %v672 = vmax.f32 %v634, 0.0
  %v673 = vmax.f32 %v637, 0.0
  %v674 = vmax.f32 %v642, 0.0
  %v675 = vmax.f32 %v645, 0.0
  %v676 = vmax.f32 %v650, 0.0
  %v677 = vmax.f32 %v653, 0.0
  %v678 = vmax.f32 %v658, 0.0
  %v679 = vmax.f32 %v661, 0.0
  %vm680 = vcmask 261120
  %681 = vst.msk [vmem:[%s3] sm:$0xff] %vm680, %v664
  %682 = vst.msk [vmem:[%s3 + $0x8] sm:$0xff] %vm680, %v665
  %683 = vst.msk [vmem:[%s3 + $0x10] sm:$0xff] %vm680, %v666
  %684 = vst.msk [vmem:[%s3 + $0x18] sm:$0xff] %vm680, %v667
  %685 = vst.msk [vmem:[%s3 + $0x20] sm:$0xff] %vm680, %v668
  %686 = vst.msk [vmem:[%s3 + $0x28] sm:$0xff] %vm680, %v669
  %687 = vst.msk [vmem:[%s3 + $0x30] sm:$0xff] %vm680, %v670
  %688 = vst.msk [vmem:[%s3 + $0x38] sm:$0xff] %vm680, %v671
  %689 = vst.msk [vmem:[%s3 + $0x40] sm:$0xff] %vm680, %v672
  %690 = vst.msk [vmem:[%s3 + $0x48] sm:$0xff] %vm680, %v673
  %691 = vst.msk [vmem:[%s3 + $0x50] sm:$0xff] %vm680, %v674
  %692 = vst.msk [vmem:[%s3 + $0x58] sm:$0xff] %vm680, %v675
  %693 = vst.msk [vmem:[%s3 + $0x60] sm:$0xff] %vm680, %v676
  %694 = vst.msk [vmem:[%s3 + $0x68] sm:$0xff] %vm680, %v677
  %695 = vst.msk [vmem:[%s3 + $0x70] sm:$0xff] %vm680, %v678
  %696 = vst.msk [vmem:[%s3 + $0x78] sm:$0xff] %vm680, %v679
  // Predicated region
  $region14: #{vqvae_forward.10} parent=0 // pred_check
    _
  $region15: #{vqvae_forward.10} parent=0 // pred_check_branch
    %698 = sbr.rel (0) target = $region17
  $region16: #{vqvae_forward.10} parent=0 // pred_region
    _
  $region17: #{vqvae_forward.10} parent=0 // pred_fallthru
    _
  // Predicated region
  $region18: #{vqvae_forward.10} parent=0 // pred_check
    _
  $region19: #{vqvae_forward.10} parent=0 // pred_check_branch
    %700 = sbr.rel (0) target = $region21
  $region20: #{vqvae_forward.10} parent=0 // pred_region
    _
  $region21: #{vqvae_forward.10} parent=0 // pred_fallthru
    _

// kernel: vqvae_forward.11
$region0: #{vqvae_forward.11}
  #allocation0 [shape = 'u32[]', space=smem, size = 0x4, offset = 0x4, fixed_abs, tag = 'smem constant byte address 0x4 - core index']
  #allocation1 [shape = 'u32[144,128]{1,0:T(1,128)}', space=vmem, size = 0x12000, scoped, tag = 'internal scratch']
  %s0 = inlined_call_operand.vmem [shape: bf16[128,288], index: 0, kind: input, shape index: {}]
  %s1 = inlined_call_operand.vmem [shape: f32[128,32], index: 1, kind: input, shape index: {}]
  %s2 = inlined_call_operand.vmem [shape: bf16[288,32], index: 2, kind: input, shape index: {}]
  %s3 = inlined_call_operand.vmem [shape: f32[1,32], index: 3, kind: input, shape index: {}]
  %s4 = inlined_call_operand.vmem [shape: bf16[32,32], index: 4, kind: input, shape index: {}]
  %s5 = inlined_call_operand.vmem [shape: f32[1,32], index: 5, kind: input, shape index: {}]
  %s6 = inlined_call_operand.vmem [shape: f32[128,32], index: 6, kind: output, shape index: {}]
  %s7 = sld [smem:[#allocation0]]
  $region34: #{vqvae_forward.11} parent=0
    _
  %s9 = ssub.s32 1, %s7
  %s10 = scalar_select 0, %s9, %s7
  // Predicated region
  $region2: #{vqvae_forward.11} parent=0 // pred_check
    _
  $region3: #{vqvae_forward.11} parent=0 // pred_check_branch
    %12 = sbr.rel (0) target = $region5
  $region4: #{vqvae_forward.11} parent=0 // pred_region
    _
  $region5: #{vqvae_forward.11} parent=0 // pred_fallthru
    _
  // Predicated region
  $region6: #{vqvae_forward.11} parent=0 // pred_check
    _
  $region7: #{vqvae_forward.11} parent=0 // pred_check_branch
    %14 = sbr.rel (0) target = $region9
  $region8: #{vqvae_forward.11} parent=0 // pred_region
    _
  $region9: #{vqvae_forward.11} parent=0 // pred_fallthru
    _
  // Predicated region
  $region10: #{vqvae_forward.11} parent=0 // pred_check
    _
  $region11: #{vqvae_forward.11} parent=0 // pred_check_branch
    %16 = sbr.rel (0) target = $region13
  $region12: #{vqvae_forward.11} parent=0 // pred_region
    _
  $region13: #{vqvae_forward.11} parent=0 // pred_fallthru
    _
  // Predicated region
  $region14: #{vqvae_forward.11} parent=0 // pred_check
    _
  $region15: #{vqvae_forward.11} parent=0 // pred_check_branch
    %18 = sbr.rel (0) target = $region17
  $region16: #{vqvae_forward.11} parent=0 // pred_region
    _
  $region17: #{vqvae_forward.11} parent=0 // pred_fallthru
    _
  // Predicated region
  $region18: #{vqvae_forward.11} parent=0 // pred_check
    _
  $region19: #{vqvae_forward.11} parent=0 // pred_check_branch
    %20 = sbr.rel (0) target = $region21
  $region20: #{vqvae_forward.11} parent=0 // pred_region
    _
  $region21: #{vqvae_forward.11} parent=0 // pred_fallthru
    _
  // Predicated region
  $region22: #{vqvae_forward.11} parent=0 // pred_check
    _
  $region23: #{vqvae_forward.11} parent=0 // pred_check_branch
    %22 = sbr.rel (0) target = $region25
  $region24: #{vqvae_forward.11} parent=0 // pred_region
    _
  $region25: #{vqvae_forward.11} parent=0 // pred_fallthru
    _
  %v24 = vld [vmem:[%s0] sm:$0xff]
  %v25 = vld [vmem:[%s0 + $0x8] sm:$0xf]
  %v26 = vld [vmem:[%s0 + $0xc] sm:$0xff]
  %v27 = vld [vmem:[%s0 + $0x14] sm:$0xf]
  %v28 = vld [vmem:[%s0 + $0x18] sm:$0xff]
  %v29 = vld [vmem:[%s0 + $0x20] sm:$0xf]
  %v30 = vld [vmem:[%s0 + $0x24] sm:$0xff]
  %v31 = vld [vmem:[%s0 + $0x2c] sm:$0xf]
  %v32 = vld [vmem:[%s0 + $0x30] sm:$0xff]
  %v33 = vld [vmem:[%s0 + $0x38] sm:$0xf]
  %v34 = vld [vmem:[%s0 + $0x3c] sm:$0xff]
  %v35 = vld [vmem:[%s0 + $0x44] sm:$0xf]
  %v36 = vld [vmem:[%s0 + $0x48] sm:$0xff]
  %v37 = vld [vmem:[%s0 + $0x50] sm:$0xf]
  %v38 = vld [vmem:[%s0 + $0x54] sm:$0xff]
  %v39 = vld [vmem:[%s0 + $0x5c] sm:$0xf]
  %v40 = vld [vmem:[%s0 + $0x60] sm:$0xff]
  %v41 = vld [vmem:[%s0 + $0x68] sm:$0xf]
  %v42 = vld [vmem:[%s0 + $0x6c] sm:$0xff]
  %v43 = vld [vmem:[%s0 + $0x74] sm:$0xf]
  %v44 = vld [vmem:[%s0 + $0x78] sm:$0xff]
  %v45 = vld [vmem:[%s0 + $0x80] sm:$0xf]
  %v46 = vld [vmem:[%s0 + $0x84] sm:$0xff]
  %v47 = vld [vmem:[%s0 + $0x8c] sm:$0xf]
  %v48 = vld [vmem:[%s0 + $0x90] sm:$0xff]
  %v49 = vld [vmem:[%s0 + $0x98] sm:$0xf]
  %v50 = vld [vmem:[%s0 + $0x9c] sm:$0xff]
  %v51 = vld [vmem:[%s0 + $0xa4] sm:$0xf]
  %v52 = vld [vmem:[%s0 + $0xa8] sm:$0xff]
  %v53 = vld [vmem:[%s0 + $0xb0] sm:$0xf]
  %v54 = vld [vmem:[%s0 + $0xb4] sm:$0xff]
  %v55 = vld [vmem:[%s0 + $0xbc] sm:$0xf]
  %v56 = vld [vmem:[%s2] sm:$0xf]
  %v57 = vld [vmem:[%s2 + $0x4] sm:$0xf]
  %v58 = vld [vmem:[%s2 + $0x8] sm:$0xf]
  %v59 = vld [vmem:[%s2 + $0xc] sm:$0xf]
  %v60 = vld [vmem:[%s2 + $0x10] sm:$0xf]
  %v61 = vld [vmem:[%s2 + $0x14] sm:$0xf]
  %v62 = vld [vmem:[%s2 + $0x18] sm:$0xf]
  %v63 = vld [vmem:[%s2 + $0x1c] sm:$0xf]
  %v64 = vld [vmem:[%s2 + $0x20] sm:$0xf]
  %v65 = vld [vmem:[%s2 + $0x24] sm:$0xf]
  %v66 = vld [vmem:[%s2 + $0x28] sm:$0xf]
  %v67 = vld [vmem:[%s2 + $0x2c] sm:$0xf]
  %v68 = vld [vmem:[%s2 + $0x30] sm:$0xf]
  %v69 = vld [vmem:[%s2 + $0x34] sm:$0xf]
  %v70 = vld [vmem:[%s2 + $0x38] sm:$0xf]
  %v71 = vld [vmem:[%s2 + $0x3c] sm:$0xf]
  %v72 = vld [vmem:[%s2 + $0x40] sm:$0xf]
  %v73 = vld [vmem:[%s2 + $0x44] sm:$0xf]
  %v74 = vld [vmem:[%s2 + $0x48] sm:$0xf]
  %v75 = vld [vmem:[%s2 + $0x4c] sm:$0xf]
  %v76 = vld [vmem:[%s2 + $0x50] sm:$0xf]
  %v77 = vld [vmem:[%s2 + $0x54] sm:$0xf]
  %v78 = vld [vmem:[%s2 + $0x58] sm:$0xf]
  %v79 = vld [vmem:[%s2 + $0x5c] sm:$0xf]
  %v80 = vld [vmem:[%s2 + $0x60] sm:$0xf]
  %v81 = vld [vmem:[%s2 + $0x64] sm:$0xf]
  %v82 = vld [vmem:[%s2 + $0x68] sm:$0xf]
  %v83 = vld [vmem:[%s2 + $0x6c] sm:$0xf]
  %v84 = vld [vmem:[%s2 + $0x70] sm:$0xf]
  %v85 = vld [vmem:[%s2 + $0x74] sm:$0xf]
  %v86 = vld [vmem:[%s2 + $0x78] sm:$0xf]
  %v87 = vld [vmem:[%s2 + $0x7c] sm:$0xf]
  %v88 = vld [vmem:[%s2 + $0x80] sm:$0xf]
  %v89 = vld [vmem:[%s2 + $0x84] sm:$0xf]
  %v90 = vld [vmem:[%s2 + $0x88] sm:$0xf]
  %v91 = vld [vmem:[%s2 + $0x8c] sm:$0xf]
  %v92 = vld [vmem:[%s3] sm:$0x1]
  %v94 = vlaneseq
  %v95 = vshrl.u32 %v94, 7
  %v96 = vsub.s32 0, %v95
  %v97 = vrot.slane %v92, %v96
  %v131 = vunpack.c.l.b16 %v24
  %v132 = vunpack.c.h.b16 %v24
  %v133 = vunpack.c.l.b16 %v25
  %v134 = vunpack.c.l.b16 %v26
  %v135 = vunpack.c.h.b16 %v26
  %v136 = vunpack.c.l.b16 %v27
  %v137 = vunpack.c.l.b16 %v28
  %v138 = vunpack.c.h.b16 %v28
  %v139 = vunpack.c.l.b16 %v29
  %v140 = vunpack.c.l.b16 %v30
  %v141 = vunpack.c.h.b16 %v30
  %v142 = vunpack.c.l.b16 %v31
  %v143 = vunpack.c.l.b16 %v32
  %v144 = vunpack.c.h.b16 %v32
  %v145 = vunpack.c.l.b16 %v33
  %v146 = vunpack.c.l.b16 %v34
  %v147 = vunpack.c.h.b16 %v34
  %v148 = vunpack.c.l.b16 %v35
  %v149 = vunpack.c.l.b16 %v36
  %v150 = vunpack.c.h.b16 %v36
  %v151 = vunpack.c.l.b16 %v37
  %v152 = vunpack.c.l.b16 %v38
  %v153 = vunpack.c.h.b16 %v38
  %v154 = vunpack.c.l.b16 %v39
  %v155 = vunpack.c.l.b16 %v40
  %v156 = vunpack.c.h.b16 %v40
  %v157 = vunpack.c.l.b16 %v41
  %v158 = vunpack.c.l.b16 %v42
  %v159 = vunpack.c.h.b16 %v42
  %v160 = vunpack.c.l.b16 %v43
  %v161 = vunpack.c.l.b16 %v44
  %v162 = vunpack.c.h.b16 %v44
  %v163 = vunpack.c.l.b16 %v45
  %v164 = vunpack.c.l.b16 %v46
  %v165 = vunpack.c.h.b16 %v46
  %v166 = vunpack.c.l.b16 %v47
  %v167 = vunpack.c.l.b16 %v48
  %v168 = vunpack.c.h.b16 %v48
  %v169 = vunpack.c.l.b16 %v49
  %v170 = vunpack.c.l.b16 %v50
  %v171 = vunpack.c.h.b16 %v50
  %v172 = vunpack.c.l.b16 %v51
  %v173 = vunpack.c.l.b16 %v52
  %v174 = vunpack.c.h.b16 %v52
  %v175 = vunpack.c.l.b16 %v53
  %v176 = vunpack.c.l.b16 %v54
  %v177 = vunpack.c.h.b16 %v54
  %v178 = vunpack.c.l.b16 %v55
  %v179 = vpack.c.b16 %v134, %v131
  %v180 = vpack.c.b16 %v135, %v132
  %v181 = vpack.c.b16 %v136, %v133
  %v182 = vpack.c.b16 %v140, %v137
  %v183 = vpack.c.b16 %v141, %v138
  %v184 = vpack.c.b16 %v142, %v139
  %v185 = vpack.c.b16 %v146, %v143
  %v186 = vpack.c.b16 %v147, %v144
  %v187 = vpack.c.b16 %v148, %v145
  %v188 = vpack.c.b16 %v152, %v149
  %v189 = vpack.c.b16 %v153, %v150
  %v190 = vpack.c.b16 %v154, %v151
  %v191 = vpack.c.b16 %v158, %v155
  %v192 = vpack.c.b16 %v159, %v156
  %v193 = vpack.c.b16 %v160, %v157
  %v194 = vpack.c.b16 %v164, %v161
  %v195 = vpack.c.b16 %v165, %v162
  %v196 = vpack.c.b16 %v166, %v163
  %v197 = vpack.c.b16 %v170, %v167
  %v198 = vpack.c.b16 %v171, %v168
  %v199 = vpack.c.b16 %v172, %v169
  %v200 = vpack.c.b16 %v176, %v173
  %v201 = vpack.c.b16 %v177, %v174
  %v202 = vpack.c.b16 %v178, %v175
  %v255 = vunpack.c.l.b16 %v56
  %v256 = vunpack.c.l.b16 %v57
  %v257 = vunpack.c.l.b16 %v58
  %v258 = vunpack.c.l.b16 %v59
  %v259 = vunpack.c.l.b16 %v60
  %v260 = vunpack.c.l.b16 %v61
  %v261 = vunpack.c.l.b16 %v62
  %v262 = vunpack.c.l.b16 %v63
  %v263 = vunpack.c.l.b16 %v64
  %v264 = vunpack.c.l.b16 %v65
  %v265 = vunpack.c.l.b16 %v66
  %v266 = vunpack.c.l.b16 %v67
  %v267 = vunpack.c.l.b16 %v68
  %v268 = vunpack.c.l.b16 %v69
  %v269 = vunpack.c.l.b16 %v70
  %v270 = vunpack.c.l.b16 %v71
  %v271 = vunpack.c.l.b16 %v72
  %v272 = vunpack.c.l.b16 %v73
  %v273 = vunpack.c.l.b16 %v74
  %v274 = vunpack.c.l.b16 %v75
  %v275 = vunpack.c.l.b16 %v76
  %v276 = vunpack.c.l.b16 %v77
  %v277 = vunpack.c.l.b16 %v78
  %v278 = vunpack.c.l.b16 %v79
  %v279 = vunpack.c.l.b16 %v80
  %v280 = vunpack.c.l.b16 %v81
  %v281 = vunpack.c.l.b16 %v82
  %v282 = vunpack.c.l.b16 %v83
  %v283 = vunpack.c.l.b16 %v84
  %v284 = vunpack.c.l.b16 %v85
  %v285 = vunpack.c.l.b16 %v86
  %v286 = vunpack.c.l.b16 %v87
  %v287 = vunpack.c.l.b16 %v88
  %v288 = vunpack.c.l.b16 %v89
  %v289 = vunpack.c.l.b16 %v90
  %v290 = vunpack.c.l.b16 %v91
  %v291 = vpack.c.b16 %v256, %v255
  %v292 = vpack.c.b16 %v258, %v257
  %v293 = vpack.c.b16 %v260, %v259
  %v294 = vpack.c.b16 %v262, %v261
  %v295 = vpack.c.b16 %v264, %v263
  %v296 = vpack.c.b16 %v266, %v265
  %v297 = vpack.c.b16 %v268, %v267
  %v298 = vpack.c.b16 %v270, %v269
  %v299 = vpack.c.b16 %v272, %v271
  %v300 = vpack.c.b16 %v274, %v273
  %v301 = vpack.c.b16 %v276, %v275
  %v302 = vpack.c.b16 %v278, %v277
  %v303 = vpack.c.b16 %v280, %v279
  %v304 = vpack.c.b16 %v282, %v281
  %v305 = vpack.c.b16 %v284, %v283
  %v306 = vpack.c.b16 %v286, %v285
  %v307 = vpack.c.b16 %v288, %v287
  %v308 = vpack.c.b16 %v290, %v289
  %vm327 = vcmask 261120
  %v329 = vsel %vm327, %v181, 0
  %v332 = vsel %vm327, %v184, 0
  %v335 = vsel %vm327, %v187, 0
  %v338 = vsel %vm327, %v190, 0
  %v341 = vsel %vm327, %v193, 0
  %v344 = vsel %vm327, %v196, 0
  %v347 = vsel %vm327, %v199, 0
  %v350 = vsel %vm327, %v202, 0
  %352 = vmatprep.subr.bf16.mxu0 0
  %353 = vmatpush1.bf16.msra.mxu0 %v291
  %354 = vmatprep.subr.bf16.mxu0 0
  %355 = vmatpush1.bf16.msra.mxu0 %v292
  %356 = vmatprep.subr.bf16.mxu0 0
  %357 = vmatpush1.bf16.msra.mxu0 %v293
  %358 = vmatprep.subr.bf16.mxu0 0
  %359 = vmatpush1.bf16.msra.mxu0 %v294
  %360 = vmatprep.subr.bf16.mxu0 0
  %361 = vmatpush1.bf16.msra.mxu0 %v295
  %362 = vmatprep.subr.bf16.mxu0 0
  %363 = vmatpush1.bf16.msra.mxu0 %v296
  %364 = vmatprep.subr.bf16.mxu0 0
  %365 = vmatpush1.bf16.msra.mxu0 %v297
  %366 = vmatprep.subr.bf16.mxu0 0
  %367 = vmatpush1.bf16.msra.mxu0 %v298
  %368 = vmatprep.subr.bf16.mxu0 0
  %369 = vmatpush1.bf16.msra.mxu0 %v299
  %370 = vmatprep.subr.bf16.mxu0 0
  %371 = vmatpush1.bf16.msra.mxu0 %v300
  %372 = vmatprep.subr.bf16.mxu0 0
  %373 = vmatpush1.bf16.msra.mxu0 %v301
  %374 = vmatprep.subr.bf16.mxu0 0
  %375 = vmatpush1.bf16.msra.mxu0 %v302
  %376 = vmatprep.subr.bf16.mxu0 0
  %377 = vmatpush1.bf16.msra.mxu0 %v303
  %378 = vmatprep.subr.bf16.mxu0 0
  %379 = vmatpush1.bf16.msra.mxu0 %v304
  %380 = vmatprep.subr.bf16.mxu0 0
  %381 = vmatpush1.bf16.msra.mxu0 %v305
  %382 = vmatprep.subr.bf16.mxu0 0
  %383 = vmatpush1.bf16.msra.mxu0 %v306
  %384 = vmatprep.mubr.bf16.mxu0 %v180
  %385 = vmatmul.mubr.bf16.gmra.mrb[0].mxu0 %v179
  %v386 = vpop.f32.mrb[0].mxu0
  %v387 = vadd.f32 %v97, %v386
  %v388 = vpop.f32.mrb[0].mxu0
  %v389 = vpop.f32.mrb[0].mxu0
  %v390 = vadd.f32 %v97, %v389
  %v391 = vpop.f32.mrb[0].mxu0
  %392 = vmatprep.mubr.bf16.mxu0 %v183
  %393 = vmatmul.mubr.bf16.gmra.mrb[0].mxu0 %v182
  %v394 = vpop.f32.mrb[0].mxu0
  %v395 = vadd.f32 %v97, %v394
  %v396 = vpop.f32.mrb[0].mxu0
  %v397 = vpop.f32.mrb[0].mxu0
  %v398 = vadd.f32 %v97, %v397
  %v399 = vpop.f32.mrb[0].mxu0
  %400 = vmatprep.mubr.bf16.mxu0 %v186
  %401 = vmatmul.mubr.bf16.gmra.mrb[0].mxu0 %v185
  %v402 = vpop.f32.mrb[0].mxu0
  %v403 = vadd.f32 %v97, %v402
  %v404 = vpop.f32.mrb[0].mxu0
  %v405 = vpop.f32.mrb[0].mxu0
  %v406 = vadd.f32 %v97, %v405
  %v407 = vpop.f32.mrb[0].mxu0
  %408 = vmatprep.mubr.bf16.mxu0 %v189
  %409 = vmatmul.mubr.bf16.gmra.mrb[0].mxu0 %v188
  %v410 = vpop.f32.mrb[0].mxu0
  %v411 = vadd.f32 %v97, %v410
  %v412 = vpop.f32.mrb[0].mxu0
  %v413 = vpop.f32.mrb[0].mxu0
  %v414 = vadd.f32 %v97, %v413
  %v415 = vpop.f32.mrb[0].mxu0
  %416 = vmatprep.mubr.bf16.mxu0 %v192
  %417 = vmatmul.mubr.bf16.gmra.mrb[0].mxu0 %v191
  %v418 = vpop.f32.mrb[0].mxu0
  %v419 = vadd.f32 %v97, %v418
  %v420 = vpop.f32.mrb[0].mxu0
  %v421 = vpop.f32.mrb[0].mxu0
  %v422 = vadd.f32 %v97, %v421
  %v423 = vpop.f32.mrb[0].mxu0
  %424 = vmatprep.mubr.bf16.mxu0 %v195
  %425 = vmatmul.mubr.bf16.gmra.mrb[0].mxu0 %v194
  %v426 = vpop.f32.mrb[0].mxu0
  %v427 = vadd.f32 %v97, %v426
  %v428 = vpop.f32.mrb[0].mxu0
  %v429 = vpop.f32.mrb[0].mxu0
  %v430 = vadd.f32 %v97, %v429
  %v431 = vpop.f32.mrb[0].mxu0
  %432 = vmatprep.mubr.bf16.mxu0 %v198
  %433 = vmatmul.mubr.bf16.gmra.mrb[0].mxu0 %v197
  %v434 = vpop.f32.mrb[0].mxu0
  %v435 = vadd.f32 %v97, %v434
  %v436 = vpop.f32.mrb[0].mxu0
  %v437 = vpop.f32.mrb[0].mxu0
  %v438 = vadd.f32 %v97, %v437
  %v439 = vpop.f32.mrb[0].mxu0
  %440 = vmatprep.mubr.bf16.mxu0 %v201
  %441 = vmatmul.mubr.bf16.gmra.mrb[0].mxu0 %v200
  %v442 = vpop.f32.mrb[0].mxu0
  %v443 = vadd.f32 %v97, %v442
  %v444 = vpop.f32.mrb[0].mxu0
  %v445 = vpop.f32.mrb[0].mxu0
  %v446 = vadd.f32 %v97, %v445
  %v447 = vpop.f32.mrb[0].mxu0
  %448 = vdwg.mxu0
  %449 = vmatprep.subr.bf16.mxu0 0
  %450 = vmatpush1.bf16.msra.mxu0 %v307
  %451 = vmatprep.subr.bf16.mxu0 0
  %452 = vmatpush1.bf16.msra.mxu0 %v308
  %453 = vmatprep.subr.bf16.mxu0 0
  %454 = vmatpush1.bf16.msra.mxu0 0
  %455 = vmatprep.subr.bf16.mxu0 0
  %456 = vmatpush1.bf16.msra.mxu0 0
  %457 = vmatprep.subr.bf16.mxu0 0
  %458 = vmatpush1.bf16.msra.mxu0 0
  %459 = vmatprep.subr.bf16.mxu0 0
  %460 = vmatpush1.bf16.msra.mxu0 0
  %461 = vmatprep.subr.bf16.mxu0 0
  %462 = vmatpush1.bf16.msra.mxu0 0
  %463 = vmatprep.subr.bf16.mxu0 0
  %464 = vmatpush1.bf16.msra.mxu0 0
  %465 = vmatprep.subr.bf16.mxu0 0
  %466 = vmatpush1.bf16.msra.mxu0 0
  %467 = vmatprep.subr.bf16.mxu0 0
  %468 = vmatpush1.bf16.msra.mxu0 0
  %469 = vmatprep.subr.bf16.mxu0 0
  %470 = vmatpush1.bf16.msra.mxu0 0
  %471 = vmatprep.subr.bf16.mxu0 0
  %472 = vmatpush1.bf16.msra.mxu0 0
  %473 = vmatprep.subr.bf16.mxu0 0
  %474 = vmatpush1.bf16.msra.mxu0 0
  %475 = vmatprep.subr.bf16.mxu0 0
  %476 = vmatpush1.bf16.msra.mxu0 0
  %477 = vmatprep.subr.bf16.mxu0 0
  %478 = vmatpush1.bf16.msra.mxu0 0
  %479 = vmatprep.subr.bf16.mxu0 0
  %480 = vmatpush1.bf16.msra.mxu0 0
  %481 = vmatprep.mubr.bf16.mxu0 0
  %482 = vmatmul.mubr.bf16.gmra.mrb[0].mxu0 %v329
  %v483 = vpop.f32.mrb[0].mxu0
  %v484 = vadd.f32 %v387, %v483
  %v485 = vpop.f32.mrb[0].mxu0
  %v486 = vpop.f32.mrb[0].mxu0
  %v487 = vadd.f32 %v390, %v486
  %v488 = vpop.f32.mrb[0].mxu0
  %489 = vmatprep.mubr.bf16.mxu0 0
  %490 = vmatmul.mubr.bf16.gmra.mrb[0].mxu0 %v332
  %v491 = vpop.f32.mrb[0].mxu0
  %v492 = vadd.f32 %v395, %v491
  %v493 = vpop.f32.mrb[0].mxu0
  %v494 = vpop.f32.mrb[0].mxu0
  %v495 = vadd.f32 %v398, %v494
  %v496 = vpop.f32.mrb[0].mxu0
  %497 = vmatprep.mubr.bf16.mxu0 0
  %498 = vmatmul.mubr.bf16.gmra.mrb[0].mxu0 %v335
  %v499 = vpop.f32.mrb[0].mxu0
  %v500 = vadd.f32 %v403, %v499
  %v501 = vpop.f32.mrb[0].mxu0
  %v502 = vpop.f32.mrb[0].mxu0
  %v503 = vadd.f32 %v406, %v502
  %v504 = vpop.f32.mrb[0].mxu0
  %505 = vmatprep.mubr.bf16.mxu0 0
  %506 = vmatmul.mubr.bf16.gmra.mrb[0].mxu0 %v338
  %v507 = vpop.f32.mrb[0].mxu0
  %v508 = vadd.f32 %v411, %v507
  %v509 = vpop.f32.mrb[0].mxu0
  %v510 = vpop.f32.mrb[0].mxu0
  %v511 = vadd.f32 %v414, %v510
  %v512 = vpop.f32.mrb[0].mxu0
  %513 = vmatprep.mubr.bf16.mxu0 0
  %514 = vmatmul.mubr.bf16.gmra.mrb[0].mxu0 %v341
  %v515 = vpop.f32.mrb[0].mxu0
  %v516 = vadd.f32 %v419, %v515
  %v517 = vpop.f32.mrb[0].mxu0
  %v518 = vpop.f32.mrb[0].mxu0
  %v519 = vadd.f32 %v422, %v518
  %v520 = vpop.f32.mrb[0].mxu0
  %521 = vmatprep.mubr.bf16.mxu0 0
  %522 = vmatmul.mubr.bf16.gmra.mrb[0].mxu0 %v344
  %v523 = vpop.f32.mrb[0].mxu0
  %v524 = vadd.f32 %v427, %v523
  %v525 = vpop.f32.mrb[0].mxu0
  %v526 = vpop.f32.mrb[0].mxu0
  %v527 = vadd.f32 %v430, %v526
  %v528 = vpop.f32.mrb[0].mxu0
  %529 = vmatprep.mubr.bf16.mxu0 0
  %530 = vmatmul.mubr.bf16.gmra.mrb[0].mxu0 %v347
  %v531 = vpop.f32.mrb[0].mxu0
  %v532 = vadd.f32 %v435, %v531
  %v533 = vpop.f32.mrb[0].mxu0
  %v534 = vpop.f32.mrb[0].mxu0
  %v535 = vadd.f32 %v438, %v534
  %v536 = vpop.f32.mrb[0].mxu0
  %537 = vmatprep.mubr.bf16.mxu0 0
  %538 = vmatmul.mubr.bf16.gmra.mrb[0].mxu0 %v350
  %v539 = vpop.f32.mrb[0].mxu0
  %v540 = vadd.f32 %v443, %v539
  %v541 = vpop.f32.mrb[0].mxu0
  %v542 = vpop.f32.mrb[0].mxu0
  %v543 = vadd.f32 %v446, %v542
  %v544 = vpop.f32.mrb[0].mxu0
  %545 = vdwg.mxu0
  %v546 = vmax.f32 %v484, 0.0
  %v547 = vmax.f32 %v487, 0.0
  %v548 = vmax.f32 %v492, 0.0
  %v549 = vmax.f32 %v495, 0.0
  %v550 = vmax.f32 %v500, 0.0
  %v551 = vmax.f32 %v503, 0.0
  %v552 = vmax.f32 %v508, 0.0
  %v553 = vmax.f32 %v511, 0.0
  %v554 = vmax.f32 %v516, 0.0
  %v555 = vmax.f32 %v519, 0.0
  %v556 = vmax.f32 %v524, 0.0
  %v557 = vmax.f32 %v527, 0.0
  %v558 = vmax.f32 %v532, 0.0
  %v559 = vmax.f32 %v535, 0.0
  %v560 = vmax.f32 %v540, 0.0
  %v561 = vmax.f32 %v543, 0.0
  %v562 = vpack.c.bf16 %v547, %v546
  %v563 = vpack.c.bf16 %v549, %v548
  %v564 = vpack.c.bf16 %v551, %v550
  %v565 = vpack.c.bf16 %v553, %v552
  %v566 = vpack.c.bf16 %v555, %v554
  %v567 = vpack.c.bf16 %v557, %v556
  %v568 = vpack.c.bf16 %v559, %v558
  %v569 = vpack.c.bf16 %v561, %v560
  %v570 = vld [vmem:[%s4] sm:$0xf]
  %v571 = vld [vmem:[%s4 + $0x4] sm:$0xf]
  %v572 = vld [vmem:[%s4 + $0x8] sm:$0xf]
  %v573 = vld [vmem:[%s4 + $0xc] sm:$0xf]
  %v574 = vld [vmem:[%s5] sm:$0x1]
  %v576 = vlaneseq
  %v577 = vshrl.u32 %v576, 7
  %v578 = vsub.s32 0, %v577
  %v579 = vrot.slane %v574, %v578
  %v585 = vunpack.c.l.b16 %v570
  %v586 = vunpack.c.l.b16 %v571
  %v587 = vunpack.c.l.b16 %v572
  %v588 = vunpack.c.l.b16 %v573
  %v589 = vpack.c.b16 %v586, %v585
  %v590 = vpack.c.b16 %v588, %v587
  %v594 = vsel %vm327, %v562, 0
  %v597 = vsel %vm327, %v563, 0
  %v600 = vsel %vm327, %v564, 0
  %v603 = vsel %vm327, %v565, 0
  %v606 = vsel %vm327, %v566, 0
  %v609 = vsel %vm327, %v567, 0
  %v612 = vsel %vm327, %v568, 0
  %v615 = vsel %vm327, %v569, 0
  %617 = vmatprep.subr.bf16.mxu0 0
  %618 = vmatpush1.bf16.msra.mxu0 %v589
  %619 = vmatprep.subr.bf16.mxu0 0
  %620 = vmatpush1.bf16.msra.mxu0 %v590
  %621 = vmatprep.subr.bf16.mxu0 0
  %622 = vmatpush1.bf16.msra.mxu0 0
  %623 = vmatprep.subr.bf16.mxu0 0
  %624 = vmatpush1.bf16.msra.mxu0 0
  %625 = vmatprep.subr.bf16.mxu0 0
  %626 = vmatpush1.bf16.msra.mxu0 0
  %627 = vmatprep.subr.bf16.mxu0 0
  %628 = vmatpush1.bf16.msra.mxu0 0
  %629 = vmatprep.subr.bf16.mxu0 0
  %630 = vmatpush1.bf16.msra.mxu0 0
  %631 = vmatprep.subr.bf16.mxu0 0
  %632 = vmatpush1.bf16.msra.mxu0 0
  %633 = vmatprep.subr.bf16.mxu0 0
  %634 = vmatpush1.bf16.msra.mxu0 0
  %635 = vmatprep.subr.bf16.mxu0 0
  %636 = vmatpush1.bf16.msra.mxu0 0
  %637 = vmatprep.subr.bf16.mxu0 0
  %638 = vmatpush1.bf16.msra.mxu0 0
  %639 = vmatprep.subr.bf16.mxu0 0
  %640 = vmatpush1.bf16.msra.mxu0 0
  %641 = vmatprep.subr.bf16.mxu0 0
  %642 = vmatpush1.bf16.msra.mxu0 0
  %643 = vmatprep.subr.bf16.mxu0 0
  %644 = vmatpush1.bf16.msra.mxu0 0
  %645 = vmatprep.subr.bf16.mxu0 0
  %646 = vmatpush1.bf16.msra.mxu0 0
  %647 = vmatprep.subr.bf16.mxu0 0
  %648 = vmatpush1.bf16.msra.mxu0 0
  %649 = vmatprep.mubr.bf16.mxu0 0
  %650 = vmatmul.mubr.bf16.gmra.mrb[0].mxu0 %v594
  %v651 = vpop.f32.mrb[0].mxu0
  %v652 = vadd.f32 %v579, %v651
  %v653 = vpop.f32.mrb[0].mxu0
  %v654 = vpop.f32.mrb[0].mxu0
  %v655 = vadd.f32 %v579, %v654
  %v656 = vpop.f32.mrb[0].mxu0
  %657 = vmatprep.mubr.bf16.mxu0 0
  %658 = vmatmul.mubr.bf16.gmra.mrb[0].mxu0 %v597
  %v659 = vpop.f32.mrb[0].mxu0
  %v660 = vadd.f32 %v579, %v659
  %v661 = vpop.f32.mrb[0].mxu0
  %v662 = vpop.f32.mrb[0].mxu0
  %v663 = vadd.f32 %v579, %v662
  %v664 = vpop.f32.mrb[0].mxu0
  %665 = vmatprep.mubr.bf16.mxu0 0
  %666 = vmatmul.mubr.bf16.gmra.mrb[0].mxu0 %v600
  %v667 = vpop.f32.mrb[0].mxu0
  %v668 = vadd.f32 %v579, %v667
  %v669 = vpop.f32.mrb[0].mxu0
  %v670 = vpop.f32.mrb[0].mxu0
  %v671 = vadd.f32 %v579, %v670
  %v672 = vpop.f32.mrb[0].mxu0
  %673 = vmatprep.mubr.bf16.mxu0 0
  %674 = vmatmul.mubr.bf16.gmra.mrb[0].mxu0 %v603
  %v675 = vpop.f32.mrb[0].mxu0
  %v676 = vadd.f32 %v579, %v675
  %v677 = vpop.f32.mrb[0].mxu0
  %v678 = vpop.f32.mrb[0].mxu0
  %v679 = vadd.f32 %v579, %v678
  %v680 = vpop.f32.mrb[0].mxu0
  %681 = vmatprep.mubr.bf16.mxu0 0
  %682 = vmatmul.mubr.bf16.gmra.mrb[0].mxu0 %v606
  %v683 = vpop.f32.mrb[0].mxu0
  %v684 = vadd.f32 %v579, %v683
  %v685 = vpop.f32.mrb[0].mxu0
  %v686 = vpop.f32.mrb[0].mxu0
  %v687 = vadd.f32 %v579, %v686
  %v688 = vpop.f32.mrb[0].mxu0
  %689 = vmatprep.mubr.bf16.mxu0 0
  %690 = vmatmul.mubr.bf16.gmra.mrb[0].mxu0 %v609
  %v691 = vpop.f32.mrb[0].mxu0
  %v692 = vadd.f32 %v579, %v691
  %v693 = vpop.f32.mrb[0].mxu0
  %v694 = vpop.f32.mrb[0].mxu0
  %v695 = vadd.f32 %v579, %v694
  %v696 = vpop.f32.mrb[0].mxu0
  %697 = vmatprep.mubr.bf16.mxu0 0
  %698 = vmatmul.mubr.bf16.gmra.mrb[0].mxu0 %v612
  %v699 = vpop.f32.mrb[0].mxu0
  %v700 = vadd.f32 %v579, %v699
  %v701 = vpop.f32.mrb[0].mxu0
  %v702 = vpop.f32.mrb[0].mxu0
  %v703 = vadd.f32 %v579, %v702
  %v704 = vpop.f32.mrb[0].mxu0
  %705 = vmatprep.mubr.bf16.mxu0 0
  %706 = vmatmul.mubr.bf16.gmra.mrb[0].mxu0 %v615
  %v707 = vpop.f32.mrb[0].mxu0
  %v708 = vadd.f32 %v579, %v707
  %v709 = vpop.f32.mrb[0].mxu0
  %v710 = vpop.f32.mrb[0].mxu0
  %v711 = vadd.f32 %v579, %v710
  %v712 = vpop.f32.mrb[0].mxu0
  %713 = vdwg.mxu0
  %v714 = vld [vmem:[%s1] sm:$0xff]
  %v715 = vld [vmem:[%s1 + $0x8] sm:$0xff]
  %v716 = vld [vmem:[%s1 + $0x10] sm:$0xff]
  %v717 = vld [vmem:[%s1 + $0x18] sm:$0xff]
  %v718 = vld [vmem:[%s1 + $0x20] sm:$0xff]
  %v719 = vld [vmem:[%s1 + $0x28] sm:$0xff]
  %v720 = vld [vmem:[%s1 + $0x30] sm:$0xff]
  %v721 = vld [vmem:[%s1 + $0x38] sm:$0xff]
  %v722 = vld [vmem:[%s1 + $0x40] sm:$0xff]
  %v723 = vld [vmem:[%s1 + $0x48] sm:$0xff]
  %v724 = vld [vmem:[%s1 + $0x50] sm:$0xff]
  %v725 = vld [vmem:[%s1 + $0x58] sm:$0xff]
  %v726 = vld [vmem:[%s1 + $0x60] sm:$0xff]
  %v727 = vld [vmem:[%s1 + $0x68] sm:$0xff]
  %v728 = vld [vmem:[%s1 + $0x70] sm:$0xff]
  %v729 = vld [vmem:[%s1 + $0x78] sm:$0xff]
  %v730 = vadd.f32 %v652, %v714
  %v731 = vadd.f32 %v655, %v715
  %v732 = vadd.f32 %v660, %v716
  %v733 = vadd.f32 %v663, %v717
  %v734 = vadd.f32 %v668, %v718
  %v735 = vadd.f32 %v671, %v719
  %v736 = vadd.f32 %v676, %v720
  %v737 = vadd.f32 %v679, %v721
  %v738 = vadd.f32 %v684, %v722
  %v739 = vadd.f32 %v687, %v723
  %v740 = vadd.f32 %v692, %v724
  %v741 = vadd.f32 %v695, %v725
  %v742 = vadd.f32 %v700, %v726
  %v743 = vadd.f32 %v703, %v727
  %v744 = vadd.f32 %v708, %v728
  %v745 = vadd.f32 %v711, %v729
  %746 = vst.msk [vmem:[%s6] sm:$0xff] %vm327, %v730
  %747 = vst.msk [vmem:[%s6 + $0x8] sm:$0xff] %vm327, %v731
  %748 = vst.msk [vmem:[%s6 + $0x10] sm:$0xff] %vm327, %v732
  %749 = vst.msk [vmem:[%s6 + $0x18] sm:$0xff] %vm327, %v733
  %750 = vst.msk [vmem:[%s6 + $0x20] sm:$0xff] %vm327, %v734
  %751 = vst.msk [vmem:[%s6 + $0x28] sm:$0xff] %vm327, %v735
  %752 = vst.msk [vmem:[%s6 + $0x30] sm:$0xff] %vm327, %v736
  %753 = vst.msk [vmem:[%s6 + $0x38] sm:$0xff] %vm327, %v737
  %754 = vst.msk [vmem:[%s6 + $0x40] sm:$0xff] %vm327, %v738
  %755 = vst.msk [vmem:[%s6 + $0x48] sm:$0xff] %vm327, %v739
  %756 = vst.msk [vmem:[%s6 + $0x50] sm:$0xff] %vm327, %v740
  %757 = vst.msk [vmem:[%s6 + $0x58] sm:$0xff] %vm327, %v741
  %758 = vst.msk [vmem:[%s6 + $0x60] sm:$0xff] %vm327, %v742
  %759 = vst.msk [vmem:[%s6 + $0x68] sm:$0xff] %vm327, %v743
  %760 = vst.msk [vmem:[%s6 + $0x70] sm:$0xff] %vm327, %v744
  %761 = vst.msk [vmem:[%s6 + $0x78] sm:$0xff] %vm327, %v745
  // Predicated region
  $region26: #{vqvae_forward.11} parent=0 // pred_check
    _
  $region27: #{vqvae_forward.11} parent=0 // pred_check_branch
    %763 = sbr.rel (0) target = $region29
  $region28: #{vqvae_forward.11} parent=0 // pred_region
    _
  $region29: #{vqvae_forward.11} parent=0 // pred_fallthru
    _
  // Predicated region
  $region30: #{vqvae_forward.11} parent=0 // pred_check
    _
  $region31: #{vqvae_forward.11} parent=0 // pred_check_branch
    %765 = sbr.rel (0) target = $region33
  $region32: #{vqvae_forward.11} parent=0 // pred_region
    _
  $region33: #{vqvae_forward.11} parent=0 // pred_fallthru
    _

// kernel: vqvae_forward.13
$region0: #{vqvae_forward.13}
  #allocation0 [shape = 'u32[]', space=smem, size = 0x4, offset = 0x4, fixed_abs, tag = 'smem constant byte address 0x4 - core index']
  #allocation1 [shape = 'u32[144,128]{1,0:T(1,128)}', space=vmem, size = 0x12000, scoped, tag = 'internal scratch']
  %s0 = inlined_call_operand.vmem [shape: f32[128,32], index: 0, kind: input, shape index: {}]
  %s1 = inlined_call_operand.vmem [shape: f32[32,10], index: 1, kind: input, shape index: {}]
  %s2 = inlined_call_operand.vmem [shape: f32[1,10], index: 2, kind: input, shape index: {}]
  %s3 = inlined_call_operand.vmem [shape: f32[10,128], index: 3, kind: input, shape index: {}]
  %s4 = inlined_call_operand.vmem [shape: f32[1,128], index: 4, kind: input, shape index: {}]
  %s5 = inlined_call_operand.vmem [shape: f32[128,32], index: 5, kind: input, shape index: {}]
  %s6 = inlined_call_operand.vmem [shape: f32[1,32], index: 6, kind: input, shape index: {}]
  %s7 = inlined_call_operand.vmem [shape: f32[128,32], index: 7, kind: output, shape index: {}]
  %s8 = sld [smem:[#allocation0]]
  $region38: #{vqvae_forward.13} parent=0
    _
  %s10 = ssub.s32 1, %s8
  %s11 = scalar_select 0, %s10, %s8
  // Predicated region
  $region2: #{vqvae_forward.13} parent=0 // pred_check
    _
  $region3: #{vqvae_forward.13} parent=0 // pred_check_branch
    %13 = sbr.rel (0) target = $region5
  $region4: #{vqvae_forward.13} parent=0 // pred_region
    _
  $region5: #{vqvae_forward.13} parent=0 // pred_fallthru
    _
  // Predicated region
  $region6: #{vqvae_forward.13} parent=0 // pred_check
    _
  $region7: #{vqvae_forward.13} parent=0 // pred_check_branch
    %15 = sbr.rel (0) target = $region9
  $region8: #{vqvae_forward.13} parent=0 // pred_region
    _
  $region9: #{vqvae_forward.13} parent=0 // pred_fallthru
    _
  // Predicated region
  $region10: #{vqvae_forward.13} parent=0 // pred_check
    _
  $region11: #{vqvae_forward.13} parent=0 // pred_check_branch
    %17 = sbr.rel (0) target = $region13
  $region12: #{vqvae_forward.13} parent=0 // pred_region
    _
  $region13: #{vqvae_forward.13} parent=0 // pred_fallthru
    _
  // Predicated region
  $region14: #{vqvae_forward.13} parent=0 // pred_check
    _
  $region15: #{vqvae_forward.13} parent=0 // pred_check_branch
    %19 = sbr.rel (0) target = $region17
  $region16: #{vqvae_forward.13} parent=0 // pred_region
    _
  $region17: #{vqvae_forward.13} parent=0 // pred_fallthru
    _
  // Predicated region
  $region18: #{vqvae_forward.13} parent=0 // pred_check
    _
  $region19: #{vqvae_forward.13} parent=0 // pred_check_branch
    %21 = sbr.rel (0) target = $region21
  $region20: #{vqvae_forward.13} parent=0 // pred_region
    _
  $region21: #{vqvae_forward.13} parent=0 // pred_fallthru
    _
  // Predicated region
  $region22: #{vqvae_forward.13} parent=0 // pred_check
    _
  $region23: #{vqvae_forward.13} parent=0 // pred_check_branch
    %23 = sbr.rel (0) target = $region25
  $region24: #{vqvae_forward.13} parent=0 // pred_region
    _
  $region25: #{vqvae_forward.13} parent=0 // pred_fallthru
    _
  // Predicated region
  $region26: #{vqvae_forward.13} parent=0 // pred_check
    _
  $region27: #{vqvae_forward.13} parent=0 // pred_check_branch
    %25 = sbr.rel (0) target = $region29
  $region28: #{vqvae_forward.13} parent=0 // pred_region
    _
  $region29: #{vqvae_forward.13} parent=0 // pred_fallthru
    _
  %v26 = vld [vmem:[%s0] sm:$0xff]
  %v27 = vld [vmem:[%s0 + $0x8] sm:$0xff]
  %v28 = vld [vmem:[%s0 + $0x10] sm:$0xff]
  %v29 = vld [vmem:[%s0 + $0x18] sm:$0xff]
  %v30 = vld [vmem:[%s0 + $0x20] sm:$0xff]
  %v31 = vld [vmem:[%s0 + $0x28] sm:$0xff]
  %v32 = vld [vmem:[%s0 + $0x30] sm:$0xff]
  %v33 = vld [vmem:[%s0 + $0x38] sm:$0xff]
  %v34 = vld [vmem:[%s0 + $0x40] sm:$0xff]
  %v35 = vld [vmem:[%s0 + $0x48] sm:$0xff]
  %v36 = vld [vmem:[%s0 + $0x50] sm:$0xff]
  %v37 = vld [vmem:[%s0 + $0x58] sm:$0xff]
  %v38 = vld [vmem:[%s0 + $0x60] sm:$0xff]
  %v39 = vld [vmem:[%s0 + $0x68] sm:$0xff]
  %v40 = vld [vmem:[%s0 + $0x70] sm:$0xff]
  %v41 = vld [vmem:[%s0 + $0x78] sm:$0xff]
  %v42 = vld [vmem:[%s1] sm:$0xff]
  %v43 = vld [vmem:[%s1 + $0x8] sm:$0xff]
  %v44 = vld [vmem:[%s1 + $0x10] sm:$0xff]
  %v45 = vld [vmem:[%s1 + $0x18] sm:$0xff]
  %v46 = vld [vmem:[%s2] sm:$0x1]
  %v48 = vlaneseq
  %v49 = vshrl.u32 %v48, 7
  %v50 = vsub.s32 0, %v49
  %v51 = vrot.slane %v46, %v50
  %vm53 = vcmask 261120
  %v55 = vsel %vm53, %v26, 0
  %v58 = vsel %vm53, %v27, 0
  %v61 = vsel %vm53, %v28, 0
  %v64 = vsel %vm53, %v29, 0
  %v67 = vsel %vm53, %v30, 0
  %v70 = vsel %vm53, %v31, 0
  %v73 = vsel %vm53, %v32, 0
  %v76 = vsel %vm53, %v33, 0
  %v79 = vsel %vm53, %v34, 0
  %v82 = vsel %vm53, %v35, 0
  %v85 = vsel %vm53, %v36, 0
  %v88 = vsel %vm53, %v37, 0
  %v91 = vsel %vm53, %v38, 0
  %v94 = vsel %vm53, %v39, 0
  %v97 = vsel %vm53, %v40, 0
  %v100 = vsel %vm53, %v41, 0
  %102 = vmatprep.subr.mxu0 0.0
  %103 = vmatpush1.msra.mxu0 %v42
  %104 = vmatprep.subr.mxu0 0.0
  %105 = vmatpush1.msra.mxu0 %v43
  %106 = vmatprep.subr.mxu0 0.0
  %107 = vmatpush1.msra.mxu0 %v44
  %108 = vmatprep.subr.mxu0 0.0
  %109 = vmatpush1.msra.mxu0 %v45
  %110 = vmatprep.subr.mxu0 0.0
  %111 = vmatpush1.msra.mxu0 0.0
  %112 = vmatprep.subr.mxu0 0.0
  %113 = vmatpush1.msra.mxu0 0.0
  %114 = vmatprep.subr.mxu0 0.0
  %115 = vmatpush1.msra.mxu0 0.0
  %116 = vmatprep.subr.mxu0 0.0
  %117 = vmatpush1.msra.mxu0 0.0
  %118 = vmatprep.subr.mxu0 0.0
  %119 = vmatpush1.msra.mxu0 0.0
  %120 = vmatprep.subr.mxu0 0.0
  %121 = vmatpush1.msra.mxu0 0.0
  %122 = vmatprep.subr.mxu0 0.0
  %123 = vmatpush1.msra.mxu0 0.0
  %124 = vmatprep.subr.mxu0 0.0
  %125 = vmatpush1.msra.mxu0 0.0
  %126 = vmatprep.subr.mxu0 0.0
  %127 = vmatpush1.msra.mxu0 0.0
  %128 = vmatprep.subr.mxu0 0.0
  %129 = vmatpush1.msra.mxu0 0.0
  %130 = vmatprep.subr.mxu0 0.0
  %131 = vmatpush1.msra.mxu0 0.0
  %132 = vmatprep.subr.mxu0 0.0
  %133 = vmatpush1.msra.mxu0 0.0
  %134 = vmatprep.subr.mxu0 0.0
  %135 = vmatpush1.msra.mxu0 0.0
  %136 = vmatprep.subr.mxu0 0.0
  %137 = vmatpush1.msra.mxu0 0.0
  %138 = vmatprep.subr.mxu0 0.0
  %139 = vmatpush1.msra.mxu0 0.0
  %140 = vmatprep.subr.mxu0 0.0
  %141 = vmatpush1.msra.mxu0 0.0
  %142 = vmatprep.subr.mxu0 0.0
  %143 = vmatpush1.msra.mxu0 0.0
  %144 = vmatprep.subr.mxu0 0.0
  %145 = vmatpush1.msra.mxu0 0.0
  %146 = vmatprep.subr.mxu0 0.0
  %147 = vmatpush1.msra.mxu0 0.0
  %148 = vmatprep.subr.mxu0 0.0
  %149 = vmatpush1.msra.mxu0 0.0
  %150 = vmatprep.subr.mxu0 0.0
  %151 = vmatpush1.msra.mxu0 0.0
  %152 = vmatprep.subr.mxu0 0.0
  %153 = vmatpush1.msra.mxu0 0.0
  %154 = vmatprep.subr.mxu0 0.0
  %155 = vmatpush1.msra.mxu0 0.0
  %156 = vmatprep.subr.mxu0 0.0
  %157 = vmatpush1.msra.mxu0 0.0
  %158 = vmatprep.subr.mxu0 0.0
  %159 = vmatpush1.msra.mxu0 0.0
  %160 = vmatprep.subr.mxu0 0.0
  %161 = vmatpush1.msra.mxu0 0.0
  %162 = vmatprep.subr.mxu0 0.0
  %163 = vmatpush1.msra.mxu0 0.0
  %164 = vmatprep.subr.mxu0 0.0
  %165 = vmatpush1.msra.mxu0 0.0
  %166 = vmatprep.mubr.f32.mxu0 0.0
  %167 = vmatmul.mubr.f32.gmra.mrb[0].mxu0 %v55
  %v168 = vpop.f32.mrb[0].mxu0
  %v169 = vadd.f32 %v51, %v168
  %v170 = vpop.f32.mrb[0].mxu0
  %171 = vmatprep.mubr.f32.mxu0 0.0
  %172 = vmatmul.mubr.f32.gmra.mrb[0].mxu0 %v58
  %v173 = vpop.f32.mrb[0].mxu0
  %v174 = vadd.f32 %v51, %v173
  %v175 = vpop.f32.mrb[0].mxu0
  %176 = vmatprep.mubr.f32.mxu0 0.0
  %177 = vmatmul.mubr.f32.gmra.mrb[0].mxu0 %v61
  %v178 = vpop.f32.mrb[0].mxu0
  %v179 = vadd.f32 %v51, %v178
  %v180 = vpop.f32.mrb[0].mxu0
  %181 = vmatprep.mubr.f32.mxu0 0.0
  %182 = vmatmul.mubr.f32.gmra.mrb[0].mxu0 %v64
  %v183 = vpop.f32.mrb[0].mxu0
  %v184 = vadd.f32 %v51, %v183
  %v185 = vpop.f32.mrb[0].mxu0
  %186 = vmatprep.mubr.f32.mxu0 0.0
  %187 = vmatmul.mubr.f32.gmra.mrb[0].mxu0 %v67
  %v188 = vpop.f32.mrb[0].mxu0
  %v189 = vadd.f32 %v51, %v188
  %v190 = vpop.f32.mrb[0].mxu0
  %191 = vmatprep.mubr.f32.mxu0 0.0
  %192 = vmatmul.mubr.f32.gmra.mrb[0].mxu0 %v70
  %v193 = vpop.f32.mrb[0].mxu0
  %v194 = vadd.f32 %v51, %v193
  %v195 = vpop.f32.mrb[0].mxu0
  %196 = vmatprep.mubr.f32.mxu0 0.0
  %197 = vmatmul.mubr.f32.gmra.mrb[0].mxu0 %v73
  %v198 = vpop.f32.mrb[0].mxu0
  %v199 = vadd.f32 %v51, %v198
  %v200 = vpop.f32.mrb[0].mxu0
  %201 = vmatprep.mubr.f32.mxu0 0.0
  %202 = vmatmul.mubr.f32.gmra.mrb[0].mxu0 %v76
  %v203 = vpop.f32.mrb[0].mxu0
  %v204 = vadd.f32 %v51, %v203
  %v205 = vpop.f32.mrb[0].mxu0
  %206 = vmatprep.mubr.f32.mxu0 0.0
  %207 = vmatmul.mubr.f32.gmra.mrb[0].mxu0 %v79
  %v208 = vpop.f32.mrb[0].mxu0
  %v209 = vadd.f32 %v51, %v208
  %v210 = vpop.f32.mrb[0].mxu0
  %211 = vmatprep.mubr.f32.mxu0 0.0
  %212 = vmatmul.mubr.f32.gmra.mrb[0].mxu0 %v82
  %v213 = vpop.f32.mrb[0].mxu0
  %v214 = vadd.f32 %v51, %v213
  %v215 = vpop.f32.mrb[0].mxu0
  %216 = vmatprep.mubr.f32.mxu0 0.0
  %217 = vmatmul.mubr.f32.gmra.mrb[0].mxu0 %v85
  %v218 = vpop.f32.mrb[0].mxu0
  %v219 = vadd.f32 %v51, %v218
  %v220 = vpop.f32.mrb[0].mxu0
  %221 = vmatprep.mubr.f32.mxu0 0.0
  %222 = vmatmul.mubr.f32.gmra.mrb[0].mxu0 %v88
  %v223 = vpop.f32.mrb[0].mxu0
  %v224 = vadd.f32 %v51, %v223
  %v225 = vpop.f32.mrb[0].mxu0
  %226 = vmatprep.mubr.f32.mxu0 0.0
  %227 = vmatmul.mubr.f32.gmra.mrb[0].mxu0 %v91
  %v228 = vpop.f32.mrb[0].mxu0
  %v229 = vadd.f32 %v51, %v228
  %v230 = vpop.f32.mrb[0].mxu0
  %231 = vmatprep.mubr.f32.mxu0 0.0
  %232 = vmatmul.mubr.f32.gmra.mrb[0].mxu0 %v94
  %v233 = vpop.f32.mrb[0].mxu0
  %v234 = vadd.f32 %v51, %v233
  %v235 = vpop.f32.mrb[0].mxu0
  %236 = vmatprep.mubr.f32.mxu0 0.0
  %237 = vmatmul.mubr.f32.gmra.mrb[0].mxu0 %v97
  %v238 = vpop.f32.mrb[0].mxu0
  %v239 = vadd.f32 %v51, %v238
  %v240 = vpop.f32.mrb[0].mxu0
  %241 = vmatprep.mubr.f32.mxu0 0.0
  %242 = vmatmul.mubr.f32.gmra.mrb[0].mxu0 %v100
  %v243 = vpop.f32.mrb[0].mxu0
  %v244 = vadd.f32 %v51, %v243
  %v245 = vpop.f32.mrb[0].mxu0
  %246 = vdwg.mxu0
  %v247 = vld [vmem:[%s3] sm:$0xff]
  %v248 = vld [vmem:[%s3 + $0x8] sm:$0x3]
  %vm249 = vcmask 80896
  %v251 = vsel %vm249, %v169, 0
  %v254 = vsel %vm249, %v174, 0
  %v257 = vsel %vm249, %v179, 0
  %v260 = vsel %vm249, %v184, 0
  %v263 = vsel %vm249, %v189, 0
  %v266 = vsel %vm249, %v194, 0
  %v269 = vsel %vm249, %v199, 0
  %v272 = vsel %vm249, %v204, 0
  %v275 = vsel %vm249, %v209, 0
  %v278 = vsel %vm249, %v214, 0
  %v281 = vsel %vm249, %v219, 0
  %v284 = vsel %vm249, %v224, 0
  %v287 = vsel %vm249, %v229, 0
  %v290 = vsel %vm249, %v234, 0
  %v293 = vsel %vm249, %v239, 0
  %v296 = vsel %vm249, %v244, 0
  %vm298 = vcmask 1041408
  %v300 = vsel %vm298, %v248, 0
  %302 = vmatprep.subr.mxu0 0.0
  %303 = vmatpush1.msra.mxu0 %v247
  %304 = vmatprep.subr.mxu0 0.0
  %305 = vmatpush1.msra.mxu0 %v300
  %306 = vmatprep.subr.mxu0 0.0
  %307 = vmatpush1.msra.mxu0 0.0
  %308 = vmatprep.subr.mxu0 0.0
  %309 = vmatpush1.msra.mxu0 0.0
  %310 = vmatprep.subr.mxu0 0.0
  %311 = vmatpush1.msra.mxu0 0.0
  %312 = vmatprep.subr.mxu0 0.0
  %313 = vmatpush1.msra.mxu0 0.0
  %314 = vmatprep.subr.mxu0 0.0
  %315 = vmatpush1.msra.mxu0 0.0
  %316 = vmatprep.subr.mxu0 0.0
  %317 = vmatpush1.msra.mxu0 0.0
  %318 = vmatprep.subr.mxu0 0.0
  %319 = vmatpush1.msra.mxu0 0.0
  %320 = vmatprep.subr.mxu0 0.0
  %321 = vmatpush1.msra.mxu0 0.0
  %322 = vmatprep.subr.mxu0 0.0
  %323 = vmatpush1.msra.mxu0 0.0
  %324 = vmatprep.subr.mxu0 0.0
  %325 = vmatpush1.msra.mxu0 0.0
  %326 = vmatprep.subr.mxu0 0.0
  %327 = vmatpush1.msra.mxu0 0.0
  %328 = vmatprep.subr.mxu0 0.0
  %329 = vmatpush1.msra.mxu0 0.0
  %330 = vmatprep.subr.mxu0 0.0
  %331 = vmatpush1.msra.mxu0 0.0
  %332 = vmatprep.subr.mxu0 0.0
  %333 = vmatpush1.msra.mxu0 0.0
  %334 = vmatprep.subr.mxu0 0.0
  %335 = vmatpush1.msra.mxu0 0.0
  %336 = vmatprep.subr.mxu0 0.0
  %337 = vmatpush1.msra.mxu0 0.0
  %338 = vmatprep.subr.mxu0 0.0
  %339 = vmatpush1.msra.mxu0 0.0
  %340 = vmatprep.subr.mxu0 0.0
  %341 = vmatpush1.msra.mxu0 0.0
  %342 = vmatprep.subr.mxu0 0.0
  %343 = vmatpush1.msra.mxu0 0.0
  %344 = vmatprep.subr.mxu0 0.0
  %345 = vmatpush1.msra.mxu0 0.0
  %346 = vmatprep.subr.mxu0 0.0
  %347 = vmatpush1.msra.mxu0 0.0
  %348 = vmatprep.subr.mxu0 0.0
  %349 = vmatpush1.msra.mxu0 0.0
  %350 = vmatprep.subr.mxu0 0.0
  %351 = vmatpush1.msra.mxu0 0.0
  %352 = vmatprep.subr.mxu0 0.0
  %353 = vmatpush1.msra.mxu0 0.0
  %354 = vmatprep.subr.mxu0 0.0
  %355 = vmatpush1.msra.mxu0 0.0
  %356 = vmatprep.subr.mxu0 0.0
  %357 = vmatpush1.msra.mxu0 0.0
  %358 = vmatprep.subr.mxu0 0.0
  %359 = vmatpush1.msra.mxu0 0.0
  %360 = vmatprep.subr.mxu0 0.0
  %361 = vmatpush1.msra.mxu0 0.0
  %362 = vmatprep.subr.mxu0 0.0
  %363 = vmatpush1.msra.mxu0 0.0
  %364 = vmatprep.subr.mxu0 0.0
  %365 = vmatpush1.msra.mxu0 0.0
  %366 = vmatprep.mubr.f32.mxu0 0.0
  %367 = vmatmul.mubr.f32.gmra.mrb[0].mxu0 %v251
  %v368 = vpop.f32.mrb[0].mxu0
  %v369 = vadd.f32 0.0, %v368
  %v370 = vpop.f32.mrb[0].mxu0
  %371 = vmatprep.mubr.f32.mxu0 0.0
  %372 = vmatmul.mubr.f32.gmra.mrb[0].mxu0 %v254
  %v373 = vpop.f32.mrb[0].mxu0
  %v374 = vadd.f32 0.0, %v373
  %v375 = vpop.f32.mrb[0].mxu0
  %376 = vmatprep.mubr.f32.mxu0 0.0
  %377 = vmatmul.mubr.f32.gmra.mrb[0].mxu0 %v257
  %v378 = vpop.f32.mrb[0].mxu0
  %v379 = vadd.f32 0.0, %v378
  %v380 = vpop.f32.mrb[0].mxu0
  %381 = vmatprep.mubr.f32.mxu0 0.0
  %382 = vmatmul.mubr.f32.gmra.mrb[0].mxu0 %v260
  %v383 = vpop.f32.mrb[0].mxu0
  %v384 = vadd.f32 0.0, %v383
  %v385 = vpop.f32.mrb[0].mxu0
  %386 = vmatprep.mubr.f32.mxu0 0.0
  %387 = vmatmul.mubr.f32.gmra.mrb[0].mxu0 %v263
  %v388 = vpop.f32.mrb[0].mxu0
  %v389 = vadd.f32 0.0, %v388
  %v390 = vpop.f32.mrb[0].mxu0
  %391 = vmatprep.mubr.f32.mxu0 0.0
  %392 = vmatmul.mubr.f32.gmra.mrb[0].mxu0 %v266
  %v393 = vpop.f32.mrb[0].mxu0
  %v394 = vadd.f32 0.0, %v393
  %v395 = vpop.f32.mrb[0].mxu0
  %396 = vmatprep.mubr.f32.mxu0 0.0
  %397 = vmatmul.mubr.f32.gmra.mrb[0].mxu0 %v269
  %v398 = vpop.f32.mrb[0].mxu0
  %v399 = vadd.f32 0.0, %v398
  %v400 = vpop.f32.mrb[0].mxu0
  %401 = vmatprep.mubr.f32.mxu0 0.0
  %402 = vmatmul.mubr.f32.gmra.mrb[0].mxu0 %v272
  %v403 = vpop.f32.mrb[0].mxu0
  %v404 = vadd.f32 0.0, %v403
  %v405 = vpop.f32.mrb[0].mxu0
  %406 = vmatprep.mubr.f32.mxu0 0.0
  %407 = vmatmul.mubr.f32.gmra.mrb[0].mxu0 %v275
  %v408 = vpop.f32.mrb[0].mxu0
  %v409 = vadd.f32 0.0, %v408
  %v410 = vpop.f32.mrb[0].mxu0
  %411 = vmatprep.mubr.f32.mxu0 0.0
  %412 = vmatmul.mubr.f32.gmra.mrb[0].mxu0 %v278
  %v413 = vpop.f32.mrb[0].mxu0
  %v414 = vadd.f32 0.0, %v413
  %v415 = vpop.f32.mrb[0].mxu0
  %416 = vmatprep.mubr.f32.mxu0 0.0
  %417 = vmatmul.mubr.f32.gmra.mrb[0].mxu0 %v281
  %v418 = vpop.f32.mrb[0].mxu0
  %v419 = vadd.f32 0.0, %v418
  %v420 = vpop.f32.mrb[0].mxu0
  %421 = vmatprep.mubr.f32.mxu0 0.0
  %422 = vmatmul.mubr.f32.gmra.mrb[0].mxu0 %v284
  %v423 = vpop.f32.mrb[0].mxu0
  %v424 = vadd.f32 0.0, %v423
  %v425 = vpop.f32.mrb[0].mxu0
  %426 = vmatprep.mubr.f32.mxu0 0.0
  %427 = vmatmul.mubr.f32.gmra.mrb[0].mxu0 %v287
  %v428 = vpop.f32.mrb[0].mxu0
  %v429 = vadd.f32 0.0, %v428
  %v430 = vpop.f32.mrb[0].mxu0
  %431 = vmatprep.mubr.f32.mxu0 0.0
  %432 = vmatmul.mubr.f32.gmra.mrb[0].mxu0 %v290
  %v433 = vpop.f32.mrb[0].mxu0
  %v434 = vadd.f32 0.0, %v433
  %v435 = vpop.f32.mrb[0].mxu0
  %436 = vmatprep.mubr.f32.mxu0 0.0
  %437 = vmatmul.mubr.f32.gmra.mrb[0].mxu0 %v293
  %v438 = vpop.f32.mrb[0].mxu0
  %v439 = vadd.f32 0.0, %v438
  %v440 = vpop.f32.mrb[0].mxu0
  %441 = vmatprep.mubr.f32.mxu0 0.0
  %442 = vmatmul.mubr.f32.gmra.mrb[0].mxu0 %v296
  %v443 = vpop.f32.mrb[0].mxu0
  %v444 = vadd.f32 0.0, %v443
  %v445 = vpop.f32.mrb[0].mxu0
  %446 = vdwg.mxu0
  %v447 = vld [vmem:[%s4] sm:$0x1]
  %v448 = vmul.f32 %v369, 2.0
  %v449 = vmul.f32 %v374, 2.0
  %v450 = vmul.f32 %v379, 2.0
  %v451 = vmul.f32 %v384, 2.0
  %v452 = vmul.f32 %v389, 2.0
  %v453 = vmul.f32 %v394, 2.0
  %v454 = vmul.f32 %v399, 2.0
  %v455 = vmul.f32 %v404, 2.0
  %v456 = vmul.f32 %v409, 2.0
  %v457 = vmul.f32 %v414, 2.0
  %v458 = vmul.f32 %v419, 2.0
  %v459 = vmul.f32 %v424, 2.0
  %v460 = vmul.f32 %v429, 2.0
  %v461 = vmul.f32 %v434, 2.0
  %v462 = vmul.f32 %v439, 2.0
  %v463 = vmul.f32 %v444, 2.0
  %v465 = vlaneseq
  %v466 = vshrl.u32 %v465, 7
  %v467 = vsub.s32 0, %v466
  %v468 = vrot.slane %v447, %v467
  %v470 = vsub.f32 %v468, %v448
  %v471 = vsub.f32 %v468, %v449
  %v472 = vsub.f32 %v468, %v450
  %v473 = vsub.f32 %v468, %v451
  %v474 = vsub.f32 %v468, %v452
  %v475 = vsub.f32 %v468, %v453
  %v476 = vsub.f32 %v468, %v454
  %v477 = vsub.f32 %v468, %v455
  %v478 = vsub.f32 %v468, %v456
  %v479 = vsub.f32 %v468, %v457
  %v480 = vsub.f32 %v468, %v458
  %v481 = vsub.f32 %v468, %v459
  %v482 = vsub.f32 %v468, %v460
  %v483 = vsub.f32 %v468, %v461
  %v484 = vsub.f32 %v468, %v462
  %v485 = vsub.f32 %v468, %v463
  %v486 = vlaneseq
  %v487 = vand.u32 %v486, 127
  %488 = vmin.xlane.f32.xlu0 %v470
  %v489 = vpop.xlane.xlu0 %488
  %490 = vmin.xlane.f32.xlu0 %v471
  %v491 = vpop.xlane.xlu0 %490
  %492 = vmin.xlane.f32.xlu0 %v472
  %v493 = vpop.xlane.xlu0 %492
  %494 = vmin.xlane.f32.xlu0 %v473
  %v495 = vpop.xlane.xlu0 %494
  %496 = vmin.xlane.f32.xlu0 %v474
  %v497 = vpop.xlane.xlu0 %496
  %498 = vmin.xlane.f32.xlu0 %v475
  %v499 = vpop.xlane.xlu0 %498
  %500 = vmin.xlane.f32.xlu0 %v476
  %v501 = vpop.xlane.xlu0 %500
  %502 = vmin.xlane.f32.xlu0 %v477
  %v503 = vpop.xlane.xlu0 %502
  %504 = vmin.xlane.f32.xlu0 %v478
  %v505 = vpop.xlane.xlu0 %504
  %506 = vmin.xlane.f32.xlu0 %v479
  %v507 = vpop.xlane.xlu0 %506
  %508 = vmin.xlane.f32.xlu0 %v480
  %v509 = vpop.xlane.xlu0 %508
  %510 = vmin.xlane.f32.xlu0 %v481
  %v511 = vpop.xlane.xlu0 %510
  %512 = vmin.xlane.f32.xlu0 %v482
  %v513 = vpop.xlane.xlu0 %512
  %514 = vmin.xlane.f32.xlu0 %v483
  %v515 = vpop.xlane.xlu0 %514
  %516 = vmin.xlane.f32.xlu0 %v484
  %v517 = vpop.xlane.xlu0 %516
  %518 = vmin.xlane.f32.xlu0 %v485
  %v519 = vpop.xlane.xlu0 %518
  %vm520 = vcmp.le.f32.partialorder %v470, %v489
  %vm521 = vcmp.le.f32.partialorder %v471, %v491
  %vm522 = vcmp.le.f32.partialorder %v472, %v493
  %vm523 = vcmp.le.f32.partialorder %v473, %v495
  %vm524 = vcmp.le.f32.partialorder %v474, %v497
  %vm525 = vcmp.le.f32.partialorder %v475, %v499
  %vm526 = vcmp.le.f32.partialorder %v476, %v501
  %vm527 = vcmp.le.f32.partialorder %v477, %v503
  %vm528 = vcmp.le.f32.partialorder %v478, %v505
  %vm529 = vcmp.le.f32.partialorder %v479, %v507
  %vm530 = vcmp.le.f32.partialorder %v480, %v509
  %vm531 = vcmp.le.f32.partialorder %v481, %v511
  %vm532 = vcmp.le.f32.partialorder %v482, %v513
  %vm533 = vcmp.le.f32.partialorder %v483, %v515
  %vm534 = vcmp.le.f32.partialorder %v484, %v517
  %vm535 = vcmp.le.f32.partialorder %v485, %v519
  %v536 = vsel %vm520, %v487, 128
  %v537 = vsel %vm521, %v487, 128
  %v538 = vsel %vm522, %v487, 128
  %v539 = vsel %vm523, %v487, 128
  %v540 = vsel %vm524, %v487, 128
  %v541 = vsel %vm525, %v487, 128
  %v542 = vsel %vm526, %v487, 128
  %v543 = vsel %vm527, %v487, 128
  %v544 = vsel %vm528, %v487, 128
  %v545 = vsel %vm529, %v487, 128
  %v546 = vsel %vm530, %v487, 128
  %v547 = vsel %vm531, %v487, 128
  %v548 = vsel %vm532, %v487, 128
  %v549 = vsel %vm533, %v487, 128
  %v550 = vsel %vm534, %v487, 128
  %v551 = vsel %vm535, %v487, 128
  %v552 = vand.u32 %v536, 65535
  %v553 = vshra.s32 %v536, 16
  %v554 = vcvt.s32.f32 %v552
  %v555 = vcvt.s32.f32 %v553
  %556 = vmin.xlane.f32.xlu0 %v555
  %v557 = vpop.xlane.xlu0 %556
  %vm558 = vcmp.eq.f32.partialorder %v555, %v557
  %v559 = vsel %vm558, %v554, inf
  %560 = vmin.xlane.f32.xlu0 %v559
  %v561 = vpop.xlane.xlu0 %560
  %v562 = vcvt.f32.s32 %v561
  %v563 = vcvt.f32.s32 %v557
  %v564 = vshll.u32 %v563, 16
  %v565 = vadd.s32 %v564, %v562
  %v566 = vand.u32 %v537, 65535
  %v567 = vshra.s32 %v537, 16
  %v568 = vcvt.s32.f32 %v566
  %v569 = vcvt.s32.f32 %v567
  %570 = vmin.xlane.f32.xlu0 %v569
  %v571 = vpop.xlane.xlu0 %570
  %vm572 = vcmp.eq.f32.partialorder %v569, %v571
  %v573 = vsel %vm572, %v568, inf
  %574 = vmin.xlane.f32.xlu0 %v573
  %v575 = vpop.xlane.xlu0 %574
  %v576 = vcvt.f32.s32 %v575
  %v577 = vcvt.f32.s32 %v571
  %v578 = vshll.u32 %v577, 16
  %v579 = vadd.s32 %v578, %v576
  %v580 = vand.u32 %v538, 65535
  %v581 = vshra.s32 %v538, 16
  %v582 = vcvt.s32.f32 %v580
  %v583 = vcvt.s32.f32 %v581
  %584 = vmin.xlane.f32.xlu0 %v583
  %v585 = vpop.xlane.xlu0 %584
  %vm586 = vcmp.eq.f32.partialorder %v583, %v585
  %v587 = vsel %vm586, %v582, inf
  %588 = vmin.xlane.f32.xlu0 %v587
  %v589 = vpop.xlane.xlu0 %588
  %v590 = vcvt.f32.s32 %v589
  %v591 = vcvt.f32.s32 %v585
  %v592 = vshll.u32 %v591, 16
  %v593 = vadd.s32 %v592, %v590
  %v594 = vand.u32 %v539, 65535
  %v595 = vshra.s32 %v539, 16
  %v596 = vcvt.s32.f32 %v594
  %v597 = vcvt.s32.f32 %v595
  %598 = vmin.xlane.f32.xlu0 %v597
  %v599 = vpop.xlane.xlu0 %598
  %vm600 = vcmp.eq.f32.partialorder %v597, %v599
  %v601 = vsel %vm600, %v596, inf
  %602 = vmin.xlane.f32.xlu0 %v601
  %v603 = vpop.xlane.xlu0 %602
  %v604 = vcvt.f32.s32 %v603
  %v605 = vcvt.f32.s32 %v599
  %v606 = vshll.u32 %v605, 16
  %v607 = vadd.s32 %v606, %v604
  %v608 = vand.u32 %v540, 65535
  %v609 = vshra.s32 %v540, 16
  %v610 = vcvt.s32.f32 %v608
  %v611 = vcvt.s32.f32 %v609
  %612 = vmin.xlane.f32.xlu0 %v611
  %v613 = vpop.xlane.xlu0 %612
  %vm614 = vcmp.eq.f32.partialorder %v611, %v613
  %v615 = vsel %vm614, %v610, inf
  %616 = vmin.xlane.f32.xlu0 %v615
  %v617 = vpop.xlane.xlu0 %616
  %v618 = vcvt.f32.s32 %v617
  %v619 = vcvt.f32.s32 %v613
  %v620 = vshll.u32 %v619, 16
  %v621 = vadd.s32 %v620, %v618
  %v622 = vand.u32 %v541, 65535
  %v623 = vshra.s32 %v541, 16
  %v624 = vcvt.s32.f32 %v622
  %v625 = vcvt.s32.f32 %v623
  %626 = vmin.xlane.f32.xlu0 %v625
  %v627 = vpop.xlane.xlu0 %626
  %vm628 = vcmp.eq.f32.partialorder %v625, %v627
  %v629 = vsel %vm628, %v624, inf
  %630 = vmin.xlane.f32.xlu0 %v629
  %v631 = vpop.xlane.xlu0 %630
  %v632 = vcvt.f32.s32 %v631
  %v633 = vcvt.f32.s32 %v627
  %v634 = vshll.u32 %v633, 16
  %v635 = vadd.s32 %v634, %v632
  %v636 = vand.u32 %v542, 65535
  %v637 = vshra.s32 %v542, 16
  %v638 = vcvt.s32.f32 %v636
  %v639 = vcvt.s32.f32 %v637
  %640 = vmin.xlane.f32.xlu0 %v639
  %v641 = vpop.xlane.xlu0 %640
  %vm642 = vcmp.eq.f32.partialorder %v639, %v641
  %v643 = vsel %vm642, %v638, inf
  %644 = vmin.xlane.f32.xlu0 %v643
  %v645 = vpop.xlane.xlu0 %644
  %v646 = vcvt.f32.s32 %v645
  %v647 = vcvt.f32.s32 %v641
  %v648 = vshll.u32 %v647, 16
  %v649 = vadd.s32 %v648, %v646
  %v650 = vand.u32 %v543, 65535
  %v651 = vshra.s32 %v543, 16
  %v652 = vcvt.s32.f32 %v650
  %v653 = vcvt.s32.f32 %v651
  %654 = vmin.xlane.f32.xlu0 %v653
  %v655 = vpop.xlane.xlu0 %654
  %vm656 = vcmp.eq.f32.partialorder %v653, %v655
  %v657 = vsel %vm656, %v652, inf
  %658 = vmin.xlane.f32.xlu0 %v657
  %v659 = vpop.xlane.xlu0 %658
  %v660 = vcvt.f32.s32 %v659
  %v661 = vcvt.f32.s32 %v655
  %v662 = vshll.u32 %v661, 16
  %v663 = vadd.s32 %v662, %v660
  %v664 = vand.u32 %v544, 65535
  %v665 = vshra.s32 %v544, 16
  %v666 = vcvt.s32.f32 %v664
  %v667 = vcvt.s32.f32 %v665
  %668 = vmin.xlane.f32.xlu0 %v667
  %v669 = vpop.xlane.xlu0 %668
  %vm670 = vcmp.eq.f32.partialorder %v667, %v669
  %v671 = vsel %vm670, %v666, inf
  %672 = vmin.xlane.f32.xlu0 %v671
  %v673 = vpop.xlane.xlu0 %672
  %v674 = vcvt.f32.s32 %v673
  %v675 = vcvt.f32.s32 %v669
  %v676 = vshll.u32 %v675, 16
  %v677 = vadd.s32 %v676, %v674
  %v678 = vand.u32 %v545, 65535
  %v679 = vshra.s32 %v545, 16
  %v680 = vcvt.s32.f32 %v678
  %v681 = vcvt.s32.f32 %v679
  %682 = vmin.xlane.f32.xlu0 %v681
  %v683 = vpop.xlane.xlu0 %682
  %vm684 = vcmp.eq.f32.partialorder %v681, %v683
  %v685 = vsel %vm684, %v680, inf
  %686 = vmin.xlane.f32.xlu0 %v685
  %v687 = vpop.xlane.xlu0 %686
  %v688 = vcvt.f32.s32 %v687
  %v689 = vcvt.f32.s32 %v683
  %v690 = vshll.u32 %v689, 16
  %v691 = vadd.s32 %v690, %v688
  %v692 = vand.u32 %v546, 65535
  %v693 = vshra.s32 %v546, 16
  %v694 = vcvt.s32.f32 %v692
  %v695 = vcvt.s32.f32 %v693
  %696 = vmin.xlane.f32.xlu0 %v695
  %v697 = vpop.xlane.xlu0 %696
  %vm698 = vcmp.eq.f32.partialorder %v695, %v697
  %v699 = vsel %vm698, %v694, inf
  %700 = vmin.xlane.f32.xlu0 %v699
  %v701 = vpop.xlane.xlu0 %700
  %v702 = vcvt.f32.s32 %v701
  %v703 = vcvt.f32.s32 %v697
  %v704 = vshll.u32 %v703, 16
  %v705 = vadd.s32 %v704, %v702
  %v706 = vand.u32 %v547, 65535
  %v707 = vshra.s32 %v547, 16
  %v708 = vcvt.s32.f32 %v706
  %v709 = vcvt.s32.f32 %v707
  %710 = vmin.xlane.f32.xlu0 %v709
  %v711 = vpop.xlane.xlu0 %710
  %vm712 = vcmp.eq.f32.partialorder %v709, %v711
  %v713 = vsel %vm712, %v708, inf
  %714 = vmin.xlane.f32.xlu0 %v713
  %v715 = vpop.xlane.xlu0 %714
  %v716 = vcvt.f32.s32 %v715
  %v717 = vcvt.f32.s32 %v711
  %v718 = vshll.u32 %v717, 16
  %v719 = vadd.s32 %v718, %v716
  %v720 = vand.u32 %v548, 65535
  %v721 = vshra.s32 %v548, 16
  %v722 = vcvt.s32.f32 %v720
  %v723 = vcvt.s32.f32 %v721
  %724 = vmin.xlane.f32.xlu0 %v723
  %v725 = vpop.xlane.xlu0 %724
  %vm726 = vcmp.eq.f32.partialorder %v723, %v725
  %v727 = vsel %vm726, %v722, inf
  %728 = vmin.xlane.f32.xlu0 %v727
  %v729 = vpop.xlane.xlu0 %728
  %v730 = vcvt.f32.s32 %v729
  %v731 = vcvt.f32.s32 %v725
  %v732 = vshll.u32 %v731, 16
  %v733 = vadd.s32 %v732, %v730
  %v734 = vand.u32 %v549, 65535
  %v735 = vshra.s32 %v549, 16
  %v736 = vcvt.s32.f32 %v734
  %v737 = vcvt.s32.f32 %v735
  %738 = vmin.xlane.f32.xlu0 %v737
  %v739 = vpop.xlane.xlu0 %738
  %vm740 = vcmp.eq.f32.partialorder %v737, %v739
  %v741 = vsel %vm740, %v736, inf
  %742 = vmin.xlane.f32.xlu0 %v741
  %v743 = vpop.xlane.xlu0 %742
  %v744 = vcvt.f32.s32 %v743
  %v745 = vcvt.f32.s32 %v739
  %v746 = vshll.u32 %v745, 16
  %v747 = vadd.s32 %v746, %v744
  %v748 = vand.u32 %v550, 65535
  %v749 = vshra.s32 %v550, 16
  %v750 = vcvt.s32.f32 %v748
  %v751 = vcvt.s32.f32 %v749
  %752 = vmin.xlane.f32.xlu0 %v751
  %v753 = vpop.xlane.xlu0 %752
  %vm754 = vcmp.eq.f32.partialorder %v751, %v753
  %v755 = vsel %vm754, %v750, inf
  %756 = vmin.xlane.f32.xlu0 %v755
  %v757 = vpop.xlane.xlu0 %756
  %v758 = vcvt.f32.s32 %v757
  %v759 = vcvt.f32.s32 %v753
  %v760 = vshll.u32 %v759, 16
  %v761 = vadd.s32 %v760, %v758
  %v762 = vand.u32 %v551, 65535
  %v763 = vshra.s32 %v551, 16
  %v764 = vcvt.s32.f32 %v762
  %v765 = vcvt.s32.f32 %v763
  %766 = vmin.xlane.f32.xlu0 %v765
  %v767 = vpop.xlane.xlu0 %766
  %vm768 = vcmp.eq.f32.partialorder %v765, %v767
  %v769 = vsel %vm768, %v764, inf
  %770 = vmin.xlane.f32.xlu0 %v769
  %v771 = vpop.xlane.xlu0 %770
  %v772 = vcvt.f32.s32 %v771
  %v773 = vcvt.f32.s32 %v767
  %v774 = vshll.u32 %v773, 16
  %v775 = vadd.s32 %v774, %v772
  %vm776 = vcmp.eq.s32.totalorder %v487, %v565
  %vm777 = vcmp.eq.s32.totalorder %v487, %v579
  %vm778 = vcmp.eq.s32.totalorder %v487, %v593
  %vm779 = vcmp.eq.s32.totalorder %v487, %v607
  %vm780 = vcmp.eq.s32.totalorder %v487, %v621
  %vm781 = vcmp.eq.s32.totalorder %v487, %v635
  %vm782 = vcmp.eq.s32.totalorder %v487, %v649
  %vm783 = vcmp.eq.s32.totalorder %v487, %v663
  %vm784 = vcmp.eq.s32.totalorder %v487, %v677
  %vm785 = vcmp.eq.s32.totalorder %v487, %v691
  %vm786 = vcmp.eq.s32.totalorder %v487, %v705
  %vm787 = vcmp.eq.s32.totalorder %v487, %v719
  %vm788 = vcmp.eq.s32.totalorder %v487, %v733
  %vm789 = vcmp.eq.s32.totalorder %v487, %v747
  %vm790 = vcmp.eq.s32.totalorder %v487, %v761
  %vm791 = vcmp.eq.s32.totalorder %v487, %v775
  %v792 = vsel %vm776, 1, 0
  %v793 = vsel %vm777, 1, 0
  %v794 = vsel %vm778, 1, 0
  %v795 = vsel %vm779, 1, 0
  %v796 = vsel %vm780, 1, 0
  %v797 = vsel %vm781, 1, 0
  %v798 = vsel %vm782, 1, 0
  %v799 = vsel %vm783, 1, 0
  %v800 = vsel %vm784, 1, 0
  %v801 = vsel %vm785, 1, 0
  %v802 = vsel %vm786, 1, 0
  %v803 = vsel %vm787, 1, 0
  %v804 = vsel %vm788, 1, 0
  %v805 = vsel %vm789, 1, 0
  %v806 = vsel %vm790, 1, 0
  %v807 = vsel %vm791, 1, 0
  %v808 = vcvt.s32.f32 %v792
  %v809 = vcvt.s32.f32 %v793
  %v810 = vcvt.s32.f32 %v794
  %v811 = vcvt.s32.f32 %v795
  %v812 = vcvt.s32.f32 %v796
  %v813 = vcvt.s32.f32 %v797
  %v814 = vcvt.s32.f32 %v798
  %v815 = vcvt.s32.f32 %v799
  %v816 = vcvt.s32.f32 %v800
  %v817 = vcvt.s32.f32 %v801
  %v818 = vcvt.s32.f32 %v802
  %v819 = vcvt.s32.f32 %v803
  %v820 = vcvt.s32.f32 %v804
  %v821 = vcvt.s32.f32 %v805
  %v822 = vcvt.s32.f32 %v806
  %v823 = vcvt.s32.f32 %v807
  %v824 = vld [vmem:[%s5] sm:$0xff]
  %v825 = vld [vmem:[%s5 + $0x8] sm:$0xff]
  %v826 = vld [vmem:[%s5 + $0x10] sm:$0xff]
  %v827 = vld [vmem:[%s5 + $0x18] sm:$0xff]
  %v828 = vld [vmem:[%s5 + $0x20] sm:$0xff]
  %v829 = vld [vmem:[%s5 + $0x28] sm:$0xff]
  %v830 = vld [vmem:[%s5 + $0x30] sm:$0xff]
  %v831 = vld [vmem:[%s5 + $0x38] sm:$0xff]
  %v832 = vld [vmem:[%s5 + $0x40] sm:$0xff]
  %v833 = vld [vmem:[%s5 + $0x48] sm:$0xff]
  %v834 = vld [vmem:[%s5 + $0x50] sm:$0xff]
  %v835 = vld [vmem:[%s5 + $0x58] sm:$0xff]
  %v836 = vld [vmem:[%s5 + $0x60] sm:$0xff]
  %v837 = vld [vmem:[%s5 + $0x68] sm:$0xff]
  %v838 = vld [vmem:[%s5 + $0x70] sm:$0xff]
  %v839 = vld [vmem:[%s5 + $0x78] sm:$0xff]
  %v840 = vld [vmem:[%s6] sm:$0x1]
  %v842 = vlaneseq
  %v843 = vshrl.u32 %v842, 7
  %v844 = vsub.s32 0, %v843
  %v845 = vrot.slane %v840, %v844
  %847 = vmatprep.subr.mxu0 0.0
  %848 = vmatpush1.msra.mxu0 %v824
  %849 = vmatprep.subr.mxu0 0.0
  %850 = vmatpush1.msra.mxu0 %v825
  %851 = vmatprep.subr.mxu0 0.0
  %852 = vmatpush1.msra.mxu0 %v826
  %853 = vmatprep.subr.mxu0 0.0
  %854 = vmatpush1.msra.mxu0 %v827
  %855 = vmatprep.subr.mxu0 0.0
  %856 = vmatpush1.msra.mxu0 %v828
  %857 = vmatprep.subr.mxu0 0.0
  %858 = vmatpush1.msra.mxu0 %v829
  %859 = vmatprep.subr.mxu0 0.0
  %860 = vmatpush1.msra.mxu0 %v830
  %861 = vmatprep.subr.mxu0 0.0
  %862 = vmatpush1.msra.mxu0 %v831
  %863 = vmatprep.subr.mxu0 0.0
  %864 = vmatpush1.msra.mxu0 %v832
  %865 = vmatprep.subr.mxu0 0.0
  %866 = vmatpush1.msra.mxu0 %v833
  %867 = vmatprep.subr.mxu0 0.0
  %868 = vmatpush1.msra.mxu0 %v834
  %869 = vmatprep.subr.mxu0 0.0
  %870 = vmatpush1.msra.mxu0 %v835
  %871 = vmatprep.subr.mxu0 0.0
  %872 = vmatpush1.msra.mxu0 %v836
  %873 = vmatprep.subr.mxu0 0.0
  %874 = vmatpush1.msra.mxu0 %v837
  %875 = vmatprep.subr.mxu0 0.0
  %876 = vmatpush1.msra.mxu0 %v838
  %877 = vmatprep.subr.mxu0 0.0
  %878 = vmatpush1.msra.mxu0 %v839
  %879 = vmatprep.subr.mxu0 0.0
  %880 = vmatpush1.msra.mxu0 0.0
  %881 = vmatprep.subr.mxu0 0.0
  %882 = vmatpush1.msra.mxu0 0.0
  %883 = vmatprep.subr.mxu0 0.0
  %884 = vmatpush1.msra.mxu0 0.0
  %885 = vmatprep.subr.mxu0 0.0
  %886 = vmatpush1.msra.mxu0 0.0
  %887 = vmatprep.subr.mxu0 0.0
  %888 = vmatpush1.msra.mxu0 0.0
  %889 = vmatprep.subr.mxu0 0.0
  %890 = vmatpush1.msra.mxu0 0.0
  %891 = vmatprep.subr.mxu0 0.0
  %892 = vmatpush1.msra.mxu0 0.0
  %893 = vmatprep.subr.mxu0 0.0
  %894 = vmatpush1.msra.mxu0 0.0
  %895 = vmatprep.subr.mxu0 0.0
  %896 = vmatpush1.msra.mxu0 0.0
  %897 = vmatprep.subr.mxu0 0.0
  %898 = vmatpush1.msra.mxu0 0.0
  %899 = vmatprep.subr.mxu0 0.0
  %900 = vmatpush1.msra.mxu0 0.0
  %901 = vmatprep.subr.mxu0 0.0
  %902 = vmatpush1.msra.mxu0 0.0
  %903 = vmatprep.subr.mxu0 0.0
  %904 = vmatpush1.msra.mxu0 0.0
  %905 = vmatprep.subr.mxu0 0.0
  %906 = vmatpush1.msra.mxu0 0.0
  %907 = vmatprep.subr.mxu0 0.0
  %908 = vmatpush1.msra.mxu0 0.0
  %909 = vmatprep.subr.mxu0 0.0
  %910 = vmatpush1.msra.mxu0 0.0
  %911 = vmatprep.mubr.f32.mxu0 0.0
  %912 = vmatmul.mubr.f32.gmra.mrb[0].mxu0 %v808
  %v913 = vpop.f32.mrb[0].mxu0
  %v914 = vadd.f32 %v845, %v913
  %v915 = vpop.f32.mrb[0].mxu0
  %916 = vmatprep.mubr.f32.mxu0 0.0
  %917 = vmatmul.mubr.f32.gmra.mrb[0].mxu0 %v809
  %v918 = vpop.f32.mrb[0].mxu0
  %v919 = vadd.f32 %v845, %v918
  %v920 = vpop.f32.mrb[0].mxu0
  %921 = vmatprep.mubr.f32.mxu0 0.0
  %922 = vmatmul.mubr.f32.gmra.mrb[0].mxu0 %v810
  %v923 = vpop.f32.mrb[0].mxu0
  %v924 = vadd.f32 %v845, %v923
  %v925 = vpop.f32.mrb[0].mxu0
  %926 = vmatprep.mubr.f32.mxu0 0.0
  %927 = vmatmul.mubr.f32.gmra.mrb[0].mxu0 %v811
  %v928 = vpop.f32.mrb[0].mxu0
  %v929 = vadd.f32 %v845, %v928
  %v930 = vpop.f32.mrb[0].mxu0
  %931 = vmatprep.mubr.f32.mxu0 0.0
  %932 = vmatmul.mubr.f32.gmra.mrb[0].mxu0 %v812
  %v933 = vpop.f32.mrb[0].mxu0
  %v934 = vadd.f32 %v845, %v933
  %v935 = vpop.f32.mrb[0].mxu0
  %936 = vmatprep.mubr.f32.mxu0 0.0
  %937 = vmatmul.mubr.f32.gmra.mrb[0].mxu0 %v813
  %v938 = vpop.f32.mrb[0].mxu0
  %v939 = vadd.f32 %v845, %v938
  %v940 = vpop.f32.mrb[0].mxu0
  %941 = vmatprep.mubr.f32.mxu0 0.0
  %942 = vmatmul.mubr.f32.gmra.mrb[0].mxu0 %v814
  %v943 = vpop.f32.mrb[0].mxu0
  %v944 = vadd.f32 %v845, %v943
  %v945 = vpop.f32.mrb[0].mxu0
  %946 = vmatprep.mubr.f32.mxu0 0.0
  %947 = vmatmul.mubr.f32.gmra.mrb[0].mxu0 %v815
  %v948 = vpop.f32.mrb[0].mxu0
  %v949 = vadd.f32 %v845, %v948
  %v950 = vpop.f32.mrb[0].mxu0
  %951 = vmatprep.mubr.f32.mxu0 0.0
  %952 = vmatmul.mubr.f32.gmra.mrb[0].mxu0 %v816
  %v953 = vpop.f32.mrb[0].mxu0
  %v954 = vadd.f32 %v845, %v953
  %v955 = vpop.f32.mrb[0].mxu0
  %956 = vmatprep.mubr.f32.mxu0 0.0
  %957 = vmatmul.mubr.f32.gmra.mrb[0].mxu0 %v817
  %v958 = vpop.f32.mrb[0].mxu0
  %v959 = vadd.f32 %v845, %v958
  %v960 = vpop.f32.mrb[0].mxu0
  %961 = vmatprep.mubr.f32.mxu0 0.0
  %962 = vmatmul.mubr.f32.gmra.mrb[0].mxu0 %v818
  %v963 = vpop.f32.mrb[0].mxu0
  %v964 = vadd.f32 %v845, %v963
  %v965 = vpop.f32.mrb[0].mxu0
  %966 = vmatprep.mubr.f32.mxu0 0.0
  %967 = vmatmul.mubr.f32.gmra.mrb[0].mxu0 %v819
  %v968 = vpop.f32.mrb[0].mxu0
  %v969 = vadd.f32 %v845, %v968
  %v970 = vpop.f32.mrb[0].mxu0
  %971 = vmatprep.mubr.f32.mxu0 0.0
  %972 = vmatmul.mubr.f32.gmra.mrb[0].mxu0 %v820
  %v973 = vpop.f32.mrb[0].mxu0
  %v974 = vadd.f32 %v845, %v973
  %v975 = vpop.f32.mrb[0].mxu0
  %976 = vmatprep.mubr.f32.mxu0 0.0
  %977 = vmatmul.mubr.f32.gmra.mrb[0].mxu0 %v821
  %v978 = vpop.f32.mrb[0].mxu0
  %v979 = vadd.f32 %v845, %v978
  %v980 = vpop.f32.mrb[0].mxu0
  %981 = vmatprep.mubr.f32.mxu0 0.0
  %982 = vmatmul.mubr.f32.gmra.mrb[0].mxu0 %v822
  %v983 = vpop.f32.mrb[0].mxu0
  %v984 = vadd.f32 %v845, %v983
  %v985 = vpop.f32.mrb[0].mxu0
  %986 = vmatprep.mubr.f32.mxu0 0.0
  %987 = vmatmul.mubr.f32.gmra.mrb[0].mxu0 %v823
  %v988 = vpop.f32.mrb[0].mxu0
  %v989 = vadd.f32 %v845, %v988
  %v990 = vpop.f32.mrb[0].mxu0
  %991 = vdwg.mxu0
  %992 = vst.msk [vmem:[%s7] sm:$0xff] %vm53, %v914
  %993 = vst.msk [vmem:[%s7 + $0x8] sm:$0xff] %vm53, %v919
  %994 = vst.msk [vmem:[%s7 + $0x10] sm:$0xff] %vm53, %v924
  %995 = vst.msk [vmem:[%s7 + $0x18] sm:$0xff] %vm53, %v929
  %996 = vst.msk [vmem:[%s7 + $0x20] sm:$0xff] %vm53, %v934
  %997 = vst.msk [vmem:[%s7 + $0x28] sm:$0xff] %vm53, %v939
  %998 = vst.msk [vmem:[%s7 + $0x30] sm:$0xff] %vm53, %v944
  %999 = vst.msk [vmem:[%s7 + $0x38] sm:$0xff] %vm53, %v949
  %1000 = vst.msk [vmem:[%s7 + $0x40] sm:$0xff] %vm53, %v954
  %1001 = vst.msk [vmem:[%s7 + $0x48] sm:$0xff] %vm53, %v959
  %1002 = vst.msk [vmem:[%s7 + $0x50] sm:$0xff] %vm53, %v964
  %1003 = vst.msk [vmem:[%s7 + $0x58] sm:$0xff] %vm53, %v969
  %1004 = vst.msk [vmem:[%s7 + $0x60] sm:$0xff] %vm53, %v974
  %1005 = vst.msk [vmem:[%s7 + $0x68] sm:$0xff] %vm53, %v979
  %1006 = vst.msk [vmem:[%s7 + $0x70] sm:$0xff] %vm53, %v984
  %1007 = vst.msk [vmem:[%s7 + $0x78] sm:$0xff] %vm53, %v989
  // Predicated region
  $region30: #{vqvae_forward.13} parent=0 // pred_check
    _
  $region31: #{vqvae_forward.13} parent=0 // pred_check_branch
    %1009 = sbr.rel (0) target = $region33
  $region32: #{vqvae_forward.13} parent=0 // pred_region
    _
  $region33: #{vqvae_forward.13} parent=0 // pred_fallthru
    _
  // Predicated region
  $region34: #{vqvae_forward.13} parent=0 // pred_check
    _
  $region35: #{vqvae_forward.13} parent=0 // pred_check_branch
    %1011 = sbr.rel (0) target = $region37
  $region36: #{vqvae_forward.13} parent=0 // pred_region
    _
  $region37: #{vqvae_forward.13} parent=0 // pred_fallthru
    _

// kernel: vqvae_forward.16
$region0: #{vqvae_forward.16}
  #allocation0 [shape = 'u32[]', space=smem, size = 0x4, offset = 0x4, fixed_abs, tag = 'smem constant byte address 0x4 - core index']
  #allocation1 [shape = 'u32[144,128]{1,0:T(1,128)}', space=vmem, size = 0x12000, scoped, tag = 'internal scratch']
  %s0 = inlined_call_operand.vmem [shape: bf16[128,288], index: 0, kind: input, shape index: {}]
  %s1 = inlined_call_operand.vmem [shape: bf16[288,128], index: 1, kind: input, shape index: {}]
  %s2 = inlined_call_operand.vmem [shape: f32[1,128], index: 2, kind: input, shape index: {}]
  %s3 = inlined_call_operand.vmem [shape: f32[128,128], index: 3, kind: output, shape index: {}]
  %s4 = sld [smem:[#allocation0]]
  $region22: #{vqvae_forward.16} parent=0
    _
  %s6 = ssub.s32 1, %s4
  %s7 = scalar_select 0, %s6, %s4
  // Predicated region
  $region2: #{vqvae_forward.16} parent=0 // pred_check
    _
  $region3: #{vqvae_forward.16} parent=0 // pred_check_branch
    %9 = sbr.rel (0) target = $region5
  $region4: #{vqvae_forward.16} parent=0 // pred_region
    _
  $region5: #{vqvae_forward.16} parent=0 // pred_fallthru
    _
  // Predicated region
  $region6: #{vqvae_forward.16} parent=0 // pred_check
    _
  $region7: #{vqvae_forward.16} parent=0 // pred_check_branch
    %11 = sbr.rel (0) target = $region9
  $region8: #{vqvae_forward.16} parent=0 // pred_region
    _
  $region9: #{vqvae_forward.16} parent=0 // pred_fallthru
    _
  // Predicated region
  $region10: #{vqvae_forward.16} parent=0 // pred_check
    _
  $region11: #{vqvae_forward.16} parent=0 // pred_check_branch
    %13 = sbr.rel (0) target = $region13
  $region12: #{vqvae_forward.16} parent=0 // pred_region
    _
  $region13: #{vqvae_forward.16} parent=0 // pred_fallthru
    _
  %v15 = vld [vmem:[%s0] sm:$0xff]
  %v16 = vld [vmem:[%s0 + $0x8] sm:$0xf]
  %v17 = vld [vmem:[%s0 + $0xc] sm:$0xff]
  %v18 = vld [vmem:[%s0 + $0x14] sm:$0xf]
  %v19 = vld [vmem:[%s0 + $0x18] sm:$0xff]
  %v20 = vld [vmem:[%s0 + $0x20] sm:$0xf]
  %v21 = vld [vmem:[%s0 + $0x24] sm:$0xff]
  %v22 = vld [vmem:[%s0 + $0x2c] sm:$0xf]
  %v23 = vld [vmem:[%s0 + $0x30] sm:$0xff]
  %v24 = vld [vmem:[%s0 + $0x38] sm:$0xf]
  %v25 = vld [vmem:[%s0 + $0x3c] sm:$0xff]
  %v26 = vld [vmem:[%s0 + $0x44] sm:$0xf]
  %v27 = vld [vmem:[%s0 + $0x48] sm:$0xff]
  %v28 = vld [vmem:[%s0 + $0x50] sm:$0xf]
  %v29 = vld [vmem:[%s0 + $0x54] sm:$0xff]
  %v30 = vld [vmem:[%s0 + $0x5c] sm:$0xf]
  %v31 = vld [vmem:[%s0 + $0x60] sm:$0xff]
  %v32 = vld [vmem:[%s0 + $0x68] sm:$0xf]
  %v33 = vld [vmem:[%s0 + $0x6c] sm:$0xff]
  %v34 = vld [vmem:[%s0 + $0x74] sm:$0xf]
  %v35 = vld [vmem:[%s0 + $0x78] sm:$0xff]
  %v36 = vld [vmem:[%s0 + $0x80] sm:$0xf]
  %v37 = vld [vmem:[%s0 + $0x84] sm:$0xff]
  %v38 = vld [vmem:[%s0 + $0x8c] sm:$0xf]
  %v39 = vld [vmem:[%s0 + $0x90] sm:$0xff]
  %v40 = vld [vmem:[%s0 + $0x98] sm:$0xf]
  %v41 = vld [vmem:[%s0 + $0x9c] sm:$0xff]
  %v42 = vld [vmem:[%s0 + $0xa4] sm:$0xf]
  %v43 = vld [vmem:[%s0 + $0xa8] sm:$0xff]
  %v44 = vld [vmem:[%s0 + $0xb0] sm:$0xf]
  %v45 = vld [vmem:[%s0 + $0xb4] sm:$0xff]
  %v46 = vld [vmem:[%s0 + $0xbc] sm:$0xf]
  %v47 = vld [vmem:[%s1] sm:$0xf]
  %v48 = vld [vmem:[%s1 + $0x4] sm:$0xf]
  %v49 = vld [vmem:[%s1 + $0x8] sm:$0xf]
  %v50 = vld [vmem:[%s1 + $0xc] sm:$0xf]
  %v51 = vld [vmem:[%s1 + $0x10] sm:$0xf]
  %v52 = vld [vmem:[%s1 + $0x14] sm:$0xf]
  %v53 = vld [vmem:[%s1 + $0x18] sm:$0xf]
  %v54 = vld [vmem:[%s1 + $0x1c] sm:$0xf]
  %v55 = vld [vmem:[%s1 + $0x20] sm:$0xf]
  %v56 = vld [vmem:[%s1 + $0x24] sm:$0xf]
  %v57 = vld [vmem:[%s1 + $0x28] sm:$0xf]
  %v58 = vld [vmem:[%s1 + $0x2c] sm:$0xf]
  %v59 = vld [vmem:[%s1 + $0x30] sm:$0xf]
  %v60 = vld [vmem:[%s1 + $0x34] sm:$0xf]
  %v61 = vld [vmem:[%s1 + $0x38] sm:$0xf]
  %v62 = vld [vmem:[%s1 + $0x3c] sm:$0xf]
  %v63 = vld [vmem:[%s1 + $0x40] sm:$0xf]
  %v64 = vld [vmem:[%s1 + $0x44] sm:$0xf]
  %v65 = vld [vmem:[%s1 + $0x48] sm:$0xf]
  %v66 = vld [vmem:[%s1 + $0x4c] sm:$0xf]
  %v67 = vld [vmem:[%s1 + $0x50] sm:$0xf]
  %v68 = vld [vmem:[%s1 + $0x54] sm:$0xf]
  %v69 = vld [vmem:[%s1 + $0x58] sm:$0xf]
  %v70 = vld [vmem:[%s1 + $0x5c] sm:$0xf]
  %v71 = vld [vmem:[%s1 + $0x60] sm:$0xf]
  %v72 = vld [vmem:[%s1 + $0x64] sm:$0xf]
  %v73 = vld [vmem:[%s1 + $0x68] sm:$0xf]
  %v74 = vld [vmem:[%s1 + $0x6c] sm:$0xf]
  %v75 = vld [vmem:[%s1 + $0x70] sm:$0xf]
  %v76 = vld [vmem:[%s1 + $0x74] sm:$0xf]
  %v77 = vld [vmem:[%s1 + $0x78] sm:$0xf]
  %v78 = vld [vmem:[%s1 + $0x7c] sm:$0xf]
  %v79 = vld [vmem:[%s1 + $0x80] sm:$0xf]
  %v80 = vld [vmem:[%s1 + $0x84] sm:$0xf]
  %v81 = vld [vmem:[%s1 + $0x88] sm:$0xf]
  %v82 = vld [vmem:[%s1 + $0x8c] sm:$0xf]
  %v83 = vld [vmem:[%s2] sm:$0x1]
  %v85 = vlaneseq
  %v86 = vshrl.u32 %v85, 7
  %v87 = vsub.s32 0, %v86
  %v88 = vrot.slane %v83, %v87
  %v122 = vunpack.c.l.b16 %v15
  %v123 = vunpack.c.h.b16 %v15
  %v124 = vunpack.c.l.b16 %v16
  %v125 = vunpack.c.l.b16 %v17
  %v126 = vunpack.c.h.b16 %v17
  %v127 = vunpack.c.l.b16 %v18
  %v128 = vunpack.c.l.b16 %v19
  %v129 = vunpack.c.h.b16 %v19
  %v130 = vunpack.c.l.b16 %v20
  %v131 = vunpack.c.l.b16 %v21
  %v132 = vunpack.c.h.b16 %v21
  %v133 = vunpack.c.l.b16 %v22
  %v134 = vunpack.c.l.b16 %v23
  %v135 = vunpack.c.h.b16 %v23
  %v136 = vunpack.c.l.b16 %v24
  %v137 = vunpack.c.l.b16 %v25
  %v138 = vunpack.c.h.b16 %v25
  %v139 = vunpack.c.l.b16 %v26
  %v140 = vunpack.c.l.b16 %v27
  %v141 = vunpack.c.h.b16 %v27
  %v142 = vunpack.c.l.b16 %v28
  %v143 = vunpack.c.l.b16 %v29
  %v144 = vunpack.c.h.b16 %v29
  %v145 = vunpack.c.l.b16 %v30
  %v146 = vunpack.c.l.b16 %v31
  %v147 = vunpack.c.h.b16 %v31
  %v148 = vunpack.c.l.b16 %v32
  %v149 = vunpack.c.l.b16 %v33
  %v150 = vunpack.c.h.b16 %v33
  %v151 = vunpack.c.l.b16 %v34
  %v152 = vunpack.c.l.b16 %v35
  %v153 = vunpack.c.h.b16 %v35
  %v154 = vunpack.c.l.b16 %v36
  %v155 = vunpack.c.l.b16 %v37
  %v156 = vunpack.c.h.b16 %v37
  %v157 = vunpack.c.l.b16 %v38
  %v158 = vunpack.c.l.b16 %v39
  %v159 = vunpack.c.h.b16 %v39
  %v160 = vunpack.c.l.b16 %v40
  %v161 = vunpack.c.l.b16 %v41
  %v162 = vunpack.c.h.b16 %v41
  %v163 = vunpack.c.l.b16 %v42
  %v164 = vunpack.c.l.b16 %v43
  %v165 = vunpack.c.h.b16 %v43
  %v166 = vunpack.c.l.b16 %v44
  %v167 = vunpack.c.l.b16 %v45
  %v168 = vunpack.c.h.b16 %v45
  %v169 = vunpack.c.l.b16 %v46
  %v170 = vpack.c.b16 %v125, %v122
  %v171 = vpack.c.b16 %v126, %v123
  %v172 = vpack.c.b16 %v127, %v124
  %v173 = vpack.c.b16 %v131, %v128
  %v174 = vpack.c.b16 %v132, %v129
  %v175 = vpack.c.b16 %v133, %v130
  %v176 = vpack.c.b16 %v137, %v134
  %v177 = vpack.c.b16 %v138, %v135
  %v178 = vpack.c.b16 %v139, %v136
  %v179 = vpack.c.b16 %v143, %v140
  %v180 = vpack.c.b16 %v144, %v141
  %v181 = vpack.c.b16 %v145, %v142
  %v182 = vpack.c.b16 %v149, %v146
  %v183 = vpack.c.b16 %v150, %v147
  %v184 = vpack.c.b16 %v151, %v148
  %v185 = vpack.c.b16 %v155, %v152
  %v186 = vpack.c.b16 %v156, %v153
  %v187 = vpack.c.b16 %v157, %v154
  %v188 = vpack.c.b16 %v161, %v158
  %v189 = vpack.c.b16 %v162, %v159
  %v190 = vpack.c.b16 %v163, %v160
  %v191 = vpack.c.b16 %v167, %v164
  %v192 = vpack.c.b16 %v168, %v165
  %v193 = vpack.c.b16 %v169, %v166
  %v246 = vunpack.c.l.b16 %v47
  %v247 = vunpack.c.l.b16 %v48
  %v248 = vunpack.c.l.b16 %v49
  %v249 = vunpack.c.l.b16 %v50
  %v250 = vunpack.c.l.b16 %v51
  %v251 = vunpack.c.l.b16 %v52
  %v252 = vunpack.c.l.b16 %v53
  %v253 = vunpack.c.l.b16 %v54
  %v254 = vunpack.c.l.b16 %v55
  %v255 = vunpack.c.l.b16 %v56
  %v256 = vunpack.c.l.b16 %v57
  %v257 = vunpack.c.l.b16 %v58
  %v258 = vunpack.c.l.b16 %v59
  %v259 = vunpack.c.l.b16 %v60
  %v260 = vunpack.c.l.b16 %v61
  %v261 = vunpack.c.l.b16 %v62
  %v262 = vunpack.c.l.b16 %v63
  %v263 = vunpack.c.l.b16 %v64
  %v264 = vunpack.c.l.b16 %v65
  %v265 = vunpack.c.l.b16 %v66
  %v266 = vunpack.c.l.b16 %v67
  %v267 = vunpack.c.l.b16 %v68
  %v268 = vunpack.c.l.b16 %v69
  %v269 = vunpack.c.l.b16 %v70
  %v270 = vunpack.c.l.b16 %v71
  %v271 = vunpack.c.l.b16 %v72
  %v272 = vunpack.c.l.b16 %v73
  %v273 = vunpack.c.l.b16 %v74
  %v274 = vunpack.c.l.b16 %v75
  %v275 = vunpack.c.l.b16 %v76
  %v276 = vunpack.c.l.b16 %v77
  %v277 = vunpack.c.l.b16 %v78
  %v278 = vunpack.c.l.b16 %v79
  %v279 = vunpack.c.l.b16 %v80
  %v280 = vunpack.c.l.b16 %v81
  %v281 = vunpack.c.l.b16 %v82
  %v282 = vpack.c.b16 %v247, %v246
  %v283 = vpack.c.b16 %v249, %v248
  %v284 = vpack.c.b16 %v251, %v250
  %v285 = vpack.c.b16 %v253, %v252
  %v286 = vpack.c.b16 %v255, %v254
  %v287 = vpack.c.b16 %v257, %v256
  %v288 = vpack.c.b16 %v259, %v258
  %v289 = vpack.c.b16 %v261, %v260
  %v290 = vpack.c.b16 %v263, %v262
  %v291 = vpack.c.b16 %v265, %v264
  %v292 = vpack.c.b16 %v267, %v266
  %v293 = vpack.c.b16 %v269, %v268
  %v294 = vpack.c.b16 %v271, %v270
  %v295 = vpack.c.b16 %v273, %v272
  %v296 = vpack.c.b16 %v275, %v274
  %v297 = vpack.c.b16 %v277, %v276
  %v298 = vpack.c.b16 %v279, %v278
  %v299 = vpack.c.b16 %v281, %v280
  %vm318 = vcmask 261120
  %v320 = vsel %vm318, %v172, 0
  %v323 = vsel %vm318, %v175, 0
  %v326 = vsel %vm318, %v178, 0
  %v329 = vsel %vm318, %v181, 0
  %v332 = vsel %vm318, %v184, 0
  %v335 = vsel %vm318, %v187, 0
  %v338 = vsel %vm318, %v190, 0
  %v341 = vsel %vm318, %v193, 0
  %343 = vmatprep.subr.bf16.mxu0 0
  %344 = vmatpush1.bf16.msra.mxu0 %v282
  %345 = vmatprep.subr.bf16.mxu0 0
  %346 = vmatpush1.bf16.msra.mxu0 %v283
  %347 = vmatprep.subr.bf16.mxu0 0
  %348 = vmatpush1.bf16.msra.mxu0 %v284
  %349 = vmatprep.subr.bf16.mxu0 0
  %350 = vmatpush1.bf16.msra.mxu0 %v285
  %351 = vmatprep.subr.bf16.mxu0 0
  %352 = vmatpush1.bf16.msra.mxu0 %v286
  %353 = vmatprep.subr.bf16.mxu0 0
  %354 = vmatpush1.bf16.msra.mxu0 %v287
  %355 = vmatprep.subr.bf16.mxu0 0
  %356 = vmatpush1.bf16.msra.mxu0 %v288
  %357 = vmatprep.subr.bf16.mxu0 0
  %358 = vmatpush1.bf16.msra.mxu0 %v289
  %359 = vmatprep.subr.bf16.mxu0 0
  %360 = vmatpush1.bf16.msra.mxu0 %v290
  %361 = vmatprep.subr.bf16.mxu0 0
  %362 = vmatpush1.bf16.msra.mxu0 %v291
  %363 = vmatprep.subr.bf16.mxu0 0
  %364 = vmatpush1.bf16.msra.mxu0 %v292
  %365 = vmatprep.subr.bf16.mxu0 0
  %366 = vmatpush1.bf16.msra.mxu0 %v293
  %367 = vmatprep.subr.bf16.mxu0 0
  %368 = vmatpush1.bf16.msra.mxu0 %v294
  %369 = vmatprep.subr.bf16.mxu0 0
  %370 = vmatpush1.bf16.msra.mxu0 %v295
  %371 = vmatprep.subr.bf16.mxu0 0
  %372 = vmatpush1.bf16.msra.mxu0 %v296
  %373 = vmatprep.subr.bf16.mxu0 0
  %374 = vmatpush1.bf16.msra.mxu0 %v297
  %375 = vmatprep.mubr.bf16.mxu0 %v171
  %376 = vmatmul.mubr.bf16.gmra.mrb[0].mxu0 %v170
  %v377 = vpop.f32.mrb[0].mxu0
  %v378 = vadd.f32 %v88, %v377
  %v379 = vpop.f32.mrb[0].mxu0
  %v380 = vpop.f32.mrb[0].mxu0
  %v381 = vadd.f32 %v88, %v380
  %v382 = vpop.f32.mrb[0].mxu0
  %383 = vmatprep.mubr.bf16.mxu0 %v174
  %384 = vmatmul.mubr.bf16.gmra.mrb[0].mxu0 %v173
  %v385 = vpop.f32.mrb[0].mxu0
  %v386 = vadd.f32 %v88, %v385
  %v387 = vpop.f32.mrb[0].mxu0
  %v388 = vpop.f32.mrb[0].mxu0
  %v389 = vadd.f32 %v88, %v388
  %v390 = vpop.f32.mrb[0].mxu0
  %391 = vmatprep.mubr.bf16.mxu0 %v177
  %392 = vmatmul.mubr.bf16.gmra.mrb[0].mxu0 %v176
  %v393 = vpop.f32.mrb[0].mxu0
  %v394 = vadd.f32 %v88, %v393
  %v395 = vpop.f32.mrb[0].mxu0
  %v396 = vpop.f32.mrb[0].mxu0
  %v397 = vadd.f32 %v88, %v396
  %v398 = vpop.f32.mrb[0].mxu0
  %399 = vmatprep.mubr.bf16.mxu0 %v180
  %400 = vmatmul.mubr.bf16.gmra.mrb[0].mxu0 %v179
  %v401 = vpop.f32.mrb[0].mxu0
  %v402 = vadd.f32 %v88, %v401
  %v403 = vpop.f32.mrb[0].mxu0
  %v404 = vpop.f32.mrb[0].mxu0
  %v405 = vadd.f32 %v88, %v404
  %v406 = vpop.f32.mrb[0].mxu0
  %407 = vmatprep.mubr.bf16.mxu0 %v183
  %408 = vmatmul.mubr.bf16.gmra.mrb[0].mxu0 %v182
  %v409 = vpop.f32.mrb[0].mxu0
  %v410 = vadd.f32 %v88, %v409
  %v411 = vpop.f32.mrb[0].mxu0
  %v412 = vpop.f32.mrb[0].mxu0
  %v413 = vadd.f32 %v88, %v412
  %v414 = vpop.f32.mrb[0].mxu0
  %415 = vmatprep.mubr.bf16.mxu0 %v186
  %416 = vmatmul.mubr.bf16.gmra.mrb[0].mxu0 %v185
  %v417 = vpop.f32.mrb[0].mxu0
  %v418 = vadd.f32 %v88, %v417
  %v419 = vpop.f32.mrb[0].mxu0
  %v420 = vpop.f32.mrb[0].mxu0
  %v421 = vadd.f32 %v88, %v420
  %v422 = vpop.f32.mrb[0].mxu0
  %423 = vmatprep.mubr.bf16.mxu0 %v189
  %424 = vmatmul.mubr.bf16.gmra.mrb[0].mxu0 %v188
  %v425 = vpop.f32.mrb[0].mxu0
  %v426 = vadd.f32 %v88, %v425
  %v427 = vpop.f32.mrb[0].mxu0
  %v428 = vpop.f32.mrb[0].mxu0
  %v429 = vadd.f32 %v88, %v428
  %v430 = vpop.f32.mrb[0].mxu0
  %431 = vmatprep.mubr.bf16.mxu0 %v192
  %432 = vmatmul.mubr.bf16.gmra.mrb[0].mxu0 %v191
  %v433 = vpop.f32.mrb[0].mxu0
  %v434 = vadd.f32 %v88, %v433
  %v435 = vpop.f32.mrb[0].mxu0
  %v436 = vpop.f32.mrb[0].mxu0
  %v437 = vadd.f32 %v88, %v436
  %v438 = vpop.f32.mrb[0].mxu0
  %439 = vdwg.mxu0
  %440 = vmatprep.subr.bf16.mxu0 0
  %441 = vmatpush1.bf16.msra.mxu0 %v298
  %442 = vmatprep.subr.bf16.mxu0 0
  %443 = vmatpush1.bf16.msra.mxu0 %v299
  %444 = vmatprep.subr.bf16.mxu0 0
  %445 = vmatpush1.bf16.msra.mxu0 0
  %446 = vmatprep.subr.bf16.mxu0 0
  %447 = vmatpush1.bf16.msra.mxu0 0
  %448 = vmatprep.subr.bf16.mxu0 0
  %449 = vmatpush1.bf16.msra.mxu0 0
  %450 = vmatprep.subr.bf16.mxu0 0
  %451 = vmatpush1.bf16.msra.mxu0 0
  %452 = vmatprep.subr.bf16.mxu0 0
  %453 = vmatpush1.bf16.msra.mxu0 0
  %454 = vmatprep.subr.bf16.mxu0 0
  %455 = vmatpush1.bf16.msra.mxu0 0
  %456 = vmatprep.subr.bf16.mxu0 0
  %457 = vmatpush1.bf16.msra.mxu0 0
  %458 = vmatprep.subr.bf16.mxu0 0
  %459 = vmatpush1.bf16.msra.mxu0 0
  %460 = vmatprep.subr.bf16.mxu0 0
  %461 = vmatpush1.bf16.msra.mxu0 0
  %462 = vmatprep.subr.bf16.mxu0 0
  %463 = vmatpush1.bf16.msra.mxu0 0
  %464 = vmatprep.subr.bf16.mxu0 0
  %465 = vmatpush1.bf16.msra.mxu0 0
  %466 = vmatprep.subr.bf16.mxu0 0
  %467 = vmatpush1.bf16.msra.mxu0 0
  %468 = vmatprep.subr.bf16.mxu0 0
  %469 = vmatpush1.bf16.msra.mxu0 0
  %470 = vmatprep.subr.bf16.mxu0 0
  %471 = vmatpush1.bf16.msra.mxu0 0
  %472 = vmatprep.mubr.bf16.mxu0 0
  %473 = vmatmul.mubr.bf16.gmra.mrb[0].mxu0 %v320
  %v474 = vpop.f32.mrb[0].mxu0
  %v475 = vadd.f32 %v378, %v474
  %v476 = vpop.f32.mrb[0].mxu0
  %v477 = vpop.f32.mrb[0].mxu0
  %v478 = vadd.f32 %v381, %v477
  %v479 = vpop.f32.mrb[0].mxu0
  %480 = vmatprep.mubr.bf16.mxu0 0
  %481 = vmatmul.mubr.bf16.gmra.mrb[0].mxu0 %v323
  %v482 = vpop.f32.mrb[0].mxu0
  %v483 = vadd.f32 %v386, %v482
  %v484 = vpop.f32.mrb[0].mxu0
  %v485 = vpop.f32.mrb[0].mxu0
  %v486 = vadd.f32 %v389, %v485
  %v487 = vpop.f32.mrb[0].mxu0
  %488 = vmatprep.mubr.bf16.mxu0 0
  %489 = vmatmul.mubr.bf16.gmra.mrb[0].mxu0 %v326
  %v490 = vpop.f32.mrb[0].mxu0
  %v491 = vadd.f32 %v394, %v490
  %v492 = vpop.f32.mrb[0].mxu0
  %v493 = vpop.f32.mrb[0].mxu0
  %v494 = vadd.f32 %v397, %v493
  %v495 = vpop.f32.mrb[0].mxu0
  %496 = vmatprep.mubr.bf16.mxu0 0
  %497 = vmatmul.mubr.bf16.gmra.mrb[0].mxu0 %v329
  %v498 = vpop.f32.mrb[0].mxu0
  %v499 = vadd.f32 %v402, %v498
  %v500 = vpop.f32.mrb[0].mxu0
  %v501 = vpop.f32.mrb[0].mxu0
  %v502 = vadd.f32 %v405, %v501
  %v503 = vpop.f32.mrb[0].mxu0
  %504 = vmatprep.mubr.bf16.mxu0 0
  %505 = vmatmul.mubr.bf16.gmra.mrb[0].mxu0 %v332
  %v506 = vpop.f32.mrb[0].mxu0
  %v507 = vadd.f32 %v410, %v506
  %v508 = vpop.f32.mrb[0].mxu0
  %v509 = vpop.f32.mrb[0].mxu0
  %v510 = vadd.f32 %v413, %v509
  %v511 = vpop.f32.mrb[0].mxu0
  %512 = vmatprep.mubr.bf16.mxu0 0
  %513 = vmatmul.mubr.bf16.gmra.mrb[0].mxu0 %v335
  %v514 = vpop.f32.mrb[0].mxu0
  %v515 = vadd.f32 %v418, %v514
  %v516 = vpop.f32.mrb[0].mxu0
  %v517 = vpop.f32.mrb[0].mxu0
  %v518 = vadd.f32 %v421, %v517
  %v519 = vpop.f32.mrb[0].mxu0
  %520 = vmatprep.mubr.bf16.mxu0 0
  %521 = vmatmul.mubr.bf16.gmra.mrb[0].mxu0 %v338
  %v522 = vpop.f32.mrb[0].mxu0
  %v523 = vadd.f32 %v426, %v522
  %v524 = vpop.f32.mrb[0].mxu0
  %v525 = vpop.f32.mrb[0].mxu0
  %v526 = vadd.f32 %v429, %v525
  %v527 = vpop.f32.mrb[0].mxu0
  %528 = vmatprep.mubr.bf16.mxu0 0
  %529 = vmatmul.mubr.bf16.gmra.mrb[0].mxu0 %v341
  %v530 = vpop.f32.mrb[0].mxu0
  %v531 = vadd.f32 %v434, %v530
  %v532 = vpop.f32.mrb[0].mxu0
  %v533 = vpop.f32.mrb[0].mxu0
  %v534 = vadd.f32 %v437, %v533
  %v535 = vpop.f32.mrb[0].mxu0
  %536 = vdwg.mxu0
  %v537 = vmax.f32 %v475, 0.0
  %v538 = vmax.f32 %v478, 0.0
  %v539 = vmax.f32 %v483, 0.0
  %v540 = vmax.f32 %v486, 0.0
  %v541 = vmax.f32 %v491, 0.0
  %v542 = vmax.f32 %v494, 0.0
  %v543 = vmax.f32 %v499, 0.0
  %v544 = vmax.f32 %v502, 0.0
  %v545 = vmax.f32 %v507, 0.0
  %v546 = vmax.f32 %v510, 0.0
  %v547 = vmax.f32 %v515, 0.0
  %v548 = vmax.f32 %v518, 0.0
  %v549 = vmax.f32 %v523, 0.0
  %v550 = vmax.f32 %v526, 0.0
  %v551 = vmax.f32 %v531, 0.0
  %v552 = vmax.f32 %v534, 0.0
  %553 = vst [vmem:[%s3] sm:$0xff] %v537
  %554 = vst [vmem:[%s3 + $0x8] sm:$0xff] %v538
  %555 = vst [vmem:[%s3 + $0x10] sm:$0xff] %v539
  %556 = vst [vmem:[%s3 + $0x18] sm:$0xff] %v540
  %557 = vst [vmem:[%s3 + $0x20] sm:$0xff] %v541
  %558 = vst [vmem:[%s3 + $0x28] sm:$0xff] %v542
  %559 = vst [vmem:[%s3 + $0x30] sm:$0xff] %v543
  %560 = vst [vmem:[%s3 + $0x38] sm:$0xff] %v544
  %561 = vst [vmem:[%s3 + $0x40] sm:$0xff] %v545
  %562 = vst [vmem:[%s3 + $0x48] sm:$0xff] %v546
  %563 = vst [vmem:[%s3 + $0x50] sm:$0xff] %v547
  %564 = vst [vmem:[%s3 + $0x58] sm:$0xff] %v548
  %565 = vst [vmem:[%s3 + $0x60] sm:$0xff] %v549
  %566 = vst [vmem:[%s3 + $0x68] sm:$0xff] %v550
  %567 = vst [vmem:[%s3 + $0x70] sm:$0xff] %v551
  %568 = vst [vmem:[%s3 + $0x78] sm:$0xff] %v552
  // Predicated region
  $region14: #{vqvae_forward.16} parent=0 // pred_check
    _
  $region15: #{vqvae_forward.16} parent=0 // pred_check_branch
    %570 = sbr.rel (0) target = $region17
  $region16: #{vqvae_forward.16} parent=0 // pred_region
    _
  $region17: #{vqvae_forward.16} parent=0 // pred_fallthru
    _
  // Predicated region
  $region18: #{vqvae_forward.16} parent=0 // pred_check
    _
  $region19: #{vqvae_forward.16} parent=0 // pred_check_branch
    %572 = sbr.rel (0) target = $region21
  $region20: #{vqvae_forward.16} parent=0 // pred_region
    _
  $region21: #{vqvae_forward.16} parent=0 // pred_fallthru
    _

// kernel: vqvae_forward.17
$region0: #{vqvae_forward.17}
  #allocation0 [shape = 'u32[]', space=smem, size = 0x4, offset = 0x4, fixed_abs, tag = 'smem constant byte address 0x4 - core index']
  #allocation1 [shape = 'u32[144,128]{1,0:T(1,128)}', space=vmem, size = 0x12000, scoped, tag = 'internal scratch']
  %s0 = inlined_call_operand.vmem [shape: bf16[512,288], index: 0, kind: input, shape index: {}]
  %s1 = inlined_call_operand.vmem [shape: bf16[288,12], index: 1, kind: input, shape index: {}]
  %s2 = inlined_call_operand.vmem [shape: f32[1,12], index: 2, kind: input, shape index: {}]
  %s3 = inlined_call_operand.vmem [shape: f32[512,12], index: 3, kind: output, shape index: {}]
  %s4 = sld [smem:[#allocation0]]
  $region45: #{vqvae_forward.17} parent=0
    _
  %s6 = ssub.s32 1, %s4
  %s7 = scalar_select 0, %s6, %s4
  loop: start=0, step=1, limit=4
  $region2: #{vqvae_forward.17} parent=0 // loop_pre_header
    _
  $region3: #{vqvae_forward.17} parent=0 // loop_header
    %s9 = sphi 0, %s13
    %p10 = scmp.ge.s32.totalorder %s9, 4
    %s19 = sphi 0, %s21
    %s22 = sphi 0, %s19
    %s23 = sphi 0, %s22
    %s39 = sphi 0, %s23
    %s43 = sphi 0, %s43
    %s45 = sphi 0, %s43
    %s46 = sphi 0, %s45
    %s60 = sphi 0, %s46
    %s64 = sphi 0, %s64
    %s66 = sphi 0, %s64
    %s67 = sphi 0, %s66
    %s81 = sphi 0, %s67
    %s87 = sphi 0, %s89
    %s90 = sphi 0, %s87
    %s91 = sphi 0, %s90
    %s107 = sphi 0, %s91
  $region4: #{vqvae_forward.17} parent=0 // loop_header_branch
    %12 = sbr.rel (%p10) target = $region8
  $region5: #{vqvae_forward.17} parent=0 // loop_body
    %s14 = ssub.s32 %s9, 1
    %s15 = ssub.s32 %s9, 2
    %s16 = sadd.s32 %s9, 1
    %s17 = ssub.s32 %s9, %s16
    %p18 = scmp.eq.s32.totalorder %s17, 0
    %s20 = sadd.s32 %s19, 1
    %s21 = scalar_select %p18, %s19, %s20
    %p24 = pneg %p18
    %p25 = scmp.eq.s32.totalorder %s9, 1
    %p26 = por %p24, %p25
    %p27 = scmp.ne.s32.totalorder %s19, %s22
    %p28 = scmp.eq.s32.totalorder %s9, 0
    %p29 = por %p27, %p28
    %p30 = scmp.ne.s32.totalorder %s19, %s22
    %p31 = scmp.eq.s32.totalorder %s14, 1
    %p32 = por %p30, %p31
    %p33 = scmp.ne.s32.totalorder %s22, %s23
    %p34 = scmp.eq.s32.totalorder %s14, 0
    %p35 = por %p33, %p34
    %p36 = scmp.ne.s32.totalorder %s22, %s23
    %p37 = scmp.eq.s32.totalorder %s15, 1
    %p38 = por %p36, %p37
    %p40 = scmp.ne.s32.totalorder %s23, %s39
    %p41 = scmp.eq.s32.totalorder %s15, 0
    %p42 = por %p40, %p41
    %s44 = sadd.s32 %s43, 1
    %p47 = scmp.eq.s32.totalorder %s9, 1
    %p48 = scmp.ne.s32.totalorder %s43, %s45
    %p49 = scmp.eq.s32.totalorder %s9, 0
    %p50 = por %p48, %p49
    %p51 = scmp.ne.s32.totalorder %s43, %s45
    %p52 = scmp.eq.s32.totalorder %s14, 1
    %p53 = por %p51, %p52
    %p54 = scmp.ne.s32.totalorder %s45, %s46
    %p55 = scmp.eq.s32.totalorder %s14, 0
    %p56 = por %p54, %p55
    %p57 = scmp.ne.s32.totalorder %s45, %s46
    %p58 = scmp.eq.s32.totalorder %s15, 1
    %p59 = por %p57, %p58
    %p61 = scmp.ne.s32.totalorder %s46, %s60
    %p62 = scmp.eq.s32.totalorder %s15, 0
    %p63 = por %p61, %p62
    %s65 = sadd.s32 %s64, 1
    %p68 = scmp.eq.s32.totalorder %s9, 1
    %p69 = scmp.ne.s32.totalorder %s64, %s66
    %p70 = scmp.eq.s32.totalorder %s9, 0
    %p71 = por %p69, %p70
    %p72 = scmp.ne.s32.totalorder %s64, %s66
    %p73 = scmp.eq.s32.totalorder %s14, 1
    %p74 = por %p72, %p73
    %p75 = scmp.ne.s32.totalorder %s66, %s67
    %p76 = scmp.eq.s32.totalorder %s14, 0
    %p77 = por %p75, %p76
    %p78 = scmp.ne.s32.totalorder %s66, %s67
    %p79 = scmp.eq.s32.totalorder %s15, 1
    %p80 = por %p78, %p79
    %p82 = scmp.ne.s32.totalorder %s67, %s81
    %p83 = scmp.eq.s32.totalorder %s15, 0
    %p84 = por %p82, %p83
    %s85 = ssub.s32 %s9, %s16
    %p86 = scmp.eq.s32.totalorder %s85, 0
    %s88 = sadd.s32 %s87, 1
    %s89 = scalar_select %p86, %s87, %s88
    %p92 = pneg %p86
    %p93 = scmp.eq.s32.totalorder %s9, 1
    %p94 = por %p92, %p93
    %p95 = scmp.ne.s32.totalorder %s87, %s90
    %p96 = scmp.eq.s32.totalorder %s9, 0
    %p97 = por %p95, %p96
    %p98 = scmp.ne.s32.totalorder %s87, %s90
    %p99 = scmp.eq.s32.totalorder %s14, 1
    %p100 = por %p98, %p99
    %p101 = scmp.ne.s32.totalorder %s90, %s91
    %p102 = scmp.eq.s32.totalorder %s14, 0
    %p103 = por %p101, %p102
    %p104 = scmp.ne.s32.totalorder %s90, %s91
    %p105 = scmp.eq.s32.totalorder %s15, 1
    %p106 = por %p104, %p105
    %p108 = scmp.ne.s32.totalorder %s91, %s107
    %p109 = scmp.eq.s32.totalorder %s15, 0
    %p110 = por %p108, %p109
    %p111 = scmp.le.s32.totalorder 1, %s9
    %p112 = scmp.lt.s32.totalorder %s9, 3
    %p113 = pnand %p111, %p112
    %p114 = pneg %p113
    // Predicated region
    $region9: #{vqvae_forward.17} parent=5 // pred_check
      _
    $region10: #{vqvae_forward.17} parent=5 // pred_check_branch
      %116 = sbr.rel (%p113) target = $region12
    $region11: #{vqvae_forward.17} parent=5 // pred_region
      %s117 = ssub.s32 %s9, 1
      // Predicated region
      $region13: #{vqvae_forward.17} parent=11 // pred_check
        %p118 = pneg %p56
      $region14: #{vqvae_forward.17} parent=11 // pred_check_branch
        %120 = sbr.rel (%p118) target = $region16
      $region15: #{vqvae_forward.17} parent=11 // pred_region
        _
      $region16: #{vqvae_forward.17} parent=11 // pred_fallthru
        _
      // Predicated region
      $region17: #{vqvae_forward.17} parent=11 // pred_check
        %p121 = pneg %p77
      $region18: #{vqvae_forward.17} parent=11 // pred_check_branch
        %123 = sbr.rel (%p121) target = $region20
      $region19: #{vqvae_forward.17} parent=11 // pred_region
        _
      $region20: #{vqvae_forward.17} parent=11 // pred_fallthru
        _
    $region12: #{vqvae_forward.17} parent=5 // pred_fallthru
      _
    %p124 = scmp.lt.s32.totalorder %s9, 2
    // Predicated region
    $region21: #{vqvae_forward.17} parent=5 // pred_check
      %p125 = pneg %p124
    $region22: #{vqvae_forward.17} parent=5 // pred_check_branch
      %127 = sbr.rel (%p125) target = $region24
    $region23: #{vqvae_forward.17} parent=5 // pred_region
      // Predicated region
      $region25: #{vqvae_forward.17} parent=23 // pred_check
        %p128 = pneg %p29
      $region26: #{vqvae_forward.17} parent=23 // pred_check_branch
        %130 = sbr.rel (%p128) target = $region28
      $region27: #{vqvae_forward.17} parent=23 // pred_region
        %s131 = smul.u32 32, %s9
        %p132 = scmp.lt.s32.totalorder %s131, 63
        %s133 = scalar_select %p132, %s131, 63
        %s134 = smul.addr %s133, 3
        %s135 = smul.addr %s134, 4
        %s136 = scalar_lea.vmem %s0, %s135
        %s137 = smul.u32 32, %s9
      $region28: #{vqvae_forward.17} parent=23 // pred_fallthru
        _
    $region24: #{vqvae_forward.17} parent=5 // pred_fallthru
      _
    %p138 = scmp.le.s32.totalorder 1, %s9
    %p139 = scmp.lt.s32.totalorder %s9, 3
    %p140 = pnand %p138, %p139
    %p141 = pneg %p140
    // Predicated region
    $region29: #{vqvae_forward.17} parent=5 // pred_check
      _
    $region30: #{vqvae_forward.17} parent=5 // pred_check_branch
      %143 = sbr.rel (%p140) target = $region32
    $region31: #{vqvae_forward.17} parent=5 // pred_region
      %s144 = ssub.s32 %s9, 1
      %s145 = smul.u32 32, %s14
      %p146 = scmp.lt.s32.totalorder %s145, 63
      %s147 = scalar_select %p146, %s145, 63
      %s148 = smul.addr %s147, 3
      %s149 = smul.addr %s148, 4
      %s150 = scalar_lea.vmem %s0, %s149
      %p151 = pneg %p35
      %p152 = pneg %p32
      %p153 = pneg %p56
      %p154 = pneg %p53
      %p155 = pneg %p77
      %p156 = pneg %p74
      %p157 = pneg %p103
      %p158 = pneg %p100
      %s159 = smul.u32 32, %s14
      %p160 = scmp.lt.s32.totalorder %s159, 63
      %s161 = scalar_select %p160, %s159, 63
      %s162 = smul.addr %s161, 8
      %s163 = scalar_lea.vmem %s3, %s162
      %s164 = smul.u32 32, %s14
      %p165 = scmp.lt.s32.totalorder %s164, 63
      %s166 = scalar_select %p165, %s164, 63
      %s167 = smul.addr %s166, 3
      %s168 = smul.addr %s167, 4
      %s169 = scalar_lea.vmem %s0, %s168
      %s170 = smul.u32 32, %s14
      %s171 = smul.u32 32, %s14
      %p172 = scmp.lt.s32.totalorder %s171, 63
      %s173 = scalar_select %p172, %s171, 63
      %s174 = smul.addr %s173, 8
      %s175 = scalar_lea.vmem %s3, %s174
      %s176 = smul.u32 32, %s14
      %v178 = vld [vmem:[%s169] sm:$0xff]
      %v179 = vld [vmem:[%s169 + $0x8] sm:$0xf]
      %v180 = vld [vmem:[%s169 + $0xc] sm:$0xff]
      %v181 = vld [vmem:[%s169 + $0x14] sm:$0xf]
      %v182 = vld [vmem:[%s169 + $0x18] sm:$0xff]
      %v183 = vld [vmem:[%s169 + $0x20] sm:$0xf]
      %v184 = vld [vmem:[%s169 + $0x24] sm:$0xff]
      %v185 = vld [vmem:[%s169 + $0x2c] sm:$0xf]
      %v186 = vld [vmem:[%s169 + $0x30] sm:$0xff]
      %v187 = vld [vmem:[%s169 + $0x38] sm:$0xf]
      %v188 = vld [vmem:[%s169 + $0x3c] sm:$0xff]
      %v189 = vld [vmem:[%s169 + $0x44] sm:$0xf]
      %v190 = vld [vmem:[%s169 + $0x48] sm:$0xff]
      %v191 = vld [vmem:[%s169 + $0x50] sm:$0xf]
      %v192 = vld [vmem:[%s169 + $0x54] sm:$0xff]
      %v193 = vld [vmem:[%s169 + $0x5c] sm:$0xf]
      %v194 = vld [vmem:[%s169 + $0x60] sm:$0xff]
      %v195 = vld [vmem:[%s169 + $0x68] sm:$0xf]
      %v196 = vld [vmem:[%s169 + $0x6c] sm:$0xff]
      %v197 = vld [vmem:[%s169 + $0x74] sm:$0xf]
      %v198 = vld [vmem:[%s169 + $0x78] sm:$0xff]
      %v199 = vld [vmem:[%s169 + $0x80] sm:$0xf]
      %v200 = vld [vmem:[%s169 + $0x84] sm:$0xff]
      %v201 = vld [vmem:[%s169 + $0x8c] sm:$0xf]
      %v202 = vld [vmem:[%s169 + $0x90] sm:$0xff]
      %v203 = vld [vmem:[%s169 + $0x98] sm:$0xf]
      %v204 = vld [vmem:[%s169 + $0x9c] sm:$0xff]
      %v205 = vld [vmem:[%s169 + $0xa4] sm:$0xf]
      %v206 = vld [vmem:[%s169 + $0xa8] sm:$0xff]
      %v207 = vld [vmem:[%s169 + $0xb0] sm:$0xf]
      %v208 = vld [vmem:[%s169 + $0xb4] sm:$0xff]
      %v209 = vld [vmem:[%s169 + $0xbc] sm:$0xf]
      %v210 = vld [vmem:[%s169 + $0xc0] sm:$0xff]
      %v211 = vld [vmem:[%s169 + $0xc8] sm:$0xf]
      %v212 = vld [vmem:[%s169 + $0xcc] sm:$0xff]
      %v213 = vld [vmem:[%s169 + $0xd4] sm:$0xf]
      %v214 = vld [vmem:[%s169 + $0xd8] sm:$0xff]
      %v215 = vld [vmem:[%s169 + $0xe0] sm:$0xf]
      %v216 = vld [vmem:[%s169 + $0xe4] sm:$0xff]
      %v217 = vld [vmem:[%s169 + $0xec] sm:$0xf]
      %v218 = vld [vmem:[%s169 + $0xf0] sm:$0xff]
      %v219 = vld [vmem:[%s169 + $0xf8] sm:$0xf]
      %v220 = vld [vmem:[%s169 + $0xfc] sm:$0xff]
      %v221 = vld [vmem:[%s169 + $0x104] sm:$0xf]
      %v222 = vld [vmem:[%s169 + $0x108] sm:$0xff]
      %v223 = vld [vmem:[%s169 + $0x110] sm:$0xf]
      %v224 = vld [vmem:[%s169 + $0x114] sm:$0xff]
      %v225 = vld [vmem:[%s169 + $0x11c] sm:$0xf]
      %v226 = vld [vmem:[%s169 + $0x120] sm:$0xff]
      %v227 = vld [vmem:[%s169 + $0x128] sm:$0xf]
      %v228 = vld [vmem:[%s169 + $0x12c] sm:$0xff]
      %v229 = vld [vmem:[%s169 + $0x134] sm:$0xf]
      %v230 = vld [vmem:[%s169 + $0x138] sm:$0xff]
      %v231 = vld [vmem:[%s169 + $0x140] sm:$0xf]
      %v232 = vld [vmem:[%s169 + $0x144] sm:$0xff]
      %v233 = vld [vmem:[%s169 + $0x14c] sm:$0xf]
      %v234 = vld [vmem:[%s169 + $0x150] sm:$0xff]
      %v235 = vld [vmem:[%s169 + $0x158] sm:$0xf]
      %v236 = vld [vmem:[%s169 + $0x15c] sm:$0xff]
      %v237 = vld [vmem:[%s169 + $0x164] sm:$0xf]
      %v238 = vld [vmem:[%s169 + $0x168] sm:$0xff]
      %v239 = vld [vmem:[%s169 + $0x170] sm:$0xf]
      %v240 = vld [vmem:[%s169 + $0x174] sm:$0xff]
      %v241 = vld [vmem:[%s169 + $0x17c] sm:$0xf]
      %v242 = vld [vmem:[%s1] sm:$0xf]
      %v243 = vld [vmem:[%s1 + $0x4] sm:$0xf]
      %v244 = vld [vmem:[%s1 + $0x8] sm:$0xf]
      %v245 = vld [vmem:[%s1 + $0xc] sm:$0xf]
      %v246 = vld [vmem:[%s1 + $0x10] sm:$0xf]
      %v247 = vld [vmem:[%s1 + $0x14] sm:$0xf]
      %v248 = vld [vmem:[%s1 + $0x18] sm:$0xf]
      %v249 = vld [vmem:[%s1 + $0x1c] sm:$0xf]
      %v250 = vld [vmem:[%s1 + $0x20] sm:$0xf]
      %v251 = vld [vmem:[%s1 + $0x24] sm:$0xf]
      %v252 = vld [vmem:[%s1 + $0x28] sm:$0xf]
      %v253 = vld [vmem:[%s1 + $0x2c] sm:$0xf]
      %v254 = vld [vmem:[%s1 + $0x30] sm:$0xf]
      %v255 = vld [vmem:[%s1 + $0x34] sm:$0xf]
      %v256 = vld [vmem:[%s1 + $0x38] sm:$0xf]
      %v257 = vld [vmem:[%s1 + $0x3c] sm:$0xf]
      %v258 = vld [vmem:[%s1 + $0x40] sm:$0xf]
      %v259 = vld [vmem:[%s1 + $0x44] sm:$0xf]
      %v260 = vld [vmem:[%s1 + $0x48] sm:$0xf]
      %v261 = vld [vmem:[%s1 + $0x4c] sm:$0xf]
      %v262 = vld [vmem:[%s1 + $0x50] sm:$0xf]
      %v263 = vld [vmem:[%s1 + $0x54] sm:$0xf]
      %v264 = vld [vmem:[%s1 + $0x58] sm:$0xf]
      %v265 = vld [vmem:[%s1 + $0x5c] sm:$0xf]
      %v266 = vld [vmem:[%s1 + $0x60] sm:$0xf]
      %v267 = vld [vmem:[%s1 + $0x64] sm:$0xf]
      %v268 = vld [vmem:[%s1 + $0x68] sm:$0xf]
      %v269 = vld [vmem:[%s1 + $0x6c] sm:$0xf]
      %v270 = vld [vmem:[%s1 + $0x70] sm:$0xf]
      %v271 = vld [vmem:[%s1 + $0x74] sm:$0xf]
      %v272 = vld [vmem:[%s1 + $0x78] sm:$0xf]
      %v273 = vld [vmem:[%s1 + $0x7c] sm:$0xf]
      %v274 = vld [vmem:[%s1 + $0x80] sm:$0xf]
      %v275 = vld [vmem:[%s1 + $0x84] sm:$0xf]
      %v276 = vld [vmem:[%s1 + $0x88] sm:$0xf]
      %v277 = vld [vmem:[%s1 + $0x8c] sm:$0xf]
      %v278 = vld [vmem:[%s2] sm:$0x1]
      %v280 = vlaneseq
      %v281 = vshrl.u32 %v280, 7
      %v282 = vsub.s32 0, %v281
      %v283 = vrot.slane %v278, %v282
      %v349 = vunpack.c.l.b16 %v178
      %v350 = vunpack.c.h.b16 %v178
      %v351 = vunpack.c.l.b16 %v179
      %v352 = vunpack.c.l.b16 %v180
      %v353 = vunpack.c.h.b16 %v180
      %v354 = vunpack.c.l.b16 %v181
      %v355 = vunpack.c.l.b16 %v182
      %v356 = vunpack.c.h.b16 %v182
      %v357 = vunpack.c.l.b16 %v183
      %v358 = vunpack.c.l.b16 %v184
      %v359 = vunpack.c.h.b16 %v184
      %v360 = vunpack.c.l.b16 %v185
      %v361 = vunpack.c.l.b16 %v186
      %v362 = vunpack.c.h.b16 %v186
      %v363 = vunpack.c.l.b16 %v187
      %v364 = vunpack.c.l.b16 %v188
      %v365 = vunpack.c.h.b16 %v188
      %v366 = vunpack.c.l.b16 %v189
      %v367 = vunpack.c.l.b16 %v190
      %v368 = vunpack.c.h.b16 %v190
      %v369 = vunpack.c.l.b16 %v191
      %v370 = vunpack.c.l.b16 %v192
      %v371 = vunpack.c.h.b16 %v192
      %v372 = vunpack.c.l.b16 %v193
      %v373 = vunpack.c.l.b16 %v194
      %v374 = vunpack.c.h.b16 %v194
      %v375 = vunpack.c.l.b16 %v195
      %v376 = vunpack.c.l.b16 %v196
      %v377 = vunpack.c.h.b16 %v196
      %v378 = vunpack.c.l.b16 %v197
      %v379 = vunpack.c.l.b16 %v198
      %v380 = vunpack.c.h.b16 %v198
      %v381 = vunpack.c.l.b16 %v199
      %v382 = vunpack.c.l.b16 %v200
      %v383 = vunpack.c.h.b16 %v200
      %v384 = vunpack.c.l.b16 %v201
      %v385 = vunpack.c.l.b16 %v202
      %v386 = vunpack.c.h.b16 %v202
      %v387 = vunpack.c.l.b16 %v203
      %v388 = vunpack.c.l.b16 %v204
      %v389 = vunpack.c.h.b16 %v204
      %v390 = vunpack.c.l.b16 %v205
      %v391 = vunpack.c.l.b16 %v206
      %v392 = vunpack.c.h.b16 %v206
      %v393 = vunpack.c.l.b16 %v207
      %v394 = vunpack.c.l.b16 %v208
      %v395 = vunpack.c.h.b16 %v208
      %v396 = vunpack.c.l.b16 %v209
      %v397 = vunpack.c.l.b16 %v210
      %v398 = vunpack.c.h.b16 %v210
      %v399 = vunpack.c.l.b16 %v211
      %v400 = vunpack.c.l.b16 %v212
      %v401 = vunpack.c.h.b16 %v212
      %v402 = vunpack.c.l.b16 %v213
      %v403 = vunpack.c.l.b16 %v214
      %v404 = vunpack.c.h.b16 %v214
      %v405 = vunpack.c.l.b16 %v215
      %v406 = vunpack.c.l.b16 %v216
      %v407 = vunpack.c.h.b16 %v216
      %v408 = vunpack.c.l.b16 %v217
      %v409 = vunpack.c.l.b16 %v218
      %v410 = vunpack.c.h.b16 %v218
      %v411 = vunpack.c.l.b16 %v219
      %v412 = vunpack.c.l.b16 %v220
      %v413 = vunpack.c.h.b16 %v220
      %v414 = vunpack.c.l.b16 %v221
      %v415 = vunpack.c.l.b16 %v222
      %v416 = vunpack.c.h.b16 %v222
      %v417 = vunpack.c.l.b16 %v223
      %v418 = vunpack.c.l.b16 %v224
      %v419 = vunpack.c.h.b16 %v224
      %v420 = vunpack.c.l.b16 %v225
      %v421 = vunpack.c.l.b16 %v226
      %v422 = vunpack.c.h.b16 %v226
      %v423 = vunpack.c.l.b16 %v227
      %v424 = vunpack.c.l.b16 %v228
      %v425 = vunpack.c.h.b16 %v228
      %v426 = vunpack.c.l.b16 %v229
      %v427 = vunpack.c.l.b16 %v230
      %v428 = vunpack.c.h.b16 %v230
      %v429 = vunpack.c.l.b16 %v231
      %v430 = vunpack.c.l.b16 %v232
      %v431 = vunpack.c.h.b16 %v232
      %v432 = vunpack.c.l.b16 %v233
      %v433 = vunpack.c.l.b16 %v234
      %v434 = vunpack.c.h.b16 %v234
      %v435 = vunpack.c.l.b16 %v235
      %v436 = vunpack.c.l.b16 %v236
      %v437 = vunpack.c.h.b16 %v236
      %v438 = vunpack.c.l.b16 %v237
      %v439 = vunpack.c.l.b16 %v238
      %v440 = vunpack.c.h.b16 %v238
      %v441 = vunpack.c.l.b16 %v239
      %v442 = vunpack.c.l.b16 %v240
      %v443 = vunpack.c.h.b16 %v240
      %v444 = vunpack.c.l.b16 %v241
      %v445 = vpack.c.b16 %v352, %v349
      %v446 = vpack.c.b16 %v353, %v350
      %v447 = vpack.c.b16 %v354, %v351
      %v448 = vpack.c.b16 %v358, %v355
      %v449 = vpack.c.b16 %v359, %v356
      %v450 = vpack.c.b16 %v360, %v357
      %v451 = vpack.c.b16 %v364, %v361
      %v452 = vpack.c.b16 %v365, %v362
      %v453 = vpack.c.b16 %v366, %v363
      %v454 = vpack.c.b16 %v370, %v367
      %v455 = vpack.c.b16 %v371, %v368
      %v456 = vpack.c.b16 %v372, %v369
      %v457 = vpack.c.b16 %v376, %v373
      %v458 = vpack.c.b16 %v377, %v374
      %v459 = vpack.c.b16 %v378, %v375
      %v460 = vpack.c.b16 %v382, %v379
      %v461 = vpack.c.b16 %v383, %v380
      %v462 = vpack.c.b16 %v384, %v381
      %v463 = vpack.c.b16 %v388, %v385
      %v464 = vpack.c.b16 %v389, %v386
      %v465 = vpack.c.b16 %v390, %v387
      %v466 = vpack.c.b16 %v394, %v391
      %v467 = vpack.c.b16 %v395, %v392
      %v468 = vpack.c.b16 %v396, %v393
      %v469 = vpack.c.b16 %v400, %v397
      %v470 = vpack.c.b16 %v401, %v398
      %v471 = vpack.c.b16 %v402, %v399
      %v472 = vpack.c.b16 %v406, %v403
      %v473 = vpack.c.b16 %v407, %v404
      %v474 = vpack.c.b16 %v408, %v405
      %v475 = vpack.c.b16 %v412, %v409
      %v476 = vpack.c.b16 %v413, %v410
      %v477 = vpack.c.b16 %v414, %v411
      %v478 = vpack.c.b16 %v418, %v415
      %v479 = vpack.c.b16 %v419, %v416
      %v480 = vpack.c.b16 %v420, %v417
      %v481 = vpack.c.b16 %v424, %v421
      %v482 = vpack.c.b16 %v425, %v422
      %v483 = vpack.c.b16 %v426, %v423
      %v484 = vpack.c.b16 %v430, %v427
      %v485 = vpack.c.b16 %v431, %v428
      %v486 = vpack.c.b16 %v432, %v429
      %v487 = vpack.c.b16 %v436, %v433
      %v488 = vpack.c.b16 %v437, %v434
      %v489 = vpack.c.b16 %v438, %v435
      %v490 = vpack.c.b16 %v442, %v439
      %v491 = vpack.c.b16 %v443, %v440
      %v492 = vpack.c.b16 %v444, %v441
      %v561 = vunpack.c.l.b16 %v242
      %v562 = vunpack.c.l.b16 %v243
      %v563 = vunpack.c.l.b16 %v244
      %v564 = vunpack.c.l.b16 %v245
      %v565 = vunpack.c.l.b16 %v246
      %v566 = vunpack.c.l.b16 %v247
      %v567 = vunpack.c.l.b16 %v248
      %v568 = vunpack.c.l.b16 %v249
      %v569 = vunpack.c.l.b16 %v250
      %v570 = vunpack.c.l.b16 %v251
      %v571 = vunpack.c.l.b16 %v252
      %v572 = vunpack.c.l.b16 %v253
      %v573 = vunpack.c.l.b16 %v254
      %v574 = vunpack.c.l.b16 %v255
      %v575 = vunpack.c.l.b16 %v256
      %v576 = vunpack.c.l.b16 %v257
      %v577 = vunpack.c.l.b16 %v258
      %v578 = vunpack.c.l.b16 %v259
      %v579 = vunpack.c.l.b16 %v260
      %v580 = vunpack.c.l.b16 %v261
      %v581 = vunpack.c.l.b16 %v262
      %v582 = vunpack.c.l.b16 %v263
      %v583 = vunpack.c.l.b16 %v264
      %v584 = vunpack.c.l.b16 %v265
      %v585 = vunpack.c.l.b16 %v266
      %v586 = vunpack.c.l.b16 %v267
      %v587 = vunpack.c.l.b16 %v268
      %v588 = vunpack.c.l.b16 %v269
      %v589 = vunpack.c.l.b16 %v270
      %v590 = vunpack.c.l.b16 %v271
      %v591 = vunpack.c.l.b16 %v272
      %v592 = vunpack.c.l.b16 %v273
      %v593 = vunpack.c.l.b16 %v274
      %v594 = vunpack.c.l.b16 %v275
      %v595 = vunpack.c.l.b16 %v276
      %v596 = vunpack.c.l.b16 %v277
      %v597 = vpack.c.b16 %v562, %v561
      %v598 = vpack.c.b16 %v564, %v563
      %v599 = vpack.c.b16 %v566, %v565
      %v600 = vpack.c.b16 %v568, %v567
      %v601 = vpack.c.b16 %v570, %v569
      %v602 = vpack.c.b16 %v572, %v571
      %v603 = vpack.c.b16 %v574, %v573
      %v604 = vpack.c.b16 %v576, %v575
      %v605 = vpack.c.b16 %v578, %v577
      %v606 = vpack.c.b16 %v580, %v579
      %v607 = vpack.c.b16 %v582, %v581
      %v608 = vpack.c.b16 %v584, %v583
      %v609 = vpack.c.b16 %v586, %v585
      %v610 = vpack.c.b16 %v588, %v587
      %v611 = vpack.c.b16 %v590, %v589
      %v612 = vpack.c.b16 %v592, %v591
      %v613 = vpack.c.b16 %v594, %v593
      %v614 = vpack.c.b16 %v596, %v595
      %vm633 = vcmask 261120
      %v635 = vsel %vm633, %v447, 0
      %v638 = vsel %vm633, %v450, 0
      %v641 = vsel %vm633, %v453, 0
      %v644 = vsel %vm633, %v456, 0
      %v647 = vsel %vm633, %v459, 0
      %v650 = vsel %vm633, %v462, 0
      %v653 = vsel %vm633, %v465, 0
      %v656 = vsel %vm633, %v468, 0
      %v659 = vsel %vm633, %v471, 0
      %v662 = vsel %vm633, %v474, 0
      %v665 = vsel %vm633, %v477, 0
      %v668 = vsel %vm633, %v480, 0
      %v671 = vsel %vm633, %v483, 0
      %v674 = vsel %vm633, %v486, 0
      %v677 = vsel %vm633, %v489, 0
      %v680 = vsel %vm633, %v492, 0
      %682 = vmatprep.subr.bf16.mxu0 0
      %683 = vmatpush1.bf16.msra.mxu0 %v597
      %684 = vmatprep.subr.bf16.mxu0 0
      %685 = vmatpush1.bf16.msra.mxu0 %v598
      %686 = vmatprep.subr.bf16.mxu0 0
      %687 = vmatpush1.bf16.msra.mxu0 %v599
      %688 = vmatprep.subr.bf16.mxu0 0
      %689 = vmatpush1.bf16.msra.mxu0 %v600
      %690 = vmatprep.subr.bf16.mxu0 0
      %691 = vmatpush1.bf16.msra.mxu0 %v601
      %692 = vmatprep.subr.bf16.mxu0 0
      %693 = vmatpush1.bf16.msra.mxu0 %v602
      %694 = vmatprep.subr.bf16.mxu0 0
      %695 = vmatpush1.bf16.msra.mxu0 %v603
      %696 = vmatprep.subr.bf16.mxu0 0
      %697 = vmatpush1.bf16.msra.mxu0 %v604
      %698 = vmatprep.subr.bf16.mxu0 0
      %699 = vmatpush1.bf16.msra.mxu0 %v605
      %700 = vmatprep.subr.bf16.mxu0 0
      %701 = vmatpush1.bf16.msra.mxu0 %v606
      %702 = vmatprep.subr.bf16.mxu0 0
      %703 = vmatpush1.bf16.msra.mxu0 %v607
      %704 = vmatprep.subr.bf16.mxu0 0
      %705 = vmatpush1.bf16.msra.mxu0 %v608
      %706 = vmatprep.subr.bf16.mxu0 0
      %707 = vmatpush1.bf16.msra.mxu0 %v609
      %708 = vmatprep.subr.bf16.mxu0 0
      %709 = vmatpush1.bf16.msra.mxu0 %v610
      %710 = vmatprep.subr.bf16.mxu0 0
      %711 = vmatpush1.bf16.msra.mxu0 %v611
      %712 = vmatprep.subr.bf16.mxu0 0
      %713 = vmatpush1.bf16.msra.mxu0 %v612
      %714 = vmatprep.mubr.bf16.mxu0 %v446
      %715 = vmatmul.mubr.bf16.gmra.mrb[0].mxu0 %v445
      %v716 = vpop.f32.mrb[0].mxu0
      %v717 = vadd.f32 %v283, %v716
      %v718 = vpop.f32.mrb[0].mxu0
      %v719 = vpop.f32.mrb[0].mxu0
      %v720 = vadd.f32 %v283, %v719
      %v721 = vpop.f32.mrb[0].mxu0
      %722 = vmatprep.mubr.bf16.mxu0 %v449
      %723 = vmatmul.mubr.bf16.gmra.mrb[0].mxu0 %v448
      %v724 = vpop.f32.mrb[0].mxu0
      %v725 = vadd.f32 %v283, %v724
      %v726 = vpop.f32.mrb[0].mxu0
      %v727 = vpop.f32.mrb[0].mxu0
      %v728 = vadd.f32 %v283, %v727
      %v729 = vpop.f32.mrb[0].mxu0
      %730 = vmatprep.mubr.bf16.mxu0 %v452
      %731 = vmatmul.mubr.bf16.gmra.mrb[0].mxu0 %v451
      %v732 = vpop.f32.mrb[0].mxu0
      %v733 = vadd.f32 %v283, %v732
      %v734 = vpop.f32.mrb[0].mxu0
      %v735 = vpop.f32.mrb[0].mxu0
      %v736 = vadd.f32 %v283, %v735
      %v737 = vpop.f32.mrb[0].mxu0
      %738 = vmatprep.mubr.bf16.mxu0 %v455
      %739 = vmatmul.mubr.bf16.gmra.mrb[0].mxu0 %v454
      %v740 = vpop.f32.mrb[0].mxu0
      %v741 = vadd.f32 %v283, %v740
      %v742 = vpop.f32.mrb[0].mxu0
      %v743 = vpop.f32.mrb[0].mxu0
      %v744 = vadd.f32 %v283, %v743
      %v745 = vpop.f32.mrb[0].mxu0
      %746 = vmatprep.mubr.bf16.mxu0 %v458
      %747 = vmatmul.mubr.bf16.gmra.mrb[0].mxu0 %v457
      %v748 = vpop.f32.mrb[0].mxu0
      %v749 = vadd.f32 %v283, %v748
      %v750 = vpop.f32.mrb[0].mxu0
      %v751 = vpop.f32.mrb[0].mxu0
      %v752 = vadd.f32 %v283, %v751
      %v753 = vpop.f32.mrb[0].mxu0
      %754 = vmatprep.mubr.bf16.mxu0 %v461
      %755 = vmatmul.mubr.bf16.gmra.mrb[0].mxu0 %v460
      %v756 = vpop.f32.mrb[0].mxu0
      %v757 = vadd.f32 %v283, %v756
      %v758 = vpop.f32.mrb[0].mxu0
      %v759 = vpop.f32.mrb[0].mxu0
      %v760 = vadd.f32 %v283, %v759
      %v761 = vpop.f32.mrb[0].mxu0
      %762 = vmatprep.mubr.bf16.mxu0 %v464
      %763 = vmatmul.mubr.bf16.gmra.mrb[0].mxu0 %v463
      %v764 = vpop.f32.mrb[0].mxu0
      %v765 = vadd.f32 %v283, %v764
      %v766 = vpop.f32.mrb[0].mxu0
      %v767 = vpop.f32.mrb[0].mxu0
      %v768 = vadd.f32 %v283, %v767
      %v769 = vpop.f32.mrb[0].mxu0
      %770 = vmatprep.mubr.bf16.mxu0 %v467
      %771 = vmatmul.mubr.bf16.gmra.mrb[0].mxu0 %v466
      %v772 = vpop.f32.mrb[0].mxu0
      %v773 = vadd.f32 %v283, %v772
      %v774 = vpop.f32.mrb[0].mxu0
      %v775 = vpop.f32.mrb[0].mxu0
      %v776 = vadd.f32 %v283, %v775
      %v777 = vpop.f32.mrb[0].mxu0
      %778 = vmatprep.mubr.bf16.mxu0 %v470
      %779 = vmatmul.mubr.bf16.gmra.mrb[0].mxu0 %v469
      %v780 = vpop.f32.mrb[0].mxu0
      %v781 = vadd.f32 %v283, %v780
      %v782 = vpop.f32.mrb[0].mxu0
      %v783 = vpop.f32.mrb[0].mxu0
      %v784 = vadd.f32 %v283, %v783
      %v785 = vpop.f32.mrb[0].mxu0
      %786 = vmatprep.mubr.bf16.mxu0 %v473
      %787 = vmatmul.mubr.bf16.gmra.mrb[0].mxu0 %v472
      %v788 = vpop.f32.mrb[0].mxu0
      %v789 = vadd.f32 %v283, %v788
      %v790 = vpop.f32.mrb[0].mxu0
      %v791 = vpop.f32.mrb[0].mxu0
      %v792 = vadd.f32 %v283, %v791
      %v793 = vpop.f32.mrb[0].mxu0
      %794 = vmatprep.mubr.bf16.mxu0 %v476
      %795 = vmatmul.mubr.bf16.gmra.mrb[0].mxu0 %v475
      %v796 = vpop.f32.mrb[0].mxu0
      %v797 = vadd.f32 %v283, %v796
      %v798 = vpop.f32.mrb[0].mxu0
      %v799 = vpop.f32.mrb[0].mxu0
      %v800 = vadd.f32 %v283, %v799
      %v801 = vpop.f32.mrb[0].mxu0
      %802 = vmatprep.mubr.bf16.mxu0 %v479
      %803 = vmatmul.mubr.bf16.gmra.mrb[0].mxu0 %v478
      %v804 = vpop.f32.mrb[0].mxu0
      %v805 = vadd.f32 %v283, %v804
      %v806 = vpop.f32.mrb[0].mxu0
      %v807 = vpop.f32.mrb[0].mxu0
      %v808 = vadd.f32 %v283, %v807
      %v809 = vpop.f32.mrb[0].mxu0
      %810 = vmatprep.mubr.bf16.mxu0 %v482
      %811 = vmatmul.mubr.bf16.gmra.mrb[0].mxu0 %v481
      %v812 = vpop.f32.mrb[0].mxu0
      %v813 = vadd.f32 %v283, %v812
      %v814 = vpop.f32.mrb[0].mxu0
      %v815 = vpop.f32.mrb[0].mxu0
      %v816 = vadd.f32 %v283, %v815
      %v817 = vpop.f32.mrb[0].mxu0
      %818 = vmatprep.mubr.bf16.mxu0 %v485
      %819 = vmatmul.mubr.bf16.gmra.mrb[0].mxu0 %v484
      %v820 = vpop.f32.mrb[0].mxu0
      %v821 = vadd.f32 %v283, %v820
      %v822 = vpop.f32.mrb[0].mxu0
      %v823 = vpop.f32.mrb[0].mxu0
      %v824 = vadd.f32 %v283, %v823
      %v825 = vpop.f32.mrb[0].mxu0
      %826 = vmatprep.mubr.bf16.mxu0 %v488
      %827 = vmatmul.mubr.bf16.gmra.mrb[0].mxu0 %v487
      %v828 = vpop.f32.mrb[0].mxu0
      %v829 = vadd.f32 %v283, %v828
      %v830 = vpop.f32.mrb[0].mxu0
      %v831 = vpop.f32.mrb[0].mxu0
      %v832 = vadd.f32 %v283, %v831
      %v833 = vpop.f32.mrb[0].mxu0
      %834 = vmatprep.mubr.bf16.mxu0 %v491
      %835 = vmatmul.mubr.bf16.gmra.mrb[0].mxu0 %v490
      %v836 = vpop.f32.mrb[0].mxu0
      %v837 = vadd.f32 %v283, %v836
      %v838 = vpop.f32.mrb[0].mxu0
      %v839 = vpop.f32.mrb[0].mxu0
      %v840 = vadd.f32 %v283, %v839
      %v841 = vpop.f32.mrb[0].mxu0
      %842 = vdwg.mxu0
      %843 = vmatprep.subr.bf16.mxu0 0
      %844 = vmatpush1.bf16.msra.mxu0 %v613
      %845 = vmatprep.subr.bf16.mxu0 0
      %846 = vmatpush1.bf16.msra.mxu0 %v614
      %847 = vmatprep.subr.bf16.mxu0 0
      %848 = vmatpush1.bf16.msra.mxu0 0
      %849 = vmatprep.subr.bf16.mxu0 0
      %850 = vmatpush1.bf16.msra.mxu0 0
      %851 = vmatprep.subr.bf16.mxu0 0
      %852 = vmatpush1.bf16.msra.mxu0 0
      %853 = vmatprep.subr.bf16.mxu0 0
      %854 = vmatpush1.bf16.msra.mxu0 0
      %855 = vmatprep.subr.bf16.mxu0 0
      %856 = vmatpush1.bf16.msra.mxu0 0
      %857 = vmatprep.subr.bf16.mxu0 0
      %858 = vmatpush1.bf16.msra.mxu0 0
      %859 = vmatprep.subr.bf16.mxu0 0
      %860 = vmatpush1.bf16.msra.mxu0 0
      %861 = vmatprep.subr.bf16.mxu0 0
      %862 = vmatpush1.bf16.msra.mxu0 0
      %863 = vmatprep.subr.bf16.mxu0 0
      %864 = vmatpush1.bf16.msra.mxu0 0
      %865 = vmatprep.subr.bf16.mxu0 0
      %866 = vmatpush1.bf16.msra.mxu0 0
      %867 = vmatprep.subr.bf16.mxu0 0
      %868 = vmatpush1.bf16.msra.mxu0 0
      %869 = vmatprep.subr.bf16.mxu0 0
      %870 = vmatpush1.bf16.msra.mxu0 0
      %871 = vmatprep.subr.bf16.mxu0 0
      %872 = vmatpush1.bf16.msra.mxu0 0
      %873 = vmatprep.subr.bf16.mxu0 0
      %874 = vmatpush1.bf16.msra.mxu0 0
      %875 = vmatprep.mubr.bf16.mxu0 0
      %876 = vmatmul.mubr.bf16.gmra.mrb[0].mxu0 %v635
      %v877 = vpop.f32.mrb[0].mxu0
      %v878 = vadd.f32 %v717, %v877
      %v879 = vpop.f32.mrb[0].mxu0
      %v880 = vpop.f32.mrb[0].mxu0
      %v881 = vadd.f32 %v720, %v880
      %v882 = vpop.f32.mrb[0].mxu0
      %883 = vmatprep.mubr.bf16.mxu0 0
      %884 = vmatmul.mubr.bf16.gmra.mrb[0].mxu0 %v638
      %v885 = vpop.f32.mrb[0].mxu0
      %v886 = vadd.f32 %v725, %v885
      %v887 = vpop.f32.mrb[0].mxu0
      %v888 = vpop.f32.mrb[0].mxu0
      %v889 = vadd.f32 %v728, %v888
      %v890 = vpop.f32.mrb[0].mxu0
      %891 = vmatprep.mubr.bf16.mxu0 0
      %892 = vmatmul.mubr.bf16.gmra.mrb[0].mxu0 %v641
      %v893 = vpop.f32.mrb[0].mxu0
      %v894 = vadd.f32 %v733, %v893
      %v895 = vpop.f32.mrb[0].mxu0
      %v896 = vpop.f32.mrb[0].mxu0
      %v897 = vadd.f32 %v736, %v896
      %v898 = vpop.f32.mrb[0].mxu0
      %899 = vmatprep.mubr.bf16.mxu0 0
      %900 = vmatmul.mubr.bf16.gmra.mrb[0].mxu0 %v644
      %v901 = vpop.f32.mrb[0].mxu0
      %v902 = vadd.f32 %v741, %v901
      %v903 = vpop.f32.mrb[0].mxu0
      %v904 = vpop.f32.mrb[0].mxu0
      %v905 = vadd.f32 %v744, %v904
      %v906 = vpop.f32.mrb[0].mxu0
      %907 = vmatprep.mubr.bf16.mxu0 0
      %908 = vmatmul.mubr.bf16.gmra.mrb[0].mxu0 %v647
      %v909 = vpop.f32.mrb[0].mxu0
      %v910 = vadd.f32 %v749, %v909
      %v911 = vpop.f32.mrb[0].mxu0
      %v912 = vpop.f32.mrb[0].mxu0
      %v913 = vadd.f32 %v752, %v912
      %v914 = vpop.f32.mrb[0].mxu0
      %915 = vmatprep.mubr.bf16.mxu0 0
      %916 = vmatmul.mubr.bf16.gmra.mrb[0].mxu0 %v650
      %v917 = vpop.f32.mrb[0].mxu0
      %v918 = vadd.f32 %v757, %v917
      %v919 = vpop.f32.mrb[0].mxu0
      %v920 = vpop.f32.mrb[0].mxu0
      %v921 = vadd.f32 %v760, %v920
      %v922 = vpop.f32.mrb[0].mxu0
      %923 = vmatprep.mubr.bf16.mxu0 0
      %924 = vmatmul.mubr.bf16.gmra.mrb[0].mxu0 %v653
      %v925 = vpop.f32.mrb[0].mxu0
      %v926 = vadd.f32 %v765, %v925
      %v927 = vpop.f32.mrb[0].mxu0
      %v928 = vpop.f32.mrb[0].mxu0
      %v929 = vadd.f32 %v768, %v928
      %v930 = vpop.f32.mrb[0].mxu0
      %931 = vmatprep.mubr.bf16.mxu0 0
      %932 = vmatmul.mubr.bf16.gmra.mrb[0].mxu0 %v656
      %v933 = vpop.f32.mrb[0].mxu0
      %v934 = vadd.f32 %v773, %v933
      %v935 = vpop.f32.mrb[0].mxu0
      %v936 = vpop.f32.mrb[0].mxu0
      %v937 = vadd.f32 %v776, %v936
      %v938 = vpop.f32.mrb[0].mxu0
      %939 = vmatprep.mubr.bf16.mxu0 0
      %940 = vmatmul.mubr.bf16.gmra.mrb[0].mxu0 %v659
      %v941 = vpop.f32.mrb[0].mxu0
      %v942 = vadd.f32 %v781, %v941
      %v943 = vpop.f32.mrb[0].mxu0
      %v944 = vpop.f32.mrb[0].mxu0
      %v945 = vadd.f32 %v784, %v944
      %v946 = vpop.f32.mrb[0].mxu0
      %947 = vmatprep.mubr.bf16.mxu0 0
      %948 = vmatmul.mubr.bf16.gmra.mrb[0].mxu0 %v662
      %v949 = vpop.f32.mrb[0].mxu0
      %v950 = vadd.f32 %v789, %v949
      %v951 = vpop.f32.mrb[0].mxu0
      %v952 = vpop.f32.mrb[0].mxu0
      %v953 = vadd.f32 %v792, %v952
      %v954 = vpop.f32.mrb[0].mxu0
      %955 = vmatprep.mubr.bf16.mxu0 0
      %956 = vmatmul.mubr.bf16.gmra.mrb[0].mxu0 %v665
      %v957 = vpop.f32.mrb[0].mxu0
      %v958 = vadd.f32 %v797, %v957
      %v959 = vpop.f32.mrb[0].mxu0
      %v960 = vpop.f32.mrb[0].mxu0
      %v961 = vadd.f32 %v800, %v960
      %v962 = vpop.f32.mrb[0].mxu0
      %963 = vmatprep.mubr.bf16.mxu0 0
      %964 = vmatmul.mubr.bf16.gmra.mrb[0].mxu0 %v668
      %v965 = vpop.f32.mrb[0].mxu0
      %v966 = vadd.f32 %v805, %v965
      %v967 = vpop.f32.mrb[0].mxu0
      %v968 = vpop.f32.mrb[0].mxu0
      %v969 = vadd.f32 %v808, %v968
      %v970 = vpop.f32.mrb[0].mxu0
      %971 = vmatprep.mubr.bf16.mxu0 0
      %972 = vmatmul.mubr.bf16.gmra.mrb[0].mxu0 %v671
      %v973 = vpop.f32.mrb[0].mxu0
      %v974 = vadd.f32 %v813, %v973
      %v975 = vpop.f32.mrb[0].mxu0
      %v976 = vpop.f32.mrb[0].mxu0
      %v977 = vadd.f32 %v816, %v976
      %v978 = vpop.f32.mrb[0].mxu0
      %979 = vmatprep.mubr.bf16.mxu0 0
      %980 = vmatmul.mubr.bf16.gmra.mrb[0].mxu0 %v674
      %v981 = vpop.f32.mrb[0].mxu0
      %v982 = vadd.f32 %v821, %v981
      %v983 = vpop.f32.mrb[0].mxu0
      %v984 = vpop.f32.mrb[0].mxu0
      %v985 = vadd.f32 %v824, %v984
      %v986 = vpop.f32.mrb[0].mxu0
      %987 = vmatprep.mubr.bf16.mxu0 0
      %988 = vmatmul.mubr.bf16.gmra.mrb[0].mxu0 %v677
      %v989 = vpop.f32.mrb[0].mxu0
      %v990 = vadd.f32 %v829, %v989
      %v991 = vpop.f32.mrb[0].mxu0
      %v992 = vpop.f32.mrb[0].mxu0
      %v993 = vadd.f32 %v832, %v992
      %v994 = vpop.f32.mrb[0].mxu0
      %995 = vmatprep.mubr.bf16.mxu0 0
      %996 = vmatmul.mubr.bf16.gmra.mrb[0].mxu0 %v680
      %v997 = vpop.f32.mrb[0].mxu0
      %v998 = vadd.f32 %v837, %v997
      %v999 = vpop.f32.mrb[0].mxu0
      %v1000 = vpop.f32.mrb[0].mxu0
      %v1001 = vadd.f32 %v840, %v1000
      %v1002 = vpop.f32.mrb[0].mxu0
      %1003 = vdwg.mxu0
      %v1004 = vxor.u32 %v878, 2147483648
      %v1005 = vxor.u32 %v881, 2147483648
      %v1006 = vxor.u32 %v886, 2147483648
      %v1007 = vxor.u32 %v889, 2147483648
      %v1008 = vxor.u32 %v894, 2147483648
      %v1009 = vxor.u32 %v897, 2147483648
      %v1010 = vxor.u32 %v902, 2147483648
      %v1011 = vxor.u32 %v905, 2147483648
      %v1012 = vxor.u32 %v910, 2147483648
      %v1013 = vxor.u32 %v913, 2147483648
      %v1014 = vxor.u32 %v918, 2147483648
      %v1015 = vxor.u32 %v921, 2147483648
      %v1016 = vxor.u32 %v926, 2147483648
      %v1017 = vxor.u32 %v929, 2147483648
      %v1018 = vxor.u32 %v934, 2147483648
      %v1019 = vxor.u32 %v937, 2147483648
      %v1020 = vxor.u32 %v942, 2147483648
      %v1021 = vxor.u32 %v945, 2147483648
      %v1022 = vxor.u32 %v950, 2147483648
      %v1023 = vxor.u32 %v953, 2147483648
      %v1024 = vxor.u32 %v958, 2147483648
      %v1025 = vxor.u32 %v961, 2147483648
      %v1026 = vxor.u32 %v966, 2147483648
      %v1027 = vxor.u32 %v969, 2147483648
      %v1028 = vxor.u32 %v974, 2147483648
      %v1029 = vxor.u32 %v977, 2147483648
      %v1030 = vxor.u32 %v982, 2147483648
      %v1031 = vxor.u32 %v985, 2147483648
      %v1032 = vxor.u32 %v990, 2147483648
      %v1033 = vxor.u32 %v993, 2147483648
      %v1034 = vxor.u32 %v998, 2147483648
      %v1035 = vxor.u32 %v1001, 2147483648
      %v1036 = vmul.f32 %v1004, 1.442695
      %v1037 = vpow.pop %v1036
      %v1038 = vmul.f32 %v1005, 1.442695
      %v1039 = vpow.pop %v1038
      %v1040 = vmul.f32 %v1006, 1.442695
      %v1041 = vpow.pop %v1040
      %v1042 = vmul.f32 %v1007, 1.442695
      %v1043 = vpow.pop %v1042
      %v1044 = vmul.f32 %v1008, 1.442695
      %v1045 = vpow.pop %v1044
      %v1046 = vmul.f32 %v1009, 1.442695
      %v1047 = vpow.pop %v1046
      %v1048 = vmul.f32 %v1010, 1.442695
      %v1049 = vpow.pop %v1048
      %v1050 = vmul.f32 %v1011, 1.442695
      %v1051 = vpow.pop %v1050
      %v1052 = vmul.f32 %v1012, 1.442695
      %v1053 = vpow.pop %v1052
      %v1054 = vmul.f32 %v1013, 1.442695
      %v1055 = vpow.pop %v1054
      %v1056 = vmul.f32 %v1014, 1.442695
      %v1057 = vpow.pop %v1056
      %v1058 = vmul.f32 %v1015, 1.442695
      %v1059 = vpow.pop %v1058
      %v1060 = vmul.f32 %v1016, 1.442695
      %v1061 = vpow.pop %v1060
      %v1062 = vmul.f32 %v1017, 1.442695
      %v1063 = vpow.pop %v1062
      %v1064 = vmul.f32 %v1018, 1.442695
      %v1065 = vpow.pop %v1064
      %v1066 = vmul.f32 %v1019, 1.442695
      %v1067 = vpow.pop %v1066
      %v1068 = vmul.f32 %v1020, 1.442695
      %v1069 = vpow.pop %v1068
      %v1070 = vmul.f32 %v1021, 1.442695
      %v1071 = vpow.pop %v1070
      %v1072 = vmul.f32 %v1022, 1.442695
      %v1073 = vpow.pop %v1072
      %v1074 = vmul.f32 %v1023, 1.442695
      %v1075 = vpow.pop %v1074
      %v1076 = vmul.f32 %v1024, 1.442695
      %v1077 = vpow.pop %v1076
      %v1078 = vmul.f32 %v1025, 1.442695
      %v1079 = vpow.pop %v1078
      %v1080 = vmul.f32 %v1026, 1.442695
      %v1081 = vpow.pop %v1080
      %v1082 = vmul.f32 %v1027, 1.442695
      %v1083 = vpow.pop %v1082
      %v1084 = vmul.f32 %v1028, 1.442695
      %v1085 = vpow.pop %v1084
      %v1086 = vmul.f32 %v1029, 1.442695
      %v1087 = vpow.pop %v1086
      %v1088 = vmul.f32 %v1030, 1.442695
      %v1089 = vpow.pop %v1088
      %v1090 = vmul.f32 %v1031, 1.442695
      %v1091 = vpow.pop %v1090
      %v1092 = vmul.f32 %v1032, 1.442695
      %v1093 = vpow.pop %v1092
      %v1094 = vmul.f32 %v1033, 1.442695
      %v1095 = vpow.pop %v1094
      %v1096 = vmul.f32 %v1034, 1.442695
      %v1097 = vpow.pop %v1096
      %v1098 = vmul.f32 %v1035, 1.442695
      %v1099 = vpow.pop %v1098
      %v1100 = vadd.f32 %v1037, 1.0
      %v1101 = vadd.f32 %v1039, 1.0
      %v1102 = vadd.f32 %v1041, 1.0
      %v1103 = vadd.f32 %v1043, 1.0
      %v1104 = vadd.f32 %v1045, 1.0
      %v1105 = vadd.f32 %v1047, 1.0
      %v1106 = vadd.f32 %v1049, 1.0
      %v1107 = vadd.f32 %v1051, 1.0
      %v1108 = vadd.f32 %v1053, 1.0
      %v1109 = vadd.f32 %v1055, 1.0
      %v1110 = vadd.f32 %v1057, 1.0
      %v1111 = vadd.f32 %v1059, 1.0
      %v1112 = vadd.f32 %v1061, 1.0
      %v1113 = vadd.f32 %v1063, 1.0
      %v1114 = vadd.f32 %v1065, 1.0
      %v1115 = vadd.f32 %v1067, 1.0
      %v1116 = vadd.f32 %v1069, 1.0
      %v1117 = vadd.f32 %v1071, 1.0
      %v1118 = vadd.f32 %v1073, 1.0
      %v1119 = vadd.f32 %v1075, 1.0
      %v1120 = vadd.f32 %v1077, 1.0
      %v1121 = vadd.f32 %v1079, 1.0
      %v1122 = vadd.f32 %v1081, 1.0
      %v1123 = vadd.f32 %v1083, 1.0
      %v1124 = vadd.f32 %v1085, 1.0
      %v1125 = vadd.f32 %v1087, 1.0
      %v1126 = vadd.f32 %v1089, 1.0
      %v1127 = vadd.f32 %v1091, 1.0
      %v1128 = vadd.f32 %v1093, 1.0
      %v1129 = vadd.f32 %v1095, 1.0
      %v1130 = vadd.f32 %v1097, 1.0
      %v1131 = vadd.f32 %v1099, 1.0
      %v1132 = vrcp.pop %v1100
      %v1133 = vmul.f32 1.0, %v1132
      %v1134 = vrcp.pop %v1101
      %v1135 = vmul.f32 1.0, %v1134
      %v1136 = vrcp.pop %v1102
      %v1137 = vmul.f32 1.0, %v1136
      %v1138 = vrcp.pop %v1103
      %v1139 = vmul.f32 1.0, %v1138
      %v1140 = vrcp.pop %v1104
      %v1141 = vmul.f32 1.0, %v1140
      %v1142 = vrcp.pop %v1105
      %v1143 = vmul.f32 1.0, %v1142
      %v1144 = vrcp.pop %v1106
      %v1145 = vmul.f32 1.0, %v1144
      %v1146 = vrcp.pop %v1107
      %v1147 = vmul.f32 1.0, %v1146
      %v1148 = vrcp.pop %v1108
      %v1149 = vmul.f32 1.0, %v1148
      %v1150 = vrcp.pop %v1109
      %v1151 = vmul.f32 1.0, %v1150
      %v1152 = vrcp.pop %v1110
      %v1153 = vmul.f32 1.0, %v1152
      %v1154 = vrcp.pop %v1111
      %v1155 = vmul.f32 1.0, %v1154
      %v1156 = vrcp.pop %v1112
      %v1157 = vmul.f32 1.0, %v1156
      %v1158 = vrcp.pop %v1113
      %v1159 = vmul.f32 1.0, %v1158
      %v1160 = vrcp.pop %v1114
      %v1161 = vmul.f32 1.0, %v1160
      %v1162 = vrcp.pop %v1115
      %v1163 = vmul.f32 1.0, %v1162
      %v1164 = vrcp.pop %v1116
      %v1165 = vmul.f32 1.0, %v1164
      %v1166 = vrcp.pop %v1117
      %v1167 = vmul.f32 1.0, %v1166
      %v1168 = vrcp.pop %v1118
      %v1169 = vmul.f32 1.0, %v1168
      %v1170 = vrcp.pop %v1119
      %v1171 = vmul.f32 1.0, %v1170
      %v1172 = vrcp.pop %v1120
      %v1173 = vmul.f32 1.0, %v1172
      %v1174 = vrcp.pop %v1121
      %v1175 = vmul.f32 1.0, %v1174
      %v1176 = vrcp.pop %v1122
      %v1177 = vmul.f32 1.0, %v1176
      %v1178 = vrcp.pop %v1123
      %v1179 = vmul.f32 1.0, %v1178
      %v1180 = vrcp.pop %v1124
      %v1181 = vmul.f32 1.0, %v1180
      %v1182 = vrcp.pop %v1125
      %v1183 = vmul.f32 1.0, %v1182
      %v1184 = vrcp.pop %v1126
      %v1185 = vmul.f32 1.0, %v1184
      %v1186 = vrcp.pop %v1127
      %v1187 = vmul.f32 1.0, %v1186
      %v1188 = vrcp.pop %v1128
      %v1189 = vmul.f32 1.0, %v1188
      %v1190 = vrcp.pop %v1129
      %v1191 = vmul.f32 1.0, %v1190
      %v1192 = vrcp.pop %v1130
      %v1193 = vmul.f32 1.0, %v1192
      %v1194 = vrcp.pop %v1131
      %v1195 = vmul.f32 1.0, %v1194
      %vm1196 = vcmask 97280
      %1197 = vst.msk [vmem:[%s175] sm:$0xff] %vm1196, %v1133
      %1198 = vst.msk [vmem:[%s175 + $0x8] sm:$0xff] %vm1196, %v1135
      %1199 = vst.msk [vmem:[%s175 + $0x10] sm:$0xff] %vm1196, %v1137
      %1200 = vst.msk [vmem:[%s175 + $0x18] sm:$0xff] %vm1196, %v1139
      %1201 = vst.msk [vmem:[%s175 + $0x20] sm:$0xff] %vm1196, %v1141
      %1202 = vst.msk [vmem:[%s175 + $0x28] sm:$0xff] %vm1196, %v1143
      %1203 = vst.msk [vmem:[%s175 + $0x30] sm:$0xff] %vm1196, %v1145
      %1204 = vst.msk [vmem:[%s175 + $0x38] sm:$0xff] %vm1196, %v1147
      %1205 = vst.msk [vmem:[%s175 + $0x40] sm:$0xff] %vm1196, %v1149
      %1206 = vst.msk [vmem:[%s175 + $0x48] sm:$0xff] %vm1196, %v1151
      %1207 = vst.msk [vmem:[%s175 + $0x50] sm:$0xff] %vm1196, %v1153
      %1208 = vst.msk [vmem:[%s175 + $0x58] sm:$0xff] %vm1196, %v1155
      %1209 = vst.msk [vmem:[%s175 + $0x60] sm:$0xff] %vm1196, %v1157
      %1210 = vst.msk [vmem:[%s175 + $0x68] sm:$0xff] %vm1196, %v1159
      %1211 = vst.msk [vmem:[%s175 + $0x70] sm:$0xff] %vm1196, %v1161
      %1212 = vst.msk [vmem:[%s175 + $0x78] sm:$0xff] %vm1196, %v1163
      %1213 = vst.msk [vmem:[%s175 + $0x80] sm:$0xff] %vm1196, %v1165
      %1214 = vst.msk [vmem:[%s175 + $0x88] sm:$0xff] %vm1196, %v1167
      %1215 = vst.msk [vmem:[%s175 + $0x90] sm:$0xff] %vm1196, %v1169
      %1216 = vst.msk [vmem:[%s175 + $0x98] sm:$0xff] %vm1196, %v1171
      %1217 = vst.msk [vmem:[%s175 + $0xa0] sm:$0xff] %vm1196, %v1173
      %1218 = vst.msk [vmem:[%s175 + $0xa8] sm:$0xff] %vm1196, %v1175
      %1219 = vst.msk [vmem:[%s175 + $0xb0] sm:$0xff] %vm1196, %v1177
      %1220 = vst.msk [vmem:[%s175 + $0xb8] sm:$0xff] %vm1196, %v1179
      %1221 = vst.msk [vmem:[%s175 + $0xc0] sm:$0xff] %vm1196, %v1181
      %1222 = vst.msk [vmem:[%s175 + $0xc8] sm:$0xff] %vm1196, %v1183
      %1223 = vst.msk [vmem:[%s175 + $0xd0] sm:$0xff] %vm1196, %v1185
      %1224 = vst.msk [vmem:[%s175 + $0xd8] sm:$0xff] %vm1196, %v1187
      %1225 = vst.msk [vmem:[%s175 + $0xe0] sm:$0xff] %vm1196, %v1189
      %1226 = vst.msk [vmem:[%s175 + $0xe8] sm:$0xff] %vm1196, %v1191
      %1227 = vst.msk [vmem:[%s175 + $0xf0] sm:$0xff] %vm1196, %v1193
      %1228 = vst.msk [vmem:[%s175 + $0xf8] sm:$0xff] %vm1196, %v1195
      %s1229 = smul.u32 32, %s14
      %p1230 = scmp.lt.s32.totalorder %s1229, 63
      %s1231 = scalar_select %p1230, %s1229, 63
      %s1232 = smul.addr %s1231, 8
      %s1233 = scalar_lea.vmem %s3, %s1232
      // Predicated region
      $region33: #{vqvae_forward.17} parent=31 // pred_check
        %p1234 = pneg %p100
      $region34: #{vqvae_forward.17} parent=31 // pred_check_branch
        %1236 = sbr.rel (%p1234) target = $region36
      $region35: #{vqvae_forward.17} parent=31 // pred_region
        %s1237 = smul.u32 32, %s14
      $region36: #{vqvae_forward.17} parent=31 // pred_fallthru
        _
    $region32: #{vqvae_forward.17} parent=5 // pred_fallthru
      _
    %p1238 = scmp.le.s32.totalorder 2, %s9
    // Predicated region
    $region37: #{vqvae_forward.17} parent=5 // pred_check
      %p1239 = pneg %p1238
    $region38: #{vqvae_forward.17} parent=5 // pred_check_branch
      %1241 = sbr.rel (%p1239) target = $region40
    $region39: #{vqvae_forward.17} parent=5 // pred_region
      %s1242 = ssub.s32 %s9, 2
      // Predicated region
      $region41: #{vqvae_forward.17} parent=39 // pred_check
        %p1243 = pneg %p106
      $region42: #{vqvae_forward.17} parent=39 // pred_check_branch
        %1245 = sbr.rel (%p1243) target = $region44
      $region43: #{vqvae_forward.17} parent=39 // pred_region
        %s1246 = smul.u32 32, %s15
        %p1247 = scmp.lt.s32.totalorder %s1246, 63
        %s1248 = scalar_select %p1247, %s1246, 63
        %s1249 = smul.addr %s1248, 8
        %s1250 = scalar_lea.vmem %s3, %s1249
      $region44: #{vqvae_forward.17} parent=39 // pred_fallthru
        _
    $region40: #{vqvae_forward.17} parent=5 // pred_fallthru
      _
  $region6: #{vqvae_forward.17} parent=0 // loop_footer
    %s13 = sadd.s32 1, %s9
  $region7: #{vqvae_forward.17} parent=0 // loop_footer_branch
    %8 = sbr.rel target = $region3
  $region8: #{vqvae_forward.17} parent=0 // loop_exit
    _

</llo_original>
